<compile_context>
chip_gen: v7x
topology: tpu7x:2x2x1
jax: 0.10.0
libtpu: 0.0.40
codegen_flags: <defaults>
</compile_context>

<pallas_src>
import functools

import jax
import jax.numpy as jnp
from jax import lax
from jax.experimental import pallas as pl
from jax.experimental.pallas import tpu as pltpu

EPS = 1e-5
OUT_PAD = 128      # lane-dense padded width of the Linear head output
SUBLANE = 8

_VMEM_SPEC = pl.BlockSpec(memory_space=pltpu.MemorySpace.VMEM)


def _vmem_capacity_bytes():
    try:
        return int(pltpu.get_tpu_info().vmem_capacity_bytes)
    except Exception:
        return 64 * 1024 * 1024    # conservative fallback (v7x physical VMEM per core)


# ------------------------------- fused kernel --------------------------------

def fused_lstm_bn_kernel(num_layers, hidden, batch, batch_pad, seq_len,
                         x_ref, gin_ref, bin_ref, glstm_ref, blstm_ref,
                         wlin_ref, blin_ref, h0_ref, c0_ref, *rest):
    """Fused forward: BN(input) -> L x LSTM (wavefront) -> BN -> Linear (all dense tiles).

    Layouts (all f32):
      x_ref        (T*Bp, I)  rows ordered (t, b); padded batch rows are zero
      gin/bin      (1, I)
      glstm/blstm  (1, HP)    zero-padded past H
      wlin_ref     (HP, OUT_PAD)  only [:H, 0] real;  blin_ref (1, OUT_PAD)
      h0/c0        (L, Bp, HP)    zero-padded past B rows / H lanes
      per layer:   w_ih (I or HP, 4H), w_hh (HP, 4H) zero-row-padded past H, bias (1, 4H)
      outputs:     out (T*Bp, OUT_PAD), h_n/c_n (L, Bp, HP)
    """
    L, H, B, Bp, T = num_layers, hidden, batch, batch_pad, seq_len
    HP = 4 * H                                   # padded h/c lane width (= gate width)
    nlw = 3 * L
    layer_refs = rest[:nlw]
    out_ref, hT_ref, cT_ref = rest[nlw:]

    inv_n = 1.0 / float(T * B)                   # real row count for BN statistics

    def real_row_mask(width):                    # True for real (non-padded) batch rows
        rid = lax.broadcasted_iota(jnp.int32, (T * Bp, width), 0)
        return (rid % Bp) < B

    # ---- input BatchNorm (training-mode batch stats, biased variance, padded rows masked)
    x = x_ref[...]
    mask_x = real_row_mask(x.shape[1])
    xm = jnp.where(mask_x, x, 0.0)
    mean = jnp.sum(xm, axis=0, keepdims=True) * inv_n
    d = jnp.where(mask_x, x - mean, 0.0)
    var = jnp.sum(d * d, axis=0, keepdims=True) * inv_n
    bn_x = (x - mean) * lax.rsqrt(var + EPS) * gin_ref[...] + bin_ref[...]

    # ---- hoisted layer-0 input projection: one GEMM for all timesteps, bias folded ----
    xp0 = jnp.dot(bn_x, layer_refs[0][...],
                  preferred_element_type=jnp.float32) + layer_refs[2][...]   # (T*Bp, 4H)

    # Weight refs are read at the use site (data already lives in VMEM; avoids spilling
    # long-lived weight vregs).  Bias broadcasts are hoisted out of the loop (no CSE).
    w_ih_r = [layer_refs[3 * l] for l in range(L)]
    w_hh_r = [layer_refs[3 * l + 1] for l in range(L)]
    bias_b = [None] + [jnp.broadcast_to(layer_refs[3 * l + 2][...], (Bp, 4 * H))
                       for l in range(1, L)]
    h = [h0_ref[l] for l in range(L)]            # (Bp, HP), lanes >= H meaningless
    c = [c0_ref[l] for l in range(L)]

    # ---- wavefront-ordered recurrence (fully unrolled; T, L small & static) ----------
    # No scratch barrier: layer l step t depends only on (l, t-1) and (l-1, t), so the
    # scheduler can overlap layers; serial chain ~T+L-1 steps instead of T*L.
    ys = []
    for t in range(T):
        for l in range(L):
            if l == 0:
                gates = xp0[t * Bp:(t + 1) * Bp, :] + jnp.dot(
                    h[0], w_hh_r[0][...], preferred_element_type=jnp.float32)
            else:
                gates = (jnp.dot(h[l - 1], w_ih_r[l][...],
                                 preferred_element_type=jnp.float32)
                         + jnp.dot(h[l], w_hh_r[l][...],
                                   preferred_element_type=jnp.float32)
                         + bias_b[l])
            # Full-width activations (EUP slot) + static lane rotations (XLU slot) align
            # the i/f/g/o blocks with lanes 0..H-1 — no sub-128-lane slicing in the loop.
            sig = jax.nn.sigmoid(gates)                       # (Bp, 4H)
            th = jnp.tanh(gates)
            f_g = pltpu.roll(sig, 3 * H, 1)                   # lanes 0..H-1 <- f block
            g_g = pltpu.roll(th, 2 * H, 1)                    # lanes 0..H-1 <- g block
            o_g = pltpu.roll(sig, 1 * H, 1)                   # lanes 0..H-1 <- o block
            c[l] = f_g * c[l] + sig * g_g                     # i gate already at lane 0
            h[l] = o_g * jnp.tanh(c[l])                       # lanes >= H: bounded junk,
        ys.append(h[L - 1])                                   # zeroed-weight rows ignore it

    act = jnp.concatenate(ys, axis=0)                         # (T*Bp, HP), rows (t, b)

    # ---- output BatchNorm (padded rows masked out of the statistics) + Linear head ----
    mask_a = real_row_mask(HP)
    am = jnp.where(mask_a, act, 0.0)
    mean2 = jnp.sum(am, axis=0, keepdims=True) * inv_n
    d2 = jnp.where(mask_a, act - mean2, 0.0)
    var2 = jnp.sum(d2 * d2, axis=0, keepdims=True) * inv_n
    yn = (act - mean2) * lax.rsqrt(var2 + EPS) * glstm_ref[...] + blstm_ref[...]
    # TODO(synk): once H >= 128, cast GEMM operands to bf16 (keep f32 accumulation).
    out = jnp.dot(yn, wlin_ref[...], preferred_element_type=jnp.float32) + blin_ref[...]
    out_ref[...] = out                                        # lane-dense (T*Bp, 128)

    for l in range(L):                                        # dense (Bp, HP) tiles
        hT_ref[l] = h[l]
        cT_ref[l] = c[l]


# --------------------------------- wrapper ------------------------------------

def _pad2d(a, rows, cols):
    return jnp.pad(a, ((0, rows - a.shape[0]), (0, cols - a.shape[1])))


def lstm_model_bn_forward(params, x, h_s, h_c):
    """Fused Pallas forward.  x: (B, T, I); h_s/h_c: (L, B, H).  Returns y (B, T, 1)."""
    B, T, I = x.shape
    L, _, H = h_s.shape
    HP = 4 * H
    assert HP % 128 == 0, "hidden_units must be a multiple of 32 for this kernel"
    Bp = max(SUBLANE, ((B + SUBLANE - 1) // SUBLANE) * SUBLANE)

    # Time-major (t, b) rows, batch padded to a full sublane tile (zeros).
    x_tb = jnp.transpose(x, (1, 0, 2))                                    # (T, B, I)
    x_tb = jnp.pad(x_tb, ((0, 0), (0, Bp - B), (0, 0))).reshape(T * Bp, I)

    # One-off lane/sublane-dense weight & state layout.
    flat_w = []
    for l, (w_ih_t, w_hh_t, b) in enumerate(params["lstm"]):
        flat_w.append(w_ih_t if l == 0 else _pad2d(w_ih_t, HP, 4 * H))    # zero rows >= H
        flat_w.append(_pad2d(w_hh_t, HP, 4 * H))
        flat_w.append(b)
    gamma_lstm = _pad2d(params["gamma_lstm"], 1, HP)
    beta_lstm = _pad2d(params["beta_lstm"], 1, HP)
    w_lin_pad = _pad2d(params["w_lin_t"], HP, OUT_PAD)
    b_lin_pad = _pad2d(params["b_lin"], 1, OUT_PAD)
    h0 = jnp.pad(h_s, ((0, 0), (0, Bp - B), (0, HP - H)))
    c0 = jnp.pad(h_c, ((0, 0), (0, Bp - B), (0, HP - H)))

    inputs = [x_tb, params["gamma_in"], params["beta_in"], gamma_lstm, beta_lstm,
              w_lin_pad, b_lin_pad, h0, c0] + flat_w

    # VMEM budget per generation (v7x: 64 MiB, v5e/v6e: 128 MiB); everything is resident.
    vmem_budget = _vmem_capacity_bytes() // 2
    vmem_est = sum(int(a.size) * a.dtype.itemsize for a in inputs)
    vmem_est += 4 * (T * Bp * OUT_PAD + 2 * L * Bp * HP)                  # outputs
    assert 4 * vmem_est < vmem_budget, (
        "fused LSTMModelBN kernel would not fit in VMEM; chunk T over a grid axis "
        "with (h, c) carried in persistent scratch instead")
    # TODO(synk): for large B on v7x, add a leading parallel grid axis over batch shards
    #             (dimension_semantics=("parallel", ...)) so both TensorCores are used.
    # TODO(synk): for long sequences, chunk T over an "arbitrary" grid axis with (h, c)
    #             in persistent VMEM scratch instead of fully unrolling the time loop.

    kernel = functools.partial(fused_lstm_bn_kernel, L, H, B, Bp, T)
    out_pad, h_n, c_n = pl.pallas_call(
        kernel,
        out_shape=(jax.ShapeDtypeStruct((T * Bp, OUT_PAD), jnp.float32),
                   jax.ShapeDtypeStruct((L, Bp, HP), jnp.float32),
                   jax.ShapeDtypeStruct((L, Bp, HP), jnp.float32)),
        in_specs=[_VMEM_SPEC] * len(inputs),
        out_specs=(_VMEM_SPEC, _VMEM_SPEC, _VMEM_SPEC),
        compiler_params=pltpu.CompilerParams(vmem_limit_bytes=vmem_budget),
    )(*inputs)

    y = jnp.transpose(out_pad.reshape(T, Bp, OUT_PAD)[:, :B, :1], (1, 0, 2))   # (B, T, 1)
    return y, (h_n[:, :B, :H], c_n[:, :B, :H])


# ---------------------------- pure-JAX reference -------------------------------

def ref_forward(params, x, h_s, h_c):
    def bn(v, gamma, beta):
        m = v.mean(axis=(0, 1), keepdims=True)
        var = ((v - m) ** 2).mean(axis=(0, 1), keepdims=True)
        return (v - m) / jnp.sqrt(var + EPS) * gamma + beta

    B, T, _ = x.shape
    H = h_s.shape[-1]
    inp = bn(x, params["gamma_in"], params["beta_in"])
    hs, cs = [], []
    for l, (w_ih_t, w_hh_t, b) in enumerate(params["lstm"]):
        h, c = h_s[l], h_c[l]
        ys = []
        for t in range(T):
            g = inp[:, t] @ w_ih_t + h @ w_hh_t + b
            i = jax.nn.sigmoid(g[:, :H])
            f = jax.nn.sigmoid(g[:, H:2 * H])
            gg = jnp.tanh(g[:, 2 * H:3 * H])
            o = jax.nn.sigmoid(g[:, 3 * H:])
            c = f * c + i * gg
            h = o * jnp.tanh(c)
            ys.append(h)
        inp = jnp.stack(ys, axis=1)
        hs.append(h)
        cs.append(c)
    yb = bn(inp, params["gamma_lstm"], params["beta_lstm"])
    out = yb @ params["w_lin_t"] + params["b_lin"]
    return out, (jnp.stack(hs, 0), jnp.stack(cs, 0))


# ------------------------------- param init ------------------------------------

def init_params(key, input_size, hidden_units, num_layers):
    k = 1.0 / jnp.sqrt(jnp.float32(hidden_units))
    params = {
        "gamma_in": jnp.ones((1, input_size), jnp.float32),
        "beta_in": jnp.zeros((1, input_size), jnp.float32),
        "gamma_lstm": jnp.ones((1, hidden_units), jnp.float32),
        "beta_lstm": jnp.zeros((1, hidden_units), jnp.float32),
        "lstm": [],
    }
    for l in range(num_layers):
        in_dim = input_size if l == 0 else hidden_units
        key, k1, k2, k3, k4 = jax.random.split(key, 5)
        w_ih = jax.random.uniform(k1, (4 * hidden_units, in_dim), jnp.float32, -k, k)
        w_hh = jax.random.uniform(k2, (4 * hidden_units, hidden_units), jnp.float32, -k, k)
        b_ih = jax.random.uniform(k3, (4 * hidden_units,), jnp.float32, -k, k)
        b_hh = jax.random.uniform(k4, (4 * hidden_units,), jnp.float32, -k, k)
        params["lstm"].append((w_ih.T, w_hh.T, (b_ih + b_hh).reshape(1, -1)))
    key, k5, k6 = jax.random.split(key, 3)
    params["w_lin_t"] = jax.random.uniform(k5, (hidden_units, 1), jnp.float32, -k, k)
    params["b_lin"] = jax.random.uniform(k6, (1, 1), jnp.float32, -k, k)
    return params


# ----------------------------------- main ---------------------------------------

if __name__ == "__main__":
    batch, seq, input_size, hidden_units, num_layers = 2, 8, 4, 32, 2

    key = jax.random.PRNGKey(0)
    kp, kx, kh, kc = jax.random.split(key, 4)
    params = init_params(kp, input_size, hidden_units, num_layers)

    x = jax.random.normal(kx, (batch, seq, input_size), jnp.float32)
    h_s = 0.1 * jax.random.normal(kh, (num_layers, batch, hidden_units), jnp.float32)
    h_c = 0.1 * jax.random.normal(kc, (num_layers, batch, hidden_units), jnp.float32)

    y, (h_out, c_out) = lstm_model_bn_forward(params, x, h_s, h_c)
    jax.block_until_ready((y, h_out, c_out))

    y_ref, (h_ref, c_ref) = ref_forward(params, x, h_s, h_c)
    assert y.shape == (batch, seq, 1)
    assert h_out.shape == (num_layers, batch, hidden_units)
    assert c_out.shape == (num_layers, batch, hidden_units)
    assert jnp.allclose(y, y_ref, rtol=2e-4, atol=2e-4)
    assert jnp.allclose(h_out, h_ref, rtol=2e-4, atol=2e-4)
    assert jnp.allclose(c_out, c_ref, rtol=2e-4, atol=2e-4)

    print("KERNEL_OK")
</pallas_src>

<mosaic_0001>
module attributes {stable_mosaic.version = 11 : i64} {
  func.func @fused_lstm_bn_kernel(%arg0: memref<64x4xf32, #tpu.memory_space<vmem>>, %arg1: memref<1x4xf32, #tpu.memory_space<vmem>>, %arg2: memref<1x4xf32, #tpu.memory_space<vmem>>, %arg3: memref<1x128xf32, #tpu.memory_space<vmem>>, %arg4: memref<1x128xf32, #tpu.memory_space<vmem>>, %arg5: memref<128x128xf32, #tpu.memory_space<vmem>>, %arg6: memref<1x128xf32, #tpu.memory_space<vmem>>, %arg7: memref<2x8x128xf32, #tpu.memory_space<vmem>>, %arg8: memref<2x8x128xf32, #tpu.memory_space<vmem>>, %arg9: memref<4x128xf32, #tpu.memory_space<vmem>>, %arg10: memref<128x128xf32, #tpu.memory_space<vmem>>, %arg11: memref<1x128xf32, #tpu.memory_space<vmem>>, %arg12: memref<128x128xf32, #tpu.memory_space<vmem>>, %arg13: memref<128x128xf32, #tpu.memory_space<vmem>>, %arg14: memref<1x128xf32, #tpu.memory_space<vmem>>, %arg15: memref<64x128xf32, #tpu.memory_space<vmem>>, %arg16: memref<2x8x128xf32, #tpu.memory_space<vmem>>, %arg17: memref<2x8x128xf32, #tpu.memory_space<vmem>>) attributes {dimension_semantics = [], scalar_prefetch = 0 : i64, scratch_operands = 0 : i64, tpu.core_type = #tpu.core_type<tc>} {
    %c0 = arith.constant 0 : index
    %c0_0 = arith.constant 0 : index
    %0 = vector.load %arg0[%c0, %c0_0] : memref<64x4xf32, #tpu.memory_space<vmem>>, vector<64x4xf32>
    %1 = tpu.iota {dimensions = array<i32: 0>} : vector<64x4xi32>
    %c8_i32 = arith.constant 8 : i32
    %c0_i32 = arith.constant 0 : i32
    %2 = arith.cmpi eq, %c8_i32, %c0_i32 : i32
    %c1_i32 = arith.constant 1 : i32
    %3 = arith.select %2, %c1_i32, %c8_i32 : i32
    %4 = vector.broadcast %3 : i32 to vector<64x4xi32>
    %5 = arith.remsi %1, %4 : vector<64x4xi32>
    %c0_i32_1 = arith.constant 0 : i32
    %6 = vector.broadcast %c0_i32_1 : i32 to vector<64x4xi32>
    %7 = arith.cmpi ne, %5, %6 : vector<64x4xi32>
    %c0_i32_2 = arith.constant 0 : i32
    %8 = vector.broadcast %c0_i32_2 : i32 to vector<64x4xi32>
    %9 = arith.cmpi slt, %5, %8 : vector<64x4xi32>
    %c0_i32_3 = arith.constant 0 : i32
    %10 = arith.cmpi slt, %3, %c0_i32_3 : i32
    %11 = vector.broadcast %10 : i1 to vector<64x4xi1>
    %12 = vector.broadcast %11 : vector<64x4xi1> to vector<64x4xi1>
    %13 = arith.xori %9, %12 : vector<64x4xi1>
    %14 = arith.andi %13, %7 : vector<64x4xi1>
    %15 = vector.broadcast %3 : i32 to vector<64x4xi32>
    %16 = arith.addi %5, %15 : vector<64x4xi32>
    %17 = arith.select %14, %16, %5 : vector<64x4xi1>, vector<64x4xi32>
    %c2_i32 = arith.constant 2 : i32
    %18 = vector.broadcast %c2_i32 : i32 to vector<64x4xi32>
    %19 = arith.cmpi slt, %17, %18 : vector<64x4xi32>
    %cst = arith.constant 0.000000e+00 : f32
    %20 = vector.broadcast %cst : f32 to vector<64x4xf32>
    %21 = arith.select %19, %0, %20 : vector<64x4xi1>, vector<64x4xf32>
    %cst_4 = arith.constant dense<0.000000e+00> : vector<4xf32>
    %22 = vector.multi_reduction <add>, %21, %cst_4 [0] : vector<64x4xf32> to vector<4xf32>
    %23 = vector.shape_cast %22 : vector<4xf32> to vector<1x4xf32>
    %cst_5 = arith.constant 6.250000e-02 : f32
    %24 = vector.broadcast %cst_5 : f32 to vector<1x4xf32>
    %25 = arith.mulf %23, %24 : vector<1x4xf32>
    %26 = vector.broadcast %25 : vector<1x4xf32> to vector<64x4xf32>
    %27 = arith.subf %0, %26 : vector<64x4xf32>
    %cst_6 = arith.constant 0.000000e+00 : f32
    %28 = vector.broadcast %cst_6 : f32 to vector<64x4xf32>
    %29 = arith.select %19, %27, %28 : vector<64x4xi1>, vector<64x4xf32>
    %30 = arith.mulf %29, %29 : vector<64x4xf32>
    %cst_7 = arith.constant dense<0.000000e+00> : vector<4xf32>
    %31 = vector.multi_reduction <add>, %30, %cst_7 [0] : vector<64x4xf32> to vector<4xf32>
    %32 = vector.shape_cast %31 : vector<4xf32> to vector<1x4xf32>
    %cst_8 = arith.constant 6.250000e-02 : f32
    %33 = vector.broadcast %cst_8 : f32 to vector<1x4xf32>
    %34 = arith.mulf %32, %33 : vector<1x4xf32>
    %35 = vector.broadcast %25 : vector<1x4xf32> to vector<64x4xf32>
    %36 = arith.subf %0, %35 : vector<64x4xf32>
    %cst_9 = arith.constant 9.99999974E-6 : f32
    %37 = vector.broadcast %cst_9 : f32 to vector<1x4xf32>
    %38 = arith.addf %34, %37 : vector<1x4xf32>
    %39 = math.rsqrt %38 : vector<1x4xf32>
    %40 = vector.broadcast %39 : vector<1x4xf32> to vector<64x4xf32>
    %41 = arith.mulf %36, %40 : vector<64x4xf32>
    %c0_10 = arith.constant 0 : index
    %c0_11 = arith.constant 0 : index
    %42 = vector.load %arg1[%c0_10, %c0_11] : memref<1x4xf32, #tpu.memory_space<vmem>>, vector<1x4xf32>
    %43 = vector.broadcast %42 : vector<1x4xf32> to vector<64x4xf32>
    %44 = arith.mulf %41, %43 : vector<64x4xf32>
    %c0_12 = arith.constant 0 : index
    %c0_13 = arith.constant 0 : index
    %45 = vector.load %arg2[%c0_12, %c0_13] : memref<1x4xf32, #tpu.memory_space<vmem>>, vector<1x4xf32>
    %46 = vector.broadcast %45 : vector<1x4xf32> to vector<64x4xf32>
    %47 = arith.addf %44, %46 : vector<64x4xf32>
    %c0_14 = arith.constant 0 : index
    %c0_15 = arith.constant 0 : index
    %48 = vector.load %arg9[%c0_14, %c0_15] : memref<4x128xf32, #tpu.memory_space<vmem>>, vector<4x128xf32>
    %cst_16 = arith.constant dense<0.000000e+00> : vector<64x128xf32>
    %49 = tpu.matmul %47, %48, %cst_16 {dimension_numbers = #tpu.dot_dimension_numbers<[1], [0], [0], [1], [0, 0, 1, 1], [], []>} : vector<64x4xf32>, vector<4x128xf32>, vector<64x128xf32> -> vector<64x128xf32>
    %c0_17 = arith.constant 0 : index
    %c0_18 = arith.constant 0 : index
    %50 = vector.load %arg11[%c0_17, %c0_18] : memref<1x128xf32, #tpu.memory_space<vmem>>, vector<1x128xf32>
    %51 = vector.broadcast %50 : vector<1x128xf32> to vector<64x128xf32>
    %52 = arith.addf %49, %51 : vector<64x128xf32>
    %c0_19 = arith.constant 0 : index
    %c0_20 = arith.constant 0 : index
    %53 = vector.load %arg14[%c0_19, %c0_20] : memref<1x128xf32, #tpu.memory_space<vmem>>, vector<1x128xf32>
    %54 = vector.shape_cast %53 : vector<1x128xf32> to vector<1x128xf32>
    %55 = vector.broadcast %54 : vector<1x128xf32> to vector<8x128xf32>
    %c0_21 = arith.constant 0 : index
    %c0_22 = arith.constant 0 : index
    %c0_23 = arith.constant 0 : index
    %56 = vector.load %arg7[%c0_21, %c0_22, %c0_23] : memref<2x8x128xf32, #tpu.memory_space<vmem>>, vector<1x8x128xf32>
    %57 = vector.shape_cast %56 : vector<1x8x128xf32> to vector<8x128xf32>
    %c1 = arith.constant 1 : index
    %c0_24 = arith.constant 0 : index
    %c0_25 = arith.constant 0 : index
    %58 = vector.load %arg7[%c1, %c0_24, %c0_25] : memref<2x8x128xf32, #tpu.memory_space<vmem>>, vector<1x8x128xf32>
    %59 = vector.shape_cast %58 : vector<1x8x128xf32> to vector<8x128xf32>
    %c0_26 = arith.constant 0 : index
    %c0_27 = arith.constant 0 : index
    %c0_28 = arith.constant 0 : index
    %60 = vector.load %arg8[%c0_26, %c0_27, %c0_28] : memref<2x8x128xf32, #tpu.memory_space<vmem>>, vector<1x8x128xf32>
    %61 = vector.shape_cast %60 : vector<1x8x128xf32> to vector<8x128xf32>
    %c1_29 = arith.constant 1 : index
    %c0_30 = arith.constant 0 : index
    %c0_31 = arith.constant 0 : index
    %62 = vector.load %arg8[%c1_29, %c0_30, %c0_31] : memref<2x8x128xf32, #tpu.memory_space<vmem>>, vector<1x8x128xf32>
    %63 = vector.shape_cast %62 : vector<1x8x128xf32> to vector<8x128xf32>
    %64 = vector.extract_strided_slice %52 {offsets = [0, 0], sizes = [8, 128], strides = [1, 1]} : vector<64x128xf32> to vector<8x128xf32>
    %c0_32 = arith.constant 0 : index
    %c0_33 = arith.constant 0 : index
    %65 = vector.load %arg10[%c0_32, %c0_33] : memref<128x128xf32, #tpu.memory_space<vmem>>, vector<128x128xf32>
    %cst_34 = arith.constant dense<0.000000e+00> : vector<8x128xf32>
    %66 = tpu.matmul %57, %65, %cst_34 {dimension_numbers = #tpu.dot_dimension_numbers<[1], [0], [0], [1], [0, 0, 1, 1], [], []>} : vector<8x128xf32>, vector<128x128xf32>, vector<8x128xf32> -> vector<8x128xf32>
    %67 = arith.addf %64, %66 : vector<8x128xf32>
    %68 = arith.negf %67 : vector<8x128xf32>
    %69 = math.exp %68 : vector<8x128xf32>
    %cst_35 = arith.constant 1.000000e+00 : f32
    %70 = vector.broadcast %cst_35 : f32 to vector<8x128xf32>
    %71 = arith.addf %70, %69 : vector<8x128xf32>
    %72 = arith.divf %70, %71 : vector<8x128xf32>
    %73 = math.tanh %67 : vector<8x128xf32>
    %c96_i32 = arith.constant 96 : i32
    %74 = tpu.dynamic_rotate %72 by %c96_i32 dim 1 : vector<8x128xf32>, i32 -> vector<8x128xf32>
    %c64_i32 = arith.constant 64 : i32
    %75 = tpu.dynamic_rotate %73 by %c64_i32 dim 1 : vector<8x128xf32>, i32 -> vector<8x128xf32>
    %c32_i32 = arith.constant 32 : i32
    %76 = tpu.dynamic_rotate %72 by %c32_i32 dim 1 : vector<8x128xf32>, i32 -> vector<8x128xf32>
    %77 = arith.mulf %74, %61 : vector<8x128xf32>
    %78 = arith.mulf %72, %75 : vector<8x128xf32>
    %79 = arith.addf %77, %78 : vector<8x128xf32>
    %80 = math.tanh %79 : vector<8x128xf32>
    %81 = arith.mulf %76, %80 : vector<8x128xf32>
    %c0_36 = arith.constant 0 : index
    %c0_37 = arith.constant 0 : index
    %82 = vector.load %arg12[%c0_36, %c0_37] : memref<128x128xf32, #tpu.memory_space<vmem>>, vector<128x128xf32>
    %cst_38 = arith.constant dense<0.000000e+00> : vector<8x128xf32>
    %83 = tpu.matmul %81, %82, %cst_38 {dimension_numbers = #tpu.dot_dimension_numbers<[1], [0], [0], [1], [0, 0, 1, 1], [], []>} : vector<8x128xf32>, vector<128x128xf32>, vector<8x128xf32> -> vector<8x128xf32>
    %c0_39 = arith.constant 0 : index
    %c0_40 = arith.constant 0 : index
    %84 = vector.load %arg13[%c0_39, %c0_40] : memref<128x128xf32, #tpu.memory_space<vmem>>, vector<128x128xf32>
    %cst_41 = arith.constant dense<0.000000e+00> : vector<8x128xf32>
    %85 = tpu.matmul %59, %84, %cst_41 {dimension_numbers = #tpu.dot_dimension_numbers<[1], [0], [0], [1], [0, 0, 1, 1], [], []>} : vector<8x128xf32>, vector<128x128xf32>, vector<8x128xf32> -> vector<8x128xf32>
    %86 = arith.addf %83, %85 : vector<8x128xf32>
    %87 = arith.addf %86, %55 : vector<8x128xf32>
    %88 = arith.negf %87 : vector<8x128xf32>
    %89 = math.exp %88 : vector<8x128xf32>
    %cst_42 = arith.constant 1.000000e+00 : f32
    %90 = vector.broadcast %cst_42 : f32 to vector<8x128xf32>
    %91 = arith.addf %90, %89 : vector<8x128xf32>
    %92 = arith.divf %90, %91 : vector<8x128xf32>
    %93 = math.tanh %87 : vector<8x128xf32>
    %c96_i32_43 = arith.constant 96 : i32
    %94 = tpu.dynamic_rotate %92 by %c96_i32_43 dim 1 : vector<8x128xf32>, i32 -> vector<8x128xf32>
    %c64_i32_44 = arith.constant 64 : i32
    %95 = tpu.dynamic_rotate %93 by %c64_i32_44 dim 1 : vector<8x128xf32>, i32 -> vector<8x128xf32>
    %c32_i32_45 = arith.constant 32 : i32
    %96 = tpu.dynamic_rotate %92 by %c32_i32_45 dim 1 : vector<8x128xf32>, i32 -> vector<8x128xf32>
    %97 = arith.mulf %94, %63 : vector<8x128xf32>
    %98 = arith.mulf %92, %95 : vector<8x128xf32>
    %99 = arith.addf %97, %98 : vector<8x128xf32>
    %100 = math.tanh %99 : vector<8x128xf32>
    %101 = arith.mulf %96, %100 : vector<8x128xf32>
    %102 = vector.extract_strided_slice %52 {offsets = [8, 0], sizes = [8, 128], strides = [1, 1]} : vector<64x128xf32> to vector<8x128xf32>
    %c0_46 = arith.constant 0 : index
    %c0_47 = arith.constant 0 : index
    %103 = vector.load %arg10[%c0_46, %c0_47] : memref<128x128xf32, #tpu.memory_space<vmem>>, vector<128x128xf32>
    %cst_48 = arith.constant dense<0.000000e+00> : vector<8x128xf32>
    %104 = tpu.matmul %81, %103, %cst_48 {dimension_numbers = #tpu.dot_dimension_numbers<[1], [0], [0], [1], [0, 0, 1, 1], [], []>} : vector<8x128xf32>, vector<128x128xf32>, vector<8x128xf32> -> vector<8x128xf32>
    %105 = arith.addf %102, %104 : vector<8x128xf32>
    %106 = arith.negf %105 : vector<8x128xf32>
    %107 = math.exp %106 : vector<8x128xf32>
    %cst_49 = arith.constant 1.000000e+00 : f32
    %108 = vector.broadcast %cst_49 : f32 to vector<8x128xf32>
    %109 = arith.addf %108, %107 : vector<8x128xf32>
    %110 = arith.divf %108, %109 : vector<8x128xf32>
    %111 = math.tanh %105 : vector<8x128xf32>
    %c96_i32_50 = arith.constant 96 : i32
    %112 = tpu.dynamic_rotate %110 by %c96_i32_50 dim 1 : vector<8x128xf32>, i32 -> vector<8x128xf32>
    %c64_i32_51 = arith.constant 64 : i32
    %113 = tpu.dynamic_rotate %111 by %c64_i32_51 dim 1 : vector<8x128xf32>, i32 -> vector<8x128xf32>
    %c32_i32_52 = arith.constant 32 : i32
    %114 = tpu.dynamic_rotate %110 by %c32_i32_52 dim 1 : vector<8x128xf32>, i32 -> vector<8x128xf32>
    %115 = arith.mulf %112, %79 : vector<8x128xf32>
    %116 = arith.mulf %110, %113 : vector<8x128xf32>
    %117 = arith.addf %115, %116 : vector<8x128xf32>
    %118 = math.tanh %117 : vector<8x128xf32>
    %119 = arith.mulf %114, %118 : vector<8x128xf32>
    %c0_53 = arith.constant 0 : index
    %c0_54 = arith.constant 0 : index
    %120 = vector.load %arg12[%c0_53, %c0_54] : memref<128x128xf32, #tpu.memory_space<vmem>>, vector<128x128xf32>
    %cst_55 = arith.constant dense<0.000000e+00> : vector<8x128xf32>
    %121 = tpu.matmul %119, %120, %cst_55 {dimension_numbers = #tpu.dot_dimension_numbers<[1], [0], [0], [1], [0, 0, 1, 1], [], []>} : vector<8x128xf32>, vector<128x128xf32>, vector<8x128xf32> -> vector<8x128xf32>
    %c0_56 = arith.constant 0 : index
    %c0_57 = arith.constant 0 : index
    %122 = vector.load %arg13[%c0_56, %c0_57] : memref<128x128xf32, #tpu.memory_space<vmem>>, vector<128x128xf32>
    %cst_58 = arith.constant dense<0.000000e+00> : vector<8x128xf32>
    %123 = tpu.matmul %101, %122, %cst_58 {dimension_numbers = #tpu.dot_dimension_numbers<[1], [0], [0], [1], [0, 0, 1, 1], [], []>} : vector<8x128xf32>, vector<128x128xf32>, vector<8x128xf32> -> vector<8x128xf32>
    %124 = arith.addf %121, %123 : vector<8x128xf32>
    %125 = arith.addf %124, %55 : vector<8x128xf32>
    %126 = arith.negf %125 : vector<8x128xf32>
    %127 = math.exp %126 : vector<8x128xf32>
    %cst_59 = arith.constant 1.000000e+00 : f32
    %128 = vector.broadcast %cst_59 : f32 to vector<8x128xf32>
    %129 = arith.addf %128, %127 : vector<8x128xf32>
    %130 = arith.divf %128, %129 : vector<8x128xf32>
    %131 = math.tanh %125 : vector<8x128xf32>
    %c96_i32_60 = arith.constant 96 : i32
    %132 = tpu.dynamic_rotate %130 by %c96_i32_60 dim 1 : vector<8x128xf32>, i32 -> vector<8x128xf32>
    %c64_i32_61 = arith.constant 64 : i32
    %133 = tpu.dynamic_rotate %131 by %c64_i32_61 dim 1 : vector<8x128xf32>, i32 -> vector<8x128xf32>
    %c32_i32_62 = arith.constant 32 : i32
    %134 = tpu.dynamic_rotate %130 by %c32_i32_62 dim 1 : vector<8x128xf32>, i32 -> vector<8x128xf32>
    %135 = arith.mulf %132, %99 : vector<8x128xf32>
    %136 = arith.mulf %130, %133 : vector<8x128xf32>
    %137 = arith.addf %135, %136 : vector<8x128xf32>
    %138 = math.tanh %137 : vector<8x128xf32>
    %139 = arith.mulf %134, %138 : vector<8x128xf32>
    %140 = vector.extract_strided_slice %52 {offsets = [16, 0], sizes = [8, 128], strides = [1, 1]} : vector<64x128xf32> to vector<8x128xf32>
    %c0_63 = arith.constant 0 : index
    %c0_64 = arith.constant 0 : index
    %141 = vector.load %arg10[%c0_63, %c0_64] : memref<128x128xf32, #tpu.memory_space<vmem>>, vector<128x128xf32>
    %cst_65 = arith.constant dense<0.000000e+00> : vector<8x128xf32>
    %142 = tpu.matmul %119, %141, %cst_65 {dimension_numbers = #tpu.dot_dimension_numbers<[1], [0], [0], [1], [0, 0, 1, 1], [], []>} : vector<8x128xf32>, vector<128x128xf32>, vector<8x128xf32> -> vector<8x128xf32>
    %143 = arith.addf %140, %142 : vector<8x128xf32>
    %144 = arith.negf %143 : vector<8x128xf32>
    %145 = math.exp %144 : vector<8x128xf32>
    %cst_66 = arith.constant 1.000000e+00 : f32
    %146 = vector.broadcast %cst_66 : f32 to vector<8x128xf32>
    %147 = arith.addf %146, %145 : vector<8x128xf32>
    %148 = arith.divf %146, %147 : vector<8x128xf32>
    %149 = math.tanh %143 : vector<8x128xf32>
    %c96_i32_67 = arith.constant 96 : i32
    %150 = tpu.dynamic_rotate %148 by %c96_i32_67 dim 1 : vector<8x128xf32>, i32 -> vector<8x128xf32>
    %c64_i32_68 = arith.constant 64 : i32
    %151 = tpu.dynamic_rotate %149 by %c64_i32_68 dim 1 : vector<8x128xf32>, i32 -> vector<8x128xf32>
    %c32_i32_69 = arith.constant 32 : i32
    %152 = tpu.dynamic_rotate %148 by %c32_i32_69 dim 1 : vector<8x128xf32>, i32 -> vector<8x128xf32>
    %153 = arith.mulf %150, %117 : vector<8x128xf32>
    %154 = arith.mulf %148, %151 : vector<8x128xf32>
    %155 = arith.addf %153, %154 : vector<8x128xf32>
    %156 = math.tanh %155 : vector<8x128xf32>
    %157 = arith.mulf %152, %156 : vector<8x128xf32>
    %c0_70 = arith.constant 0 : index
    %c0_71 = arith.constant 0 : index
    %158 = vector.load %arg12[%c0_70, %c0_71] : memref<128x128xf32, #tpu.memory_space<vmem>>, vector<128x128xf32>
    %cst_72 = arith.constant dense<0.000000e+00> : vector<8x128xf32>
    %159 = tpu.matmul %157, %158, %cst_72 {dimension_numbers = #tpu.dot_dimension_numbers<[1], [0], [0], [1], [0, 0, 1, 1], [], []>} : vector<8x128xf32>, vector<128x128xf32>, vector<8x128xf32> -> vector<8x128xf32>
    %c0_73 = arith.constant 0 : index
    %c0_74 = arith.constant 0 : index
    %160 = vector.load %arg13[%c0_73, %c0_74] : memref<128x128xf32, #tpu.memory_space<vmem>>, vector<128x128xf32>
    %cst_75 = arith.constant dense<0.000000e+00> : vector<8x128xf32>
    %161 = tpu.matmul %139, %160, %cst_75 {dimension_numbers = #tpu.dot_dimension_numbers<[1], [0], [0], [1], [0, 0, 1, 1], [], []>} : vector<8x128xf32>, vector<128x128xf32>, vector<8x128xf32> -> vector<8x128xf32>
    %162 = arith.addf %159, %161 : vector<8x128xf32>
    %163 = arith.addf %162, %55 : vector<8x128xf32>
    %164 = arith.negf %163 : vector<8x128xf32>
    %165 = math.exp %164 : vector<8x128xf32>
    %cst_76 = arith.constant 1.000000e+00 : f32
    %166 = vector.broadcast %cst_76 : f32 to vector<8x128xf32>
    %167 = arith.addf %166, %165 : vector<8x128xf32>
    %168 = arith.divf %166, %167 : vector<8x128xf32>
    %169 = math.tanh %163 : vector<8x128xf32>
    %c96_i32_77 = arith.constant 96 : i32
    %170 = tpu.dynamic_rotate %168 by %c96_i32_77 dim 1 : vector<8x128xf32>, i32 -> vector<8x128xf32>
    %c64_i32_78 = arith.constant 64 : i32
    %171 = tpu.dynamic_rotate %169 by %c64_i32_78 dim 1 : vector<8x128xf32>, i32 -> vector<8x128xf32>
    %c32_i32_79 = arith.constant 32 : i32
    %172 = tpu.dynamic_rotate %168 by %c32_i32_79 dim 1 : vector<8x128xf32>, i32 -> vector<8x128xf32>
    %173 = arith.mulf %170, %137 : vector<8x128xf32>
    %174 = arith.mulf %168, %171 : vector<8x128xf32>
    %175 = arith.addf %173, %174 : vector<8x128xf32>
    %176 = math.tanh %175 : vector<8x128xf32>
    %177 = arith.mulf %172, %176 : vector<8x128xf32>
    %178 = vector.extract_strided_slice %52 {offsets = [24, 0], sizes = [8, 128], strides = [1, 1]} : vector<64x128xf32> to vector<8x128xf32>
    %c0_80 = arith.constant 0 : index
    %c0_81 = arith.constant 0 : index
    %179 = vector.load %arg10[%c0_80, %c0_81] : memref<128x128xf32, #tpu.memory_space<vmem>>, vector<128x128xf32>
    %cst_82 = arith.constant dense<0.000000e+00> : vector<8x128xf32>
    %180 = tpu.matmul %157, %179, %cst_82 {dimension_numbers = #tpu.dot_dimension_numbers<[1], [0], [0], [1], [0, 0, 1, 1], [], []>} : vector<8x128xf32>, vector<128x128xf32>, vector<8x128xf32> -> vector<8x128xf32>
    %181 = arith.addf %178, %180 : vector<8x128xf32>
    %182 = arith.negf %181 : vector<8x128xf32>
    %183 = math.exp %182 : vector<8x128xf32>
    %cst_83 = arith.constant 1.000000e+00 : f32
    %184 = vector.broadcast %cst_83 : f32 to vector<8x128xf32>
    %185 = arith.addf %184, %183 : vector<8x128xf32>
    %186 = arith.divf %184, %185 : vector<8x128xf32>
    %187 = math.tanh %181 : vector<8x128xf32>
    %c96_i32_84 = arith.constant 96 : i32
    %188 = tpu.dynamic_rotate %186 by %c96_i32_84 dim 1 : vector<8x128xf32>, i32 -> vector<8x128xf32>
    %c64_i32_85 = arith.constant 64 : i32
    %189 = tpu.dynamic_rotate %187 by %c64_i32_85 dim 1 : vector<8x128xf32>, i32 -> vector<8x128xf32>
    %c32_i32_86 = arith.constant 32 : i32
    %190 = tpu.dynamic_rotate %186 by %c32_i32_86 dim 1 : vector<8x128xf32>, i32 -> vector<8x128xf32>
    %191 = arith.mulf %188, %155 : vector<8x128xf32>
    %192 = arith.mulf %186, %189 : vector<8x128xf32>
    %193 = arith.addf %191, %192 : vector<8x128xf32>
    %194 = math.tanh %193 : vector<8x128xf32>
    %195 = arith.mulf %190, %194 : vector<8x128xf32>
    %c0_87 = arith.constant 0 : index
    %c0_88 = arith.constant 0 : index
    %196 = vector.load %arg12[%c0_87, %c0_88] : memref<128x128xf32, #tpu.memory_space<vmem>>, vector<128x128xf32>
    %cst_89 = arith.constant dense<0.000000e+00> : vector<8x128xf32>
    %197 = tpu.matmul %195, %196, %cst_89 {dimension_numbers = #tpu.dot_dimension_numbers<[1], [0], [0], [1], [0, 0, 1, 1], [], []>} : vector<8x128xf32>, vector<128x128xf32>, vector<8x128xf32> -> vector<8x128xf32>
    %c0_90 = arith.constant 0 : index
    %c0_91 = arith.constant 0 : index
    %198 = vector.load %arg13[%c0_90, %c0_91] : memref<128x128xf32, #tpu.memory_space<vmem>>, vector<128x128xf32>
    %cst_92 = arith.constant dense<0.000000e+00> : vector<8x128xf32>
    %199 = tpu.matmul %177, %198, %cst_92 {dimension_numbers = #tpu.dot_dimension_numbers<[1], [0], [0], [1], [0, 0, 1, 1], [], []>} : vector<8x128xf32>, vector<128x128xf32>, vector<8x128xf32> -> vector<8x128xf32>
    %200 = arith.addf %197, %199 : vector<8x128xf32>
    %201 = arith.addf %200, %55 : vector<8x128xf32>
    %202 = arith.negf %201 : vector<8x128xf32>
    %203 = math.exp %202 : vector<8x128xf32>
    %cst_93 = arith.constant 1.000000e+00 : f32
    %204 = vector.broadcast %cst_93 : f32 to vector<8x128xf32>
    %205 = arith.addf %204, %203 : vector<8x128xf32>
    %206 = arith.divf %204, %205 : vector<8x128xf32>
    %207 = math.tanh %201 : vector<8x128xf32>
    %c96_i32_94 = arith.constant 96 : i32
    %208 = tpu.dynamic_rotate %206 by %c96_i32_94 dim 1 : vector<8x128xf32>, i32 -> vector<8x128xf32>
    %c64_i32_95 = arith.constant 64 : i32
    %209 = tpu.dynamic_rotate %207 by %c64_i32_95 dim 1 : vector<8x128xf32>, i32 -> vector<8x128xf32>
    %c32_i32_96 = arith.constant 32 : i32
    %210 = tpu.dynamic_rotate %206 by %c32_i32_96 dim 1 : vector<8x128xf32>, i32 -> vector<8x128xf32>
    %211 = arith.mulf %208, %175 : vector<8x128xf32>
    %212 = arith.mulf %206, %209 : vector<8x128xf32>
    %213 = arith.addf %211, %212 : vector<8x128xf32>
    %214 = math.tanh %213 : vector<8x128xf32>
    %215 = arith.mulf %210, %214 : vector<8x128xf32>
    %216 = vector.extract_strided_slice %52 {offsets = [32, 0], sizes = [8, 128], strides = [1, 1]} : vector<64x128xf32> to vector<8x128xf32>
    %c0_97 = arith.constant 0 : index
    %c0_98 = arith.constant 0 : index
    %217 = vector.load %arg10[%c0_97, %c0_98] : memref<128x128xf32, #tpu.memory_space<vmem>>, vector<128x128xf32>
    %cst_99 = arith.constant dense<0.000000e+00> : vector<8x128xf32>
    %218 = tpu.matmul %195, %217, %cst_99 {dimension_numbers = #tpu.dot_dimension_numbers<[1], [0], [0], [1], [0, 0, 1, 1], [], []>} : vector<8x128xf32>, vector<128x128xf32>, vector<8x128xf32> -> vector<8x128xf32>
    %219 = arith.addf %216, %218 : vector<8x128xf32>
    %220 = arith.negf %219 : vector<8x128xf32>
    %221 = math.exp %220 : vector<8x128xf32>
    %cst_100 = arith.constant 1.000000e+00 : f32
    %222 = vector.broadcast %cst_100 : f32 to vector<8x128xf32>
    %223 = arith.addf %222, %221 : vector<8x128xf32>
    %224 = arith.divf %222, %223 : vector<8x128xf32>
    %225 = math.tanh %219 : vector<8x128xf32>
    %c96_i32_101 = arith.constant 96 : i32
    %226 = tpu.dynamic_rotate %224 by %c96_i32_101 dim 1 : vector<8x128xf32>, i32 -> vector<8x128xf32>
    %c64_i32_102 = arith.constant 64 : i32
    %227 = tpu.dynamic_rotate %225 by %c64_i32_102 dim 1 : vector<8x128xf32>, i32 -> vector<8x128xf32>
    %c32_i32_103 = arith.constant 32 : i32
    %228 = tpu.dynamic_rotate %224 by %c32_i32_103 dim 1 : vector<8x128xf32>, i32 -> vector<8x128xf32>
    %229 = arith.mulf %226, %193 : vector<8x128xf32>
    %230 = arith.mulf %224, %227 : vector<8x128xf32>
    %231 = arith.addf %229, %230 : vector<8x128xf32>
    %232 = math.tanh %231 : vector<8x128xf32>
    %233 = arith.mulf %228, %232 : vector<8x128xf32>
    %c0_104 = arith.constant 0 : index
    %c0_105 = arith.constant 0 : index
    %234 = vector.load %arg12[%c0_104, %c0_105] : memref<128x128xf32, #tpu.memory_space<vmem>>, vector<128x128xf32>
    %cst_106 = arith.constant dense<0.000000e+00> : vector<8x128xf32>
    %235 = tpu.matmul %233, %234, %cst_106 {dimension_numbers = #tpu.dot_dimension_numbers<[1], [0], [0], [1], [0, 0, 1, 1], [], []>} : vector<8x128xf32>, vector<128x128xf32>, vector<8x128xf32> -> vector<8x128xf32>
    %c0_107 = arith.constant 0 : index
    %c0_108 = arith.constant 0 : index
    %236 = vector.load %arg13[%c0_107, %c0_108] : memref<128x128xf32, #tpu.memory_space<vmem>>, vector<128x128xf32>
    %cst_109 = arith.constant dense<0.000000e+00> : vector<8x128xf32>
    %237 = tpu.matmul %215, %236, %cst_109 {dimension_numbers = #tpu.dot_dimension_numbers<[1], [0], [0], [1], [0, 0, 1, 1], [], []>} : vector<8x128xf32>, vector<128x128xf32>, vector<8x128xf32> -> vector<8x128xf32>
    %238 = arith.addf %235, %237 : vector<8x128xf32>
    %239 = arith.addf %238, %55 : vector<8x128xf32>
    %240 = arith.negf %239 : vector<8x128xf32>
    %241 = math.exp %240 : vector<8x128xf32>
    %cst_110 = arith.constant 1.000000e+00 : f32
    %242 = vector.broadcast %cst_110 : f32 to vector<8x128xf32>
    %243 = arith.addf %242, %241 : vector<8x128xf32>
    %244 = arith.divf %242, %243 : vector<8x128xf32>
    %245 = math.tanh %239 : vector<8x128xf32>
    %c96_i32_111 = arith.constant 96 : i32
    %246 = tpu.dynamic_rotate %244 by %c96_i32_111 dim 1 : vector<8x128xf32>, i32 -> vector<8x128xf32>
    %c64_i32_112 = arith.constant 64 : i32
    %247 = tpu.dynamic_rotate %245 by %c64_i32_112 dim 1 : vector<8x128xf32>, i32 -> vector<8x128xf32>
    %c32_i32_113 = arith.constant 32 : i32
    %248 = tpu.dynamic_rotate %244 by %c32_i32_113 dim 1 : vector<8x128xf32>, i32 -> vector<8x128xf32>
    %249 = arith.mulf %246, %213 : vector<8x128xf32>
    %250 = arith.mulf %244, %247 : vector<8x128xf32>
    %251 = arith.addf %249, %250 : vector<8x128xf32>
    %252 = math.tanh %251 : vector<8x128xf32>
    %253 = arith.mulf %248, %252 : vector<8x128xf32>
    %254 = vector.extract_strided_slice %52 {offsets = [40, 0], sizes = [8, 128], strides = [1, 1]} : vector<64x128xf32> to vector<8x128xf32>
    %c0_114 = arith.constant 0 : index
    %c0_115 = arith.constant 0 : index
    %255 = vector.load %arg10[%c0_114, %c0_115] : memref<128x128xf32, #tpu.memory_space<vmem>>, vector<128x128xf32>
    %cst_116 = arith.constant dense<0.000000e+00> : vector<8x128xf32>
    %256 = tpu.matmul %233, %255, %cst_116 {dimension_numbers = #tpu.dot_dimension_numbers<[1], [0], [0], [1], [0, 0, 1, 1], [], []>} : vector<8x128xf32>, vector<128x128xf32>, vector<8x128xf32> -> vector<8x128xf32>
    %257 = arith.addf %254, %256 : vector<8x128xf32>
    %258 = arith.negf %257 : vector<8x128xf32>
    %259 = math.exp %258 : vector<8x128xf32>
    %cst_117 = arith.constant 1.000000e+00 : f32
    %260 = vector.broadcast %cst_117 : f32 to vector<8x128xf32>
    %261 = arith.addf %260, %259 : vector<8x128xf32>
    %262 = arith.divf %260, %261 : vector<8x128xf32>
    %263 = math.tanh %257 : vector<8x128xf32>
    %c96_i32_118 = arith.constant 96 : i32
    %264 = tpu.dynamic_rotate %262 by %c96_i32_118 dim 1 : vector<8x128xf32>, i32 -> vector<8x128xf32>
    %c64_i32_119 = arith.constant 64 : i32
    %265 = tpu.dynamic_rotate %263 by %c64_i32_119 dim 1 : vector<8x128xf32>, i32 -> vector<8x128xf32>
    %c32_i32_120 = arith.constant 32 : i32
    %266 = tpu.dynamic_rotate %262 by %c32_i32_120 dim 1 : vector<8x128xf32>, i32 -> vector<8x128xf32>
    %267 = arith.mulf %264, %231 : vector<8x128xf32>
    %268 = arith.mulf %262, %265 : vector<8x128xf32>
    %269 = arith.addf %267, %268 : vector<8x128xf32>
    %270 = math.tanh %269 : vector<8x128xf32>
    %271 = arith.mulf %266, %270 : vector<8x128xf32>
    %c0_121 = arith.constant 0 : index
    %c0_122 = arith.constant 0 : index
    %272 = vector.load %arg12[%c0_121, %c0_122] : memref<128x128xf32, #tpu.memory_space<vmem>>, vector<128x128xf32>
    %cst_123 = arith.constant dense<0.000000e+00> : vector<8x128xf32>
    %273 = tpu.matmul %271, %272, %cst_123 {dimension_numbers = #tpu.dot_dimension_numbers<[1], [0], [0], [1], [0, 0, 1, 1], [], []>} : vector<8x128xf32>, vector<128x128xf32>, vector<8x128xf32> -> vector<8x128xf32>
    %c0_124 = arith.constant 0 : index
    %c0_125 = arith.constant 0 : index
    %274 = vector.load %arg13[%c0_124, %c0_125] : memref<128x128xf32, #tpu.memory_space<vmem>>, vector<128x128xf32>
    %cst_126 = arith.constant dense<0.000000e+00> : vector<8x128xf32>
    %275 = tpu.matmul %253, %274, %cst_126 {dimension_numbers = #tpu.dot_dimension_numbers<[1], [0], [0], [1], [0, 0, 1, 1], [], []>} : vector<8x128xf32>, vector<128x128xf32>, vector<8x128xf32> -> vector<8x128xf32>
    %276 = arith.addf %273, %275 : vector<8x128xf32>
    %277 = arith.addf %276, %55 : vector<8x128xf32>
    %278 = arith.negf %277 : vector<8x128xf32>
    %279 = math.exp %278 : vector<8x128xf32>
    %cst_127 = arith.constant 1.000000e+00 : f32
    %280 = vector.broadcast %cst_127 : f32 to vector<8x128xf32>
    %281 = arith.addf %280, %279 : vector<8x128xf32>
    %282 = arith.divf %280, %281 : vector<8x128xf32>
    %283 = math.tanh %277 : vector<8x128xf32>
    %c96_i32_128 = arith.constant 96 : i32
    %284 = tpu.dynamic_rotate %282 by %c96_i32_128 dim 1 : vector<8x128xf32>, i32 -> vector<8x128xf32>
    %c64_i32_129 = arith.constant 64 : i32
    %285 = tpu.dynamic_rotate %283 by %c64_i32_129 dim 1 : vector<8x128xf32>, i32 -> vector<8x128xf32>
    %c32_i32_130 = arith.constant 32 : i32
    %286 = tpu.dynamic_rotate %282 by %c32_i32_130 dim 1 : vector<8x128xf32>, i32 -> vector<8x128xf32>
    %287 = arith.mulf %284, %251 : vector<8x128xf32>
    %288 = arith.mulf %282, %285 : vector<8x128xf32>
    %289 = arith.addf %287, %288 : vector<8x128xf32>
    %290 = math.tanh %289 : vector<8x128xf32>
    %291 = arith.mulf %286, %290 : vector<8x128xf32>
    %292 = vector.extract_strided_slice %52 {offsets = [48, 0], sizes = [8, 128], strides = [1, 1]} : vector<64x128xf32> to vector<8x128xf32>
    %c0_131 = arith.constant 0 : index
    %c0_132 = arith.constant 0 : index
    %293 = vector.load %arg10[%c0_131, %c0_132] : memref<128x128xf32, #tpu.memory_space<vmem>>, vector<128x128xf32>
    %cst_133 = arith.constant dense<0.000000e+00> : vector<8x128xf32>
    %294 = tpu.matmul %271, %293, %cst_133 {dimension_numbers = #tpu.dot_dimension_numbers<[1], [0], [0], [1], [0, 0, 1, 1], [], []>} : vector<8x128xf32>, vector<128x128xf32>, vector<8x128xf32> -> vector<8x128xf32>
    %295 = arith.addf %292, %294 : vector<8x128xf32>
    %296 = arith.negf %295 : vector<8x128xf32>
    %297 = math.exp %296 : vector<8x128xf32>
    %cst_134 = arith.constant 1.000000e+00 : f32
    %298 = vector.broadcast %cst_134 : f32 to vector<8x128xf32>
    %299 = arith.addf %298, %297 : vector<8x128xf32>
    %300 = arith.divf %298, %299 : vector<8x128xf32>
    %301 = math.tanh %295 : vector<8x128xf32>
    %c96_i32_135 = arith.constant 96 : i32
    %302 = tpu.dynamic_rotate %300 by %c96_i32_135 dim 1 : vector<8x128xf32>, i32 -> vector<8x128xf32>
    %c64_i32_136 = arith.constant 64 : i32
    %303 = tpu.dynamic_rotate %301 by %c64_i32_136 dim 1 : vector<8x128xf32>, i32 -> vector<8x128xf32>
    %c32_i32_137 = arith.constant 32 : i32
    %304 = tpu.dynamic_rotate %300 by %c32_i32_137 dim 1 : vector<8x128xf32>, i32 -> vector<8x128xf32>
    %305 = arith.mulf %302, %269 : vector<8x128xf32>
    %306 = arith.mulf %300, %303 : vector<8x128xf32>
    %307 = arith.addf %305, %306 : vector<8x128xf32>
    %308 = math.tanh %307 : vector<8x128xf32>
    %309 = arith.mulf %304, %308 : vector<8x128xf32>
    %c0_138 = arith.constant 0 : index
    %c0_139 = arith.constant 0 : index
    %310 = vector.load %arg12[%c0_138, %c0_139] : memref<128x128xf32, #tpu.memory_space<vmem>>, vector<128x128xf32>
    %cst_140 = arith.constant dense<0.000000e+00> : vector<8x128xf32>
    %311 = tpu.matmul %309, %310, %cst_140 {dimension_numbers = #tpu.dot_dimension_numbers<[1], [0], [0], [1], [0, 0, 1, 1], [], []>} : vector<8x128xf32>, vector<128x128xf32>, vector<8x128xf32> -> vector<8x128xf32>
    %c0_141 = arith.constant 0 : index
    %c0_142 = arith.constant 0 : index
    %312 = vector.load %arg13[%c0_141, %c0_142] : memref<128x128xf32, #tpu.memory_space<vmem>>, vector<128x128xf32>
    %cst_143 = arith.constant dense<0.000000e+00> : vector<8x128xf32>
    %313 = tpu.matmul %291, %312, %cst_143 {dimension_numbers = #tpu.dot_dimension_numbers<[1], [0], [0], [1], [0, 0, 1, 1], [], []>} : vector<8x128xf32>, vector<128x128xf32>, vector<8x128xf32> -> vector<8x128xf32>
    %314 = arith.addf %311, %313 : vector<8x128xf32>
    %315 = arith.addf %314, %55 : vector<8x128xf32>
    %316 = arith.negf %315 : vector<8x128xf32>
    %317 = math.exp %316 : vector<8x128xf32>
    %cst_144 = arith.constant 1.000000e+00 : f32
    %318 = vector.broadcast %cst_144 : f32 to vector<8x128xf32>
    %319 = arith.addf %318, %317 : vector<8x128xf32>
    %320 = arith.divf %318, %319 : vector<8x128xf32>
    %321 = math.tanh %315 : vector<8x128xf32>
    %c96_i32_145 = arith.constant 96 : i32
    %322 = tpu.dynamic_rotate %320 by %c96_i32_145 dim 1 : vector<8x128xf32>, i32 -> vector<8x128xf32>
    %c64_i32_146 = arith.constant 64 : i32
    %323 = tpu.dynamic_rotate %321 by %c64_i32_146 dim 1 : vector<8x128xf32>, i32 -> vector<8x128xf32>
    %c32_i32_147 = arith.constant 32 : i32
    %324 = tpu.dynamic_rotate %320 by %c32_i32_147 dim 1 : vector<8x128xf32>, i32 -> vector<8x128xf32>
    %325 = arith.mulf %322, %289 : vector<8x128xf32>
    %326 = arith.mulf %320, %323 : vector<8x128xf32>
    %327 = arith.addf %325, %326 : vector<8x128xf32>
    %328 = math.tanh %327 : vector<8x128xf32>
    %329 = arith.mulf %324, %328 : vector<8x128xf32>
    %330 = vector.extract_strided_slice %52 {offsets = [56, 0], sizes = [8, 128], strides = [1, 1]} : vector<64x128xf32> to vector<8x128xf32>
    %c0_148 = arith.constant 0 : index
    %c0_149 = arith.constant 0 : index
    %331 = vector.load %arg10[%c0_148, %c0_149] : memref<128x128xf32, #tpu.memory_space<vmem>>, vector<128x128xf32>
    %cst_150 = arith.constant dense<0.000000e+00> : vector<8x128xf32>
    %332 = tpu.matmul %309, %331, %cst_150 {dimension_numbers = #tpu.dot_dimension_numbers<[1], [0], [0], [1], [0, 0, 1, 1], [], []>} : vector<8x128xf32>, vector<128x128xf32>, vector<8x128xf32> -> vector<8x128xf32>
    %333 = arith.addf %330, %332 : vector<8x128xf32>
    %334 = arith.negf %333 : vector<8x128xf32>
    %335 = math.exp %334 : vector<8x128xf32>
    %cst_151 = arith.constant 1.000000e+00 : f32
    %336 = vector.broadcast %cst_151 : f32 to vector<8x128xf32>
    %337 = arith.addf %336, %335 : vector<8x128xf32>
    %338 = arith.divf %336, %337 : vector<8x128xf32>
    %339 = math.tanh %333 : vector<8x128xf32>
    %c96_i32_152 = arith.constant 96 : i32
    %340 = tpu.dynamic_rotate %338 by %c96_i32_152 dim 1 : vector<8x128xf32>, i32 -> vector<8x128xf32>
    %c64_i32_153 = arith.constant 64 : i32
    %341 = tpu.dynamic_rotate %339 by %c64_i32_153 dim 1 : vector<8x128xf32>, i32 -> vector<8x128xf32>
    %c32_i32_154 = arith.constant 32 : i32
    %342 = tpu.dynamic_rotate %338 by %c32_i32_154 dim 1 : vector<8x128xf32>, i32 -> vector<8x128xf32>
    %343 = arith.mulf %340, %307 : vector<8x128xf32>
    %344 = arith.mulf %338, %341 : vector<8x128xf32>
    %345 = arith.addf %343, %344 : vector<8x128xf32>
    %346 = math.tanh %345 : vector<8x128xf32>
    %347 = arith.mulf %342, %346 : vector<8x128xf32>
    %c0_155 = arith.constant 0 : index
    %c0_156 = arith.constant 0 : index
    %348 = vector.load %arg12[%c0_155, %c0_156] : memref<128x128xf32, #tpu.memory_space<vmem>>, vector<128x128xf32>
    %cst_157 = arith.constant dense<0.000000e+00> : vector<8x128xf32>
    %349 = tpu.matmul %347, %348, %cst_157 {dimension_numbers = #tpu.dot_dimension_numbers<[1], [0], [0], [1], [0, 0, 1, 1], [], []>} : vector<8x128xf32>, vector<128x128xf32>, vector<8x128xf32> -> vector<8x128xf32>
    %c0_158 = arith.constant 0 : index
    %c0_159 = arith.constant 0 : index
    %350 = vector.load %arg13[%c0_158, %c0_159] : memref<128x128xf32, #tpu.memory_space<vmem>>, vector<128x128xf32>
    %cst_160 = arith.constant dense<0.000000e+00> : vector<8x128xf32>
    %351 = tpu.matmul %329, %350, %cst_160 {dimension_numbers = #tpu.dot_dimension_numbers<[1], [0], [0], [1], [0, 0, 1, 1], [], []>} : vector<8x128xf32>, vector<128x128xf32>, vector<8x128xf32> -> vector<8x128xf32>
    %352 = arith.addf %349, %351 : vector<8x128xf32>
    %353 = arith.addf %352, %55 : vector<8x128xf32>
    %354 = arith.negf %353 : vector<8x128xf32>
    %355 = math.exp %354 : vector<8x128xf32>
    %cst_161 = arith.constant 1.000000e+00 : f32
    %356 = vector.broadcast %cst_161 : f32 to vector<8x128xf32>
    %357 = arith.addf %356, %355 : vector<8x128xf32>
    %358 = arith.divf %356, %357 : vector<8x128xf32>
    %359 = math.tanh %353 : vector<8x128xf32>
    %c96_i32_162 = arith.constant 96 : i32
    %360 = tpu.dynamic_rotate %358 by %c96_i32_162 dim 1 : vector<8x128xf32>, i32 -> vector<8x128xf32>
    %c64_i32_163 = arith.constant 64 : i32
    %361 = tpu.dynamic_rotate %359 by %c64_i32_163 dim 1 : vector<8x128xf32>, i32 -> vector<8x128xf32>
    %c32_i32_164 = arith.constant 32 : i32
    %362 = tpu.dynamic_rotate %358 by %c32_i32_164 dim 1 : vector<8x128xf32>, i32 -> vector<8x128xf32>
    %363 = arith.mulf %360, %327 : vector<8x128xf32>
    %364 = arith.mulf %358, %361 : vector<8x128xf32>
    %365 = arith.addf %363, %364 : vector<8x128xf32>
    %366 = math.tanh %365 : vector<8x128xf32>
    %367 = arith.mulf %362, %366 : vector<8x128xf32>
    %368 = tpu.concatenate %101, %139, %177, %215, %253, %291, %329, %367 in 0 : vector<8x128xf32>, vector<8x128xf32>, vector<8x128xf32>, vector<8x128xf32>, vector<8x128xf32>, vector<8x128xf32>, vector<8x128xf32>, vector<8x128xf32> -> vector<64x128xf32>
    %369 = tpu.iota {dimensions = array<i32: 0>} : vector<64x128xi32>
    %c8_i32_165 = arith.constant 8 : i32
    %c0_i32_166 = arith.constant 0 : i32
    %370 = arith.cmpi eq, %c8_i32_165, %c0_i32_166 : i32
    %c1_i32_167 = arith.constant 1 : i32
    %371 = arith.select %370, %c1_i32_167, %c8_i32_165 : i32
    %372 = vector.broadcast %371 : i32 to vector<64x128xi32>
    %373 = arith.remsi %369, %372 : vector<64x128xi32>
    %c0_i32_168 = arith.constant 0 : i32
    %374 = vector.broadcast %c0_i32_168 : i32 to vector<64x128xi32>
    %375 = arith.cmpi ne, %373, %374 : vector<64x128xi32>
    %c0_i32_169 = arith.constant 0 : i32
    %376 = vector.broadcast %c0_i32_169 : i32 to vector<64x128xi32>
    %377 = arith.cmpi slt, %373, %376 : vector<64x128xi32>
    %c0_i32_170 = arith.constant 0 : i32
    %378 = arith.cmpi slt, %371, %c0_i32_170 : i32
    %379 = vector.broadcast %378 : i1 to vector<64x128xi1>
    %380 = vector.broadcast %379 : vector<64x128xi1> to vector<64x128xi1>
    %381 = arith.xori %377, %380 : vector<64x128xi1>
    %382 = arith.andi %381, %375 : vector<64x128xi1>
    %383 = vector.broadcast %371 : i32 to vector<64x128xi32>
    %384 = arith.addi %373, %383 : vector<64x128xi32>
    %385 = arith.select %382, %384, %373 : vector<64x128xi1>, vector<64x128xi32>
    %c2_i32_171 = arith.constant 2 : i32
    %386 = vector.broadcast %c2_i32_171 : i32 to vector<64x128xi32>
    %387 = arith.cmpi slt, %385, %386 : vector<64x128xi32>
    %cst_172 = arith.constant 0.000000e+00 : f32
    %388 = vector.broadcast %cst_172 : f32 to vector<64x128xf32>
    %389 = arith.select %387, %368, %388 : vector<64x128xi1>, vector<64x128xf32>
    %cst_173 = arith.constant dense<0.000000e+00> : vector<128xf32>
    %390 = vector.multi_reduction <add>, %389, %cst_173 [0] : vector<64x128xf32> to vector<128xf32>
    %391 = vector.shape_cast %390 : vector<128xf32> to vector<1x128xf32>
    %cst_174 = arith.constant 6.250000e-02 : f32
    %392 = vector.broadcast %cst_174 : f32 to vector<1x128xf32>
    %393 = arith.mulf %391, %392 : vector<1x128xf32>
    %394 = vector.broadcast %393 : vector<1x128xf32> to vector<64x128xf32>
    %395 = arith.subf %368, %394 : vector<64x128xf32>
    %cst_175 = arith.constant 0.000000e+00 : f32
    %396 = vector.broadcast %cst_175 : f32 to vector<64x128xf32>
    %397 = arith.select %387, %395, %396 : vector<64x128xi1>, vector<64x128xf32>
    %398 = arith.mulf %397, %397 : vector<64x128xf32>
    %cst_176 = arith.constant dense<0.000000e+00> : vector<128xf32>
    %399 = vector.multi_reduction <add>, %398, %cst_176 [0] : vector<64x128xf32> to vector<128xf32>
    %400 = vector.shape_cast %399 : vector<128xf32> to vector<1x128xf32>
    %cst_177 = arith.constant 6.250000e-02 : f32
    %401 = vector.broadcast %cst_177 : f32 to vector<1x128xf32>
    %402 = arith.mulf %400, %401 : vector<1x128xf32>
    %403 = vector.broadcast %393 : vector<1x128xf32> to vector<64x128xf32>
    %404 = arith.subf %368, %403 : vector<64x128xf32>
    %cst_178 = arith.constant 9.99999974E-6 : f32
    %405 = vector.broadcast %cst_178 : f32 to vector<1x128xf32>
    %406 = arith.addf %402, %405 : vector<1x128xf32>
    %407 = math.rsqrt %406 : vector<1x128xf32>
    %408 = vector.broadcast %407 : vector<1x128xf32> to vector<64x128xf32>
    %409 = arith.mulf %404, %408 : vector<64x128xf32>
    %c0_179 = arith.constant 0 : index
    %c0_180 = arith.constant 0 : index
    %410 = vector.load %arg3[%c0_179, %c0_180] : memref<1x128xf32, #tpu.memory_space<vmem>>, vector<1x128xf32>
    %411 = vector.broadcast %410 : vector<1x128xf32> to vector<64x128xf32>
    %412 = arith.mulf %409, %411 : vector<64x128xf32>
    %c0_181 = arith.constant 0 : index
    %c0_182 = arith.constant 0 : index
    %413 = vector.load %arg4[%c0_181, %c0_182] : memref<1x128xf32, #tpu.memory_space<vmem>>, vector<1x128xf32>
    %414 = vector.broadcast %413 : vector<1x128xf32> to vector<64x128xf32>
    %415 = arith.addf %412, %414 : vector<64x128xf32>
    %c0_183 = arith.constant 0 : index
    %c0_184 = arith.constant 0 : index
    %416 = vector.load %arg5[%c0_183, %c0_184] : memref<128x128xf32, #tpu.memory_space<vmem>>, vector<128x128xf32>
    %cst_185 = arith.constant dense<0.000000e+00> : vector<64x128xf32>
    %417 = tpu.matmul %415, %416, %cst_185 {dimension_numbers = #tpu.dot_dimension_numbers<[1], [0], [0], [1], [0, 0, 1, 1], [], []>} : vector<64x128xf32>, vector<128x128xf32>, vector<64x128xf32> -> vector<64x128xf32>
    %c0_186 = arith.constant 0 : index
    %c0_187 = arith.constant 0 : index
    %418 = vector.load %arg6[%c0_186, %c0_187] : memref<1x128xf32, #tpu.memory_space<vmem>>, vector<1x128xf32>
    %419 = vector.broadcast %418 : vector<1x128xf32> to vector<64x128xf32>
    %420 = arith.addf %417, %419 : vector<64x128xf32>
    %c0_188 = arith.constant 0 : index
    %c0_189 = arith.constant 0 : index
    %421 = vector.load %arg15[%c0_188, %c0_189] : memref<64x128xf32, #tpu.memory_space<vmem>>, vector<64x128xf32>
    tpu.vector_store %arg15[%c0_188, %c0_189], %420 {strides = array<i32>} : memref<64x128xf32, #tpu.memory_space<vmem>>, vector<64x128xf32>,
    %c0_190 = arith.constant 0 : index
    %c0_191 = arith.constant 0 : index
    %c0_192 = arith.constant 0 : index
    %422 = vector.load %arg16[%c0_190, %c0_191, %c0_192] : memref<2x8x128xf32, #tpu.memory_space<vmem>>, vector<1x8x128xf32>
    %423 = vector.shape_cast %422 : vector<1x8x128xf32> to vector<8x128xf32>
    %424 = vector.shape_cast %347 : vector<8x128xf32> to vector<1x8x128xf32>
    tpu.vector_store %arg16[%c0_190, %c0_191, %c0_192], %424 {strides = array<i32>} : memref<2x8x128xf32, #tpu.memory_space<vmem>>, vector<1x8x128xf32>,
    %c0_193 = arith.constant 0 : index
    %c0_194 = arith.constant 0 : index
    %c0_195 = arith.constant 0 : index
    %425 = vector.load %arg17[%c0_193, %c0_194, %c0_195] : memref<2x8x128xf32, #tpu.memory_space<vmem>>, vector<1x8x128xf32>
    %426 = vector.shape_cast %425 : vector<1x8x128xf32> to vector<8x128xf32>
    %427 = vector.shape_cast %345 : vector<8x128xf32> to vector<1x8x128xf32>
    tpu.vector_store %arg17[%c0_193, %c0_194, %c0_195], %427 {strides = array<i32>} : memref<2x8x128xf32, #tpu.memory_space<vmem>>, vector<1x8x128xf32>,
    %c1_196 = arith.constant 1 : index
    %c0_197 = arith.constant 0 : index
    %c0_198 = arith.constant 0 : index
    %428 = vector.load %arg16[%c1_196, %c0_197, %c0_198] : memref<2x8x128xf32, #tpu.memory_space<vmem>>, vector<1x8x128xf32>
    %429 = vector.shape_cast %428 : vector<1x8x128xf32> to vector<8x128xf32>
    %430 = vector.shape_cast %367 : vector<8x128xf32> to vector<1x8x128xf32>
    tpu.vector_store %arg16[%c1_196, %c0_197, %c0_198], %430 {strides = array<i32>} : memref<2x8x128xf32, #tpu.memory_space<vmem>>, vector<1x8x128xf32>,
    %c1_199 = arith.constant 1 : index
    %c0_200 = arith.constant 0 : index
    %c0_201 = arith.constant 0 : index
    %431 = vector.load %arg17[%c1_199, %c0_200, %c0_201] : memref<2x8x128xf32, #tpu.memory_space<vmem>>, vector<1x8x128xf32>
    %432 = vector.shape_cast %431 : vector<1x8x128xf32> to vector<8x128xf32>
    %433 = vector.shape_cast %365 : vector<8x128xf32> to vector<1x8x128xf32>
    tpu.vector_store %arg17[%c1_199, %c0_200, %c0_201], %433 {strides = array<i32>} : memref<2x8x128xf32, #tpu.memory_space<vmem>>, vector<1x8x128xf32>,
    return
  }
}

</mosaic_0001>

<llo_original>
// kernel: tpu_custom_call.1
$region0: #{tpu_custom_call.1}
  #allocation0 [shape = 'u32[]', space=smem, size = 0x4, offset = 0x4, fixed_abs, tag = 'smem constant byte address 0x4 - core index']
  #allocation1 [shape = 'u32[144,128]{1,0:T(1,128)}', space=vmem, size = 0x12000, scoped, tag = 'internal scratch']
  %s0 = inlined_call_operand.vmem [shape: f32[64,4], index: 0, kind: input, shape index: {}]
  %s1 = inlined_call_operand.vmem [shape: f32[1,4], index: 1, kind: input, shape index: {}]
  %s2 = inlined_call_operand.vmem [shape: f32[1,4], index: 2, kind: input, shape index: {}]
  %s3 = inlined_call_operand.vmem [shape: f32[1,128], index: 3, kind: input, shape index: {}]
  %s4 = inlined_call_operand.vmem [shape: f32[1,128], index: 4, kind: input, shape index: {}]
  %s5 = inlined_call_operand.hbm [shape: f32[128,128], index: 5, kind: input, shape index: {}]
  %s6 = inlined_call_operand.vmem [shape: f32[1,128], index: 6, kind: input, shape index: {}]
  %s7 = inlined_call_operand.vmem [shape: f32[2,8,128], index: 7, kind: input, shape index: {}]
  %s8 = inlined_call_operand.vmem [shape: f32[2,8,128], index: 8, kind: input, shape index: {}]
  %s9 = inlined_call_operand.vmem [shape: f32[4,128], index: 9, kind: input, shape index: {}]
  %s10 = inlined_call_operand.hbm [shape: f32[128,128], index: 10, kind: input, shape index: {}]
  %s11 = inlined_call_operand.vmem [shape: f32[1,128], index: 11, kind: input, shape index: {}]
  %s12 = inlined_call_operand.hbm [shape: f32[128,128], index: 12, kind: input, shape index: {}]
  %s13 = inlined_call_operand.hbm [shape: f32[128,128], index: 13, kind: input, shape index: {}]
  %s14 = inlined_call_operand.vmem [shape: f32[1,128], index: 14, kind: input, shape index: {}]
  %s15 = inlined_call_operand.hbm [shape: f32[64,128], index: 15, kind: output, shape index: {0}]
  %s16 = inlined_call_operand.hbm [shape: f32[2,8,128], index: 16, kind: output, shape index: {1}]
  %s17 = inlined_call_operand.hbm [shape: f32[2,8,128], index: 17, kind: output, shape index: {2}]
  %18 = xla_tuple %s15, %s16, %s17
  %s19 = sld [smem:[#allocation0]]
  $region102: #{tpu_custom_call.1} parent=0
    _
  %s21 = ssub.s32 1, %s19
  %s22 = scalar_select 0, %s21, %s19
  $region1: #{tpu_custom_call.1} parent=0
    #allocation2 [shape = 'u8[65536]{0}', space=vmem, size = 0x10000, scoped, tag = 'input window, operand 5, single buffered']
    #allocation3 [shape = 's32[1]{0}', space=sflag, size = 0x4, scoped, tag = 'scoped memory for tpu_custom_call.1']
    #allocation4 [shape = 's32[1]{0}', space=sflag, size = 0x4, scoped, tag = 'scoped memory for tpu_custom_call.1']
    #allocation5 [shape = 'u8[65536]{0}', space=vmem, size = 0x10000, scoped, tag = 'input window, operand 10, single buffered']
    #allocation6 [shape = 's32[1]{0}', space=sflag, size = 0x4, scoped, tag = 'scoped memory for tpu_custom_call.1']
    #allocation7 [shape = 'u8[65536]{0}', space=vmem, size = 0x10000, scoped, tag = 'input window, operand 12, single buffered']
    #allocation8 [shape = 'u8[65536]{0}', space=vmem, size = 0x10000, scoped, tag = 'input window, operand 13, single buffered']
    #allocation9 [shape = 's32[1]{0}', space=sflag, size = 0x4, scoped, tag = 'scoped memory for tpu_custom_call.1']
    #allocation10 [shape = 'u8[32768]{0}', space=vmem, size = 0x8000, scoped, tag = 'output window, operand 0, single buffered']
    #allocation11 [shape = 'u8[8192]{0}', space=vmem, size = 0x2000, scoped, tag = 'output window, operand 1, single buffered']
    #allocation12 [shape = 's32[1]{0}', space=sflag, size = 0x4, scoped, tag = 'scoped memory for tpu_custom_call.1']
    #allocation13 [shape = 'u8[8192]{0}', space=vmem, size = 0x2000, scoped, tag = 'output window, operand 2, single buffered']
    %23 = vsyncpa [#allocation3], 0
    %24 = vsyncpa [#allocation6], 0
    %25 = vsyncpa [#allocation9], 0
    %26 = vsyncpa [#allocation4], 0
    %27 = vsyncpa [#allocation12], 0
    // Predicated region
    $region2: #{tpu_custom_call.1} parent=1 // pred_check
      _
    $region3: #{tpu_custom_call.1} parent=1 // pred_check_branch
      %29 = sbr.rel (0) target = $region5
    $region4: #{tpu_custom_call.1} parent=1 // pred_region
      _
    $region5: #{tpu_custom_call.1} parent=1 // pred_fallthru
      _
    // Predicated region
    $region6: #{tpu_custom_call.1} parent=1 // pred_check
      _
    $region7: #{tpu_custom_call.1} parent=1 // pred_check_branch
      %31 = sbr.rel (0) target = $region9
    $region8: #{tpu_custom_call.1} parent=1 // pred_region
      _
    $region9: #{tpu_custom_call.1} parent=1 // pred_fallthru
      _
    // Predicated region
    $region10: #{tpu_custom_call.1} parent=1 // pred_check
      _
    $region11: #{tpu_custom_call.1} parent=1 // pred_check_branch
      %33 = sbr.rel (0) target = $region13
    $region12: #{tpu_custom_call.1} parent=1 // pred_region
      _
    $region13: #{tpu_custom_call.1} parent=1 // pred_fallthru
      _
    // Predicated region
    $region14: #{tpu_custom_call.1} parent=1 // pred_check
      _
    $region15: #{tpu_custom_call.1} parent=1 // pred_check_branch
      %35 = sbr.rel (0) target = $region17
    $region16: #{tpu_custom_call.1} parent=1 // pred_region
      _
    $region17: #{tpu_custom_call.1} parent=1 // pred_fallthru
      _
    // Predicated region
    $region18: #{tpu_custom_call.1} parent=1 // pred_check
      _
    $region19: #{tpu_custom_call.1} parent=1 // pred_check_branch
      %37 = sbr.rel (0) target = $region21
    $region20: #{tpu_custom_call.1} parent=1 // pred_region
      _
    $region21: #{tpu_custom_call.1} parent=1 // pred_fallthru
      _
    // Predicated region
    $region22: #{tpu_custom_call.1} parent=1 // pred_check
      _
    $region23: #{tpu_custom_call.1} parent=1 // pred_check_branch
      %39 = sbr.rel (0) target = $region25
    $region24: #{tpu_custom_call.1} parent=1 // pred_region
      %s41 = ssub.s32 2048, 2048
      %42 = vsyncadd [#allocation3], %s41
      %s43 = sshll.u32 [#allocation2], 4
      %s44 = int_to_ptr.vmem [resolvable:$true] %s43
      %49 = dma.hbm_to_vmem [thread:$0]  %s5, 2048, %s44, [#allocation3], 128, 128, 8
    $region25: #{tpu_custom_call.1} parent=1 // pred_fallthru
      _
    // Predicated region
    $region26: #{tpu_custom_call.1} parent=1 // pred_check
      _
    $region27: #{tpu_custom_call.1} parent=1 // pred_check_branch
      %51 = sbr.rel (0) target = $region29
    $region28: #{tpu_custom_call.1} parent=1 // pred_region
      _
    $region29: #{tpu_custom_call.1} parent=1 // pred_fallthru
      _
    // Predicated region
    $region30: #{tpu_custom_call.1} parent=1 // pred_check
      _
    $region31: #{tpu_custom_call.1} parent=1 // pred_check_branch
      %53 = sbr.rel (0) target = $region33
    $region32: #{tpu_custom_call.1} parent=1 // pred_region
      _
    $region33: #{tpu_custom_call.1} parent=1 // pred_fallthru
      _
    // Predicated region
    $region34: #{tpu_custom_call.1} parent=1 // pred_check
      _
    $region35: #{tpu_custom_call.1} parent=1 // pred_check_branch
      %55 = sbr.rel (0) target = $region37
    $region36: #{tpu_custom_call.1} parent=1 // pred_region
      _
    $region37: #{tpu_custom_call.1} parent=1 // pred_fallthru
      _
    // Predicated region
    $region38: #{tpu_custom_call.1} parent=1 // pred_check
      _
    $region39: #{tpu_custom_call.1} parent=1 // pred_check_branch
      %57 = sbr.rel (0) target = $region41
    $region40: #{tpu_custom_call.1} parent=1 // pred_region
      _
    $region41: #{tpu_custom_call.1} parent=1 // pred_fallthru
      _
    // Predicated region
    $region42: #{tpu_custom_call.1} parent=1 // pred_check
      _
    $region43: #{tpu_custom_call.1} parent=1 // pred_check_branch
      %59 = sbr.rel (0) target = $region45
    $region44: #{tpu_custom_call.1} parent=1 // pred_region
      %s61 = ssub.s32 2048, 2048
      %62 = vsyncadd [#allocation6], %s61
      %s63 = sshll.u32 [#allocation5], 4
      %s64 = int_to_ptr.vmem [resolvable:$true] %s63
      %69 = dma.hbm_to_vmem [thread:$0]  %s10, 2048, %s64, [#allocation6], 128, 128, 8
    $region45: #{tpu_custom_call.1} parent=1 // pred_fallthru
      _
    // Predicated region
    $region46: #{tpu_custom_call.1} parent=1 // pred_check
      _
    $region47: #{tpu_custom_call.1} parent=1 // pred_check_branch
      %71 = sbr.rel (0) target = $region49
    $region48: #{tpu_custom_call.1} parent=1 // pred_region
      _
    $region49: #{tpu_custom_call.1} parent=1 // pred_fallthru
      _
    // Predicated region
    $region50: #{tpu_custom_call.1} parent=1 // pred_check
      _
    $region51: #{tpu_custom_call.1} parent=1 // pred_check_branch
      %73 = sbr.rel (0) target = $region53
    $region52: #{tpu_custom_call.1} parent=1 // pred_region
      %s75 = ssub.s32 2048, 2048
      %76 = vsyncadd [#allocation6], %s75
      %s77 = sshll.u32 [#allocation7], 4
      %s78 = int_to_ptr.vmem [resolvable:$true] %s77
      %83 = dma.hbm_to_vmem [thread:$0]  %s12, 2048, %s78, [#allocation6], 128, 128, 8
    $region53: #{tpu_custom_call.1} parent=1 // pred_fallthru
      _
    // Predicated region
    $region54: #{tpu_custom_call.1} parent=1 // pred_check
      _
    $region55: #{tpu_custom_call.1} parent=1 // pred_check_branch
      %85 = sbr.rel (0) target = $region57
    $region56: #{tpu_custom_call.1} parent=1 // pred_region
      %s87 = ssub.s32 2048, 2048
      %88 = vsyncadd [#allocation9], %s87
      %s89 = sshll.u32 [#allocation8], 4
      %s90 = int_to_ptr.vmem [resolvable:$true] %s89
      %95 = dma.hbm_to_vmem [thread:$0]  %s13, 2048, %s90, [#allocation9], 128, 128, 8
    $region57: #{tpu_custom_call.1} parent=1 // pred_fallthru
      _
    // Predicated region
    $region58: #{tpu_custom_call.1} parent=1 // pred_check
      _
    $region59: #{tpu_custom_call.1} parent=1 // pred_check_branch
      %97 = sbr.rel (0) target = $region61
    $region60: #{tpu_custom_call.1} parent=1 // pred_region
      _
    $region61: #{tpu_custom_call.1} parent=1 // pred_fallthru
      _
    // Predicated region
    $region62: #{tpu_custom_call.1} parent=1 // pred_check
      _
    $region63: #{tpu_custom_call.1} parent=1 // pred_check_branch
      %99 = sbr.rel (0) target = $region65
    $region64: #{tpu_custom_call.1} parent=1 // pred_region
      %100 = dma.done [#allocation3], 2048
    $region65: #{tpu_custom_call.1} parent=1 // pred_fallthru
      _
    // Predicated region
    $region66: #{tpu_custom_call.1} parent=1 // pred_check
      _
    $region67: #{tpu_custom_call.1} parent=1 // pred_check_branch
      %102 = sbr.rel (0) target = $region69
    $region68: #{tpu_custom_call.1} parent=1 // pred_region
      %103 = dma.done [#allocation6], 2048
    $region69: #{tpu_custom_call.1} parent=1 // pred_fallthru
      _
    // Predicated region
    $region70: #{tpu_custom_call.1} parent=1 // pred_check
      _
    $region71: #{tpu_custom_call.1} parent=1 // pred_check_branch
      %105 = sbr.rel (0) target = $region73
    $region72: #{tpu_custom_call.1} parent=1 // pred_region
      %106 = dma.done [#allocation6], 2048
    $region73: #{tpu_custom_call.1} parent=1 // pred_fallthru
      _
    // Predicated region
    $region74: #{tpu_custom_call.1} parent=1 // pred_check
      _
    $region75: #{tpu_custom_call.1} parent=1 // pred_check_branch
      %108 = sbr.rel (0) target = $region77
    $region76: #{tpu_custom_call.1} parent=1 // pred_region
      %109 = dma.done [#allocation9], 2048
    $region77: #{tpu_custom_call.1} parent=1 // pred_fallthru
      _
    %v110 = vld [vmem:[%s0] sm:$0xff]
    %v111 = vld [vmem:[%s0 + $0x8] sm:$0xff]
    %v112 = vld [vmem:[%s0 + $0x10] sm:$0xff]
    %v113 = vld [vmem:[%s0 + $0x18] sm:$0xff]
    %v114 = vld [vmem:[%s0 + $0x20] sm:$0xff]
    %v115 = vld [vmem:[%s0 + $0x28] sm:$0xff]
    %v116 = vld [vmem:[%s0 + $0x30] sm:$0xff]
    %v117 = vld [vmem:[%s0 + $0x38] sm:$0xff]
    %v118 = vlaneseq
    %v119 = vshrl.u32 %v118, 7
    %v120 = vadd.s32 %v119, 8
    %v121 = vadd.s32 %v119, 16
    %v122 = vadd.s32 %v119, 24
    %v123 = vadd.s32 %v119, 32
    %v124 = vadd.s32 %v119, 40
    %v125 = vadd.s32 %v119, 48
    %v126 = vadd.s32 %v119, 56
    %vm127 = vcmp.lt.s32.totalorder %v119, 0
    %v128 = vsub.s32 0, %v119
    %v129 = vsel %vm127, %v128, %v119
    %v130 = vshrl.u32 %v129, 3
    %v131 = vand.u32 %v129, 7
    %v132 = vsub.s32 0, %v131
    %v133 = vsel %vm127, %v132, %v131
    %vm134 = vcmp.lt.s32.totalorder %v120, 0
    %v135 = vsub.s32 0, %v120
    %v136 = vsel %vm134, %v135, %v120
    %v137 = vshrl.u32 %v136, 3
    %v138 = vand.u32 %v136, 7
    %v139 = vsub.s32 0, %v138
    %v140 = vsel %vm134, %v139, %v138
    %vm141 = vcmp.lt.s32.totalorder %v121, 0
    %v142 = vsub.s32 0, %v121
    %v143 = vsel %vm141, %v142, %v121
    %v144 = vshrl.u32 %v143, 3
    %v145 = vand.u32 %v143, 7
    %v146 = vsub.s32 0, %v145
    %v147 = vsel %vm141, %v146, %v145
    %vm148 = vcmp.lt.s32.totalorder %v122, 0
    %v149 = vsub.s32 0, %v122
    %v150 = vsel %vm148, %v149, %v122
    %v151 = vshrl.u32 %v150, 3
    %v152 = vand.u32 %v150, 7
    %v153 = vsub.s32 0, %v152
    %v154 = vsel %vm148, %v153, %v152
    %vm155 = vcmp.lt.s32.totalorder %v123, 0
    %v156 = vsub.s32 0, %v123
    %v157 = vsel %vm155, %v156, %v123
    %v158 = vshrl.u32 %v157, 3
    %v159 = vand.u32 %v157, 7
    %v160 = vsub.s32 0, %v159
    %v161 = vsel %vm155, %v160, %v159
    %vm162 = vcmp.lt.s32.totalorder %v124, 0
    %v163 = vsub.s32 0, %v124
    %v164 = vsel %vm162, %v163, %v124
    %v165 = vshrl.u32 %v164, 3
    %v166 = vand.u32 %v164, 7
    %v167 = vsub.s32 0, %v166
    %v168 = vsel %vm162, %v167, %v166
    %vm169 = vcmp.lt.s32.totalorder %v125, 0
    %v170 = vsub.s32 0, %v125
    %v171 = vsel %vm169, %v170, %v125
    %v172 = vshrl.u32 %v171, 3
    %v173 = vand.u32 %v171, 7
    %v174 = vsub.s32 0, %v173
    %v175 = vsel %vm169, %v174, %v173
    %vm176 = vcmp.lt.s32.totalorder %v126, 0
    %v177 = vsub.s32 0, %v126
    %v178 = vsel %vm176, %v177, %v126
    %v179 = vshrl.u32 %v178, 3
    %v180 = vand.u32 %v178, 7
    %v181 = vsub.s32 0, %v180
    %v182 = vsel %vm176, %v181, %v180
    %vm183 = vcmp.ne.s32.totalorder %v133, 0
    %vm184 = vcmp.ne.s32.totalorder %v140, 0
    %vm185 = vcmp.ne.s32.totalorder %v147, 0
    %vm186 = vcmp.ne.s32.totalorder %v154, 0
    %vm187 = vcmp.ne.s32.totalorder %v161, 0
    %vm188 = vcmp.ne.s32.totalorder %v168, 0
    %vm189 = vcmp.ne.s32.totalorder %v175, 0
    %vm190 = vcmp.ne.s32.totalorder %v182, 0
    %vm191 = vcmp.lt.s32.totalorder %v133, 0
    %vm192 = vcmp.lt.s32.totalorder %v140, 0
    %vm193 = vcmp.lt.s32.totalorder %v147, 0
    %vm194 = vcmp.lt.s32.totalorder %v154, 0
    %vm195 = vcmp.lt.s32.totalorder %v161, 0
    %vm196 = vcmp.lt.s32.totalorder %v168, 0
    %vm197 = vcmp.lt.s32.totalorder %v175, 0
    %vm198 = vcmp.lt.s32.totalorder %v182, 0
    %vm199 = vmand %vm191, %vm183
    %vm200 = vmand %vm192, %vm184
    %vm201 = vmand %vm193, %vm185
    %vm202 = vmand %vm194, %vm186
    %vm203 = vmand %vm195, %vm187
    %vm204 = vmand %vm196, %vm188
    %vm205 = vmand %vm197, %vm189
    %vm206 = vmand %vm198, %vm190
    %v207 = vadd.s32 %v133, 8
    %v208 = vadd.s32 %v140, 8
    %v209 = vadd.s32 %v147, 8
    %v210 = vadd.s32 %v154, 8
    %v211 = vadd.s32 %v161, 8
    %v212 = vadd.s32 %v168, 8
    %v213 = vadd.s32 %v175, 8
    %v214 = vadd.s32 %v182, 8
    %v215 = vsel %vm199, %v207, %v133
    %v216 = vsel %vm200, %v208, %v140
    %v217 = vsel %vm201, %v209, %v147
    %v218 = vsel %vm202, %v210, %v154
    %v219 = vsel %vm203, %v211, %v161
    %v220 = vsel %vm204, %v212, %v168
    %v221 = vsel %vm205, %v213, %v175
    %v222 = vsel %vm206, %v214, %v182
    %vm223 = vcmp.lt.s32.totalorder %v215, 2
    %vm224 = vcmp.lt.s32.totalorder %v216, 2
    %vm225 = vcmp.lt.s32.totalorder %v217, 2
    %vm226 = vcmp.lt.s32.totalorder %v218, 2
    %vm227 = vcmp.lt.s32.totalorder %v219, 2
    %vm228 = vcmp.lt.s32.totalorder %v220, 2
    %vm229 = vcmp.lt.s32.totalorder %v221, 2
    %vm230 = vcmp.lt.s32.totalorder %v222, 2
    %v231 = vsel %vm223, %v110, 0.0
    %v232 = vsel %vm224, %v111, 0.0
    %v233 = vsel %vm225, %v112, 0.0
    %v234 = vsel %vm226, %v113, 0.0
    %v235 = vsel %vm227, %v114, 0.0
    %v236 = vsel %vm228, %v115, 0.0
    %v237 = vsel %vm229, %v116, 0.0
    %v238 = vsel %vm230, %v117, 0.0
    %vm239 = vcmask 31744
    %v240 = vsel %vm239, %v231, 0.0
    %v241 = vsel %vm239, %v232, 0.0
    %v242 = vadd.f32 %v240, %v241
    %v243 = vsel %vm239, %v233, 0.0
    %v244 = vadd.f32 %v242, %v243
    %v245 = vsel %vm239, %v234, 0.0
    %v246 = vadd.f32 %v244, %v245
    %v247 = vsel %vm239, %v235, 0.0
    %v248 = vadd.f32 %v246, %v247
    %v249 = vsel %vm239, %v236, 0.0
    %v250 = vadd.f32 %v248, %v249
    %v251 = vsel %vm239, %v237, 0.0
    %v252 = vadd.f32 %v250, %v251
    %v253 = vsel %vm239, %v238, 0.0
    %v254 = vadd.f32 %v252, %v253
    %v255 = vrot.slane %v254, 4
    %v256 = vadd.f32 %v254, %v255
    %v257 = vrot.slane %v256, 2
    %v258 = vadd.f32 %v256, %v257
    %v259 = vrot.slane %v258, 1
    %v260 = vadd.f32 %v258, %v259
    %v261 = vmul.f32 %v260, 0.0625
    %v262 = vsub.f32 %v110, %v261
    %v263 = vsub.f32 %v111, %v261
    %v264 = vsub.f32 %v112, %v261
    %v265 = vsub.f32 %v113, %v261
    %v266 = vsub.f32 %v114, %v261
    %v267 = vsub.f32 %v115, %v261
    %v268 = vsub.f32 %v116, %v261
    %v269 = vsub.f32 %v117, %v261
    %v270 = vsel %vm223, %v262, 0.0
    %v271 = vsel %vm224, %v263, 0.0
    %v272 = vsel %vm225, %v264, 0.0
    %v273 = vsel %vm226, %v265, 0.0
    %v274 = vsel %vm227, %v266, 0.0
    %v275 = vsel %vm228, %v267, 0.0
    %v276 = vsel %vm229, %v268, 0.0
    %v277 = vsel %vm230, %v269, 0.0
    %v278 = vmul.f32 %v270, %v270
    %v279 = vmul.f32 %v271, %v271
    %v280 = vmul.f32 %v272, %v272
    %v281 = vmul.f32 %v273, %v273
    %v282 = vmul.f32 %v274, %v274
    %v283 = vmul.f32 %v275, %v275
    %v284 = vmul.f32 %v276, %v276
    %v285 = vmul.f32 %v277, %v277
    %v286 = vsel %vm239, %v278, 0.0
    %v287 = vsel %vm239, %v279, 0.0
    %v288 = vadd.f32 %v286, %v287
    %v289 = vsel %vm239, %v280, 0.0
    %v290 = vadd.f32 %v288, %v289
    %v291 = vsel %vm239, %v281, 0.0
    %v292 = vadd.f32 %v290, %v291
    %v293 = vsel %vm239, %v282, 0.0
    %v294 = vadd.f32 %v292, %v293
    %v295 = vsel %vm239, %v283, 0.0
    %v296 = vadd.f32 %v294, %v295
    %v297 = vsel %vm239, %v284, 0.0
    %v298 = vadd.f32 %v296, %v297
    %v299 = vsel %vm239, %v285, 0.0
    %v300 = vadd.f32 %v298, %v299
    %v301 = vrot.slane %v300, 4
    %v302 = vadd.f32 %v300, %v301
    %v303 = vrot.slane %v302, 2
    %v304 = vadd.f32 %v302, %v303
    %v305 = vrot.slane %v304, 1
    %v306 = vadd.f32 %v304, %v305
    %v307 = vmul.f32 %v306, 0.0625
    %v308 = vadd.f32 %v307, 1e-05
    %v309 = vrsqrt.pop %v308
    %v310 = vmul.f32 %v262, %v309
    %v311 = vmul.f32 %v263, %v309
    %v312 = vmul.f32 %v264, %v309
    %v313 = vmul.f32 %v265, %v309
    %v314 = vmul.f32 %v266, %v309
    %v315 = vmul.f32 %v267, %v309
    %v316 = vmul.f32 %v268, %v309
    %v317 = vmul.f32 %v269, %v309
    %v318 = vld [vmem:[%s1] sm:$0x1]
    %v320 = vlaneseq
    %v321 = vshrl.u32 %v320, 7
    %v322 = vsub.s32 0, %v321
    %v323 = vrot.slane %v318, %v322
    %v325 = vmul.f32 %v310, %v323
    %v326 = vmul.f32 %v311, %v323
    %v327 = vmul.f32 %v312, %v323
    %v328 = vmul.f32 %v313, %v323
    %v329 = vmul.f32 %v314, %v323
    %v330 = vmul.f32 %v315, %v323
    %v331 = vmul.f32 %v316, %v323
    %v332 = vmul.f32 %v317, %v323
    %v333 = vld [vmem:[%s2] sm:$0x1]
    %v335 = vlaneseq
    %v336 = vshrl.u32 %v335, 7
    %v337 = vsub.s32 0, %v336
    %v338 = vrot.slane %v333, %v337
    %v340 = vadd.f32 %v325, %v338
    %v341 = vadd.f32 %v326, %v338
    %v342 = vadd.f32 %v327, %v338
    %v343 = vadd.f32 %v328, %v338
    %v344 = vadd.f32 %v329, %v338
    %v345 = vadd.f32 %v330, %v338
    %v346 = vadd.f32 %v331, %v338
    %v347 = vadd.f32 %v332, %v338
    %v348 = vld [vmem:[%s9] sm:$0xf]
    %v349 = vld [vmem:[%s11] sm:$0x1]
    %v351 = vlaneseq
    %v352 = vshrl.u32 %v351, 7
    %v353 = vsub.s32 0, %v352
    %v354 = vrot.slane %v349, %v353
    %v357 = vsel %vm239, %v340, 0
    %v360 = vsel %vm239, %v341, 0
    %v363 = vsel %vm239, %v342, 0
    %v366 = vsel %vm239, %v343, 0
    %v369 = vsel %vm239, %v344, 0
    %v372 = vsel %vm239, %v345, 0
    %v375 = vsel %vm239, %v346, 0
    %v378 = vsel %vm239, %v347, 0
    %vm380 = vcmask 1043456
    %v382 = vsel %vm380, %v348, 0
    %384 = vmatprep.subr.mxu0 0.0
    %385 = vmatpush1.msra.mxu0 %v382
    %386 = vmatprep.subr.mxu0 0.0
    %387 = vmatpush1.msra.mxu0 0.0
    %388 = vmatprep.subr.mxu0 0.0
    %389 = vmatpush1.msra.mxu0 0.0
    %390 = vmatprep.subr.mxu0 0.0
    %391 = vmatpush1.msra.mxu0 0.0
    %392 = vmatprep.subr.mxu0 0.0
    %393 = vmatpush1.msra.mxu0 0.0
    %394 = vmatprep.subr.mxu0 0.0
    %395 = vmatpush1.msra.mxu0 0.0
    %396 = vmatprep.subr.mxu0 0.0
    %397 = vmatpush1.msra.mxu0 0.0
    %398 = vmatprep.subr.mxu0 0.0
    %399 = vmatpush1.msra.mxu0 0.0
    %400 = vmatprep.subr.mxu0 0.0
    %401 = vmatpush1.msra.mxu0 0.0
    %402 = vmatprep.subr.mxu0 0.0
    %403 = vmatpush1.msra.mxu0 0.0
    %404 = vmatprep.subr.mxu0 0.0
    %405 = vmatpush1.msra.mxu0 0.0
    %406 = vmatprep.subr.mxu0 0.0
    %407 = vmatpush1.msra.mxu0 0.0
    %408 = vmatprep.subr.mxu0 0.0
    %409 = vmatpush1.msra.mxu0 0.0
    %410 = vmatprep.subr.mxu0 0.0
    %411 = vmatpush1.msra.mxu0 0.0
    %412 = vmatprep.subr.mxu0 0.0
    %413 = vmatpush1.msra.mxu0 0.0
    %414 = vmatprep.subr.mxu0 0.0
    %415 = vmatpush1.msra.mxu0 0.0
    %416 = vmatprep.subr.mxu0 0.0
    %417 = vmatpush1.msra.mxu0 0.0
    %418 = vmatprep.subr.mxu0 0.0
    %419 = vmatpush1.msra.mxu0 0.0
    %420 = vmatprep.subr.mxu0 0.0
    %421 = vmatpush1.msra.mxu0 0.0
    %422 = vmatprep.subr.mxu0 0.0
    %423 = vmatpush1.msra.mxu0 0.0
    %424 = vmatprep.subr.mxu0 0.0
    %425 = vmatpush1.msra.mxu0 0.0
    %426 = vmatprep.subr.mxu0 0.0
    %427 = vmatpush1.msra.mxu0 0.0
    %428 = vmatprep.subr.mxu0 0.0
    %429 = vmatpush1.msra.mxu0 0.0
    %430 = vmatprep.subr.mxu0 0.0
    %431 = vmatpush1.msra.mxu0 0.0
    %432 = vmatprep.subr.mxu0 0.0
    %433 = vmatpush1.msra.mxu0 0.0
    %434 = vmatprep.subr.mxu0 0.0
    %435 = vmatpush1.msra.mxu0 0.0
    %436 = vmatprep.subr.mxu0 0.0
    %437 = vmatpush1.msra.mxu0 0.0
    %438 = vmatprep.subr.mxu0 0.0
    %439 = vmatpush1.msra.mxu0 0.0
    %440 = vmatprep.subr.mxu0 0.0
    %441 = vmatpush1.msra.mxu0 0.0
    %442 = vmatprep.subr.mxu0 0.0
    %443 = vmatpush1.msra.mxu0 0.0
    %444 = vmatprep.subr.mxu0 0.0
    %445 = vmatpush1.msra.mxu0 0.0
    %446 = vmatprep.subr.mxu0 0.0
    %447 = vmatpush1.msra.mxu0 0.0
    %448 = vmatprep.mubr.f32.mxu0 0.0
    %449 = vmatmul.mubr.f32.gmra.mrb[0].mxu0 %v357
    %v450 = vpop.f32.mrb[0].mxu0
    %v451 = vadd.f32 %v354, %v450
    %v452 = vpop.f32.mrb[0].mxu0
    %453 = vmatprep.mubr.f32.mxu0 0.0
    %454 = vmatmul.mubr.f32.gmra.mrb[0].mxu0 %v360
    %v455 = vpop.f32.mrb[0].mxu0
    %v456 = vadd.f32 %v354, %v455
    %v457 = vpop.f32.mrb[0].mxu0
    %458 = vmatprep.mubr.f32.mxu0 0.0
    %459 = vmatmul.mubr.f32.gmra.mrb[0].mxu0 %v363
    %v460 = vpop.f32.mrb[0].mxu0
    %v461 = vadd.f32 %v354, %v460
    %v462 = vpop.f32.mrb[0].mxu0
    %463 = vmatprep.mubr.f32.mxu0 0.0
    %464 = vmatmul.mubr.f32.gmra.mrb[0].mxu0 %v366
    %v465 = vpop.f32.mrb[0].mxu0
    %v466 = vadd.f32 %v354, %v465
    %v467 = vpop.f32.mrb[0].mxu0
    %468 = vmatprep.mubr.f32.mxu0 0.0
    %469 = vmatmul.mubr.f32.gmra.mrb[0].mxu0 %v369
    %v470 = vpop.f32.mrb[0].mxu0
    %v471 = vadd.f32 %v354, %v470
    %v472 = vpop.f32.mrb[0].mxu0
    %473 = vmatprep.mubr.f32.mxu0 0.0
    %474 = vmatmul.mubr.f32.gmra.mrb[0].mxu0 %v372
    %v475 = vpop.f32.mrb[0].mxu0
    %v476 = vadd.f32 %v354, %v475
    %v477 = vpop.f32.mrb[0].mxu0
    %478 = vmatprep.mubr.f32.mxu0 0.0
    %479 = vmatmul.mubr.f32.gmra.mrb[0].mxu0 %v375
    %v480 = vpop.f32.mrb[0].mxu0
    %v481 = vadd.f32 %v354, %v480
    %v482 = vpop.f32.mrb[0].mxu0
    %483 = vmatprep.mubr.f32.mxu0 0.0
    %484 = vmatmul.mubr.f32.gmra.mrb[0].mxu0 %v378
    %v485 = vpop.f32.mrb[0].mxu0
    %v486 = vadd.f32 %v354, %v485
    %v487 = vpop.f32.mrb[0].mxu0
    %488 = vdwg.mxu0
    %v489 = vld [vmem:[%s14] sm:$0x1]
    %v491 = vlaneseq
    %v492 = vshrl.u32 %v491, 7
    %v493 = vsub.s32 0, %v492
    %v494 = vrot.slane %v489, %v493
    %v496 = vld [vmem:[%s7] sm:$0xff]
    %s497 = scalar_lea.vmem %s7, 8
    %v498 = vld [vmem:[%s497] sm:$0xff]
    %v499 = vld [vmem:[%s8] sm:$0xff]
    %s500 = scalar_lea.vmem %s8, 8
    %v501 = vld [vmem:[%s500] sm:$0xff]
    %v502 = vld [vmem:[#allocation5] sm:$0xff]
    %v503 = vld [vmem:[#allocation5 + $0x8] sm:$0xff]
    %v504 = vld [vmem:[#allocation5 + $0x10] sm:$0xff]
    %v505 = vld [vmem:[#allocation5 + $0x18] sm:$0xff]
    %v506 = vld [vmem:[#allocation5 + $0x20] sm:$0xff]
    %v507 = vld [vmem:[#allocation5 + $0x28] sm:$0xff]
    %v508 = vld [vmem:[#allocation5 + $0x30] sm:$0xff]
    %v509 = vld [vmem:[#allocation5 + $0x38] sm:$0xff]
    %v510 = vld [vmem:[#allocation5 + $0x40] sm:$0xff]
    %v511 = vld [vmem:[#allocation5 + $0x48] sm:$0xff]
    %v512 = vld [vmem:[#allocation5 + $0x50] sm:$0xff]
    %v513 = vld [vmem:[#allocation5 + $0x58] sm:$0xff]
    %v514 = vld [vmem:[#allocation5 + $0x60] sm:$0xff]
    %v515 = vld [vmem:[#allocation5 + $0x68] sm:$0xff]
    %v516 = vld [vmem:[#allocation5 + $0x70] sm:$0xff]
    %v517 = vld [vmem:[#allocation5 + $0x78] sm:$0xff]
    %518 = vmatprep.subr.mxu0 0.0
    %519 = vmatpush1.msra.mxu0 %v502
    %520 = vmatprep.subr.mxu0 0.0
    %521 = vmatpush1.msra.mxu0 %v503
    %522 = vmatprep.subr.mxu0 0.0
    %523 = vmatpush1.msra.mxu0 %v504
    %524 = vmatprep.subr.mxu0 0.0
    %525 = vmatpush1.msra.mxu0 %v505
    %526 = vmatprep.subr.mxu0 0.0
    %527 = vmatpush1.msra.mxu0 %v506
    %528 = vmatprep.subr.mxu0 0.0
    %529 = vmatpush1.msra.mxu0 %v507
    %530 = vmatprep.subr.mxu0 0.0
    %531 = vmatpush1.msra.mxu0 %v508
    %532 = vmatprep.subr.mxu0 0.0
    %533 = vmatpush1.msra.mxu0 %v509
    %534 = vmatprep.subr.mxu0 0.0
    %535 = vmatpush1.msra.mxu0 %v510
    %536 = vmatprep.subr.mxu0 0.0
    %537 = vmatpush1.msra.mxu0 %v511
    %538 = vmatprep.subr.mxu0 0.0
    %539 = vmatpush1.msra.mxu0 %v512
    %540 = vmatprep.subr.mxu0 0.0
    %541 = vmatpush1.msra.mxu0 %v513
    %542 = vmatprep.subr.mxu0 0.0
    %543 = vmatpush1.msra.mxu0 %v514
    %544 = vmatprep.subr.mxu0 0.0
    %545 = vmatpush1.msra.mxu0 %v515
    %546 = vmatprep.subr.mxu0 0.0
    %547 = vmatpush1.msra.mxu0 %v516
    %548 = vmatprep.subr.mxu0 0.0
    %549 = vmatpush1.msra.mxu0 %v517
    %550 = vmatprep.subr.mxu0 0.0
    %551 = vmatpush1.msra.mxu0 0.0
    %552 = vmatprep.subr.mxu0 0.0
    %553 = vmatpush1.msra.mxu0 0.0
    %554 = vmatprep.subr.mxu0 0.0
    %555 = vmatpush1.msra.mxu0 0.0
    %556 = vmatprep.subr.mxu0 0.0
    %557 = vmatpush1.msra.mxu0 0.0
    %558 = vmatprep.subr.mxu0 0.0
    %559 = vmatpush1.msra.mxu0 0.0
    %560 = vmatprep.subr.mxu0 0.0
    %561 = vmatpush1.msra.mxu0 0.0
    %562 = vmatprep.subr.mxu0 0.0
    %563 = vmatpush1.msra.mxu0 0.0
    %564 = vmatprep.subr.mxu0 0.0
    %565 = vmatpush1.msra.mxu0 0.0
    %566 = vmatprep.subr.mxu0 0.0
    %567 = vmatpush1.msra.mxu0 0.0
    %568 = vmatprep.subr.mxu0 0.0
    %569 = vmatpush1.msra.mxu0 0.0
    %570 = vmatprep.subr.mxu0 0.0
    %571 = vmatpush1.msra.mxu0 0.0
    %572 = vmatprep.subr.mxu0 0.0
    %573 = vmatpush1.msra.mxu0 0.0
    %574 = vmatprep.subr.mxu0 0.0
    %575 = vmatpush1.msra.mxu0 0.0
    %576 = vmatprep.subr.mxu0 0.0
    %577 = vmatpush1.msra.mxu0 0.0
    %578 = vmatprep.subr.mxu0 0.0
    %579 = vmatpush1.msra.mxu0 0.0
    %580 = vmatprep.subr.mxu0 0.0
    %581 = vmatpush1.msra.mxu0 0.0
    %582 = vmatprep.mubr.f32.mxu0 0.0
    %583 = vmatmul.mubr.f32.gmra.mrb[0].mxu0 %v496
    %v584 = vpop.f32.mrb[0].mxu0
    %v585 = vadd.f32 0.0, %v584
    %v586 = vpop.f32.mrb[0].mxu0
    %587 = vdwg.mxu0
    %v588 = vadd.f32 %v451, %v585
    %v589 = vxor.u32 %v588, 2147483648
    %v590 = vmul.f32 %v589, 1.442695
    %v591 = vpow.pop %v590
    %v592 = vadd.f32 %v591, 1.0
    %v593 = vrcp.pop %v592
    %v594 = vmul.f32 1.0, %v593
    %v595 = vtanh.pop %v588
    %596 = vrot.lane.b32.xlu0 %v594, 96
    %v597 = vpop.permute.xlu0 %596
    %598 = vrot.lane.b32.xlu0 %v595, 64
    %v599 = vpop.permute.xlu0 %598
    %600 = vrot.lane.b32.xlu0 %v594, 32
    %v601 = vpop.permute.xlu0 %600
    %v602 = vmul.f32 %v597, %v499
    %v603 = vmul.f32 %v594, %v599
    %v604 = vadd.f32 %v602, %v603
    %v605 = vtanh.pop %v604
    %v606 = vmul.f32 %v601, %v605
    %v607 = vld [vmem:[#allocation7] sm:$0xff]
    %v608 = vld [vmem:[#allocation7 + $0x8] sm:$0xff]
    %v609 = vld [vmem:[#allocation7 + $0x10] sm:$0xff]
    %v610 = vld [vmem:[#allocation7 + $0x18] sm:$0xff]
    %v611 = vld [vmem:[#allocation7 + $0x20] sm:$0xff]
    %v612 = vld [vmem:[#allocation7 + $0x28] sm:$0xff]
    %v613 = vld [vmem:[#allocation7 + $0x30] sm:$0xff]
    %v614 = vld [vmem:[#allocation7 + $0x38] sm:$0xff]
    %v615 = vld [vmem:[#allocation7 + $0x40] sm:$0xff]
    %v616 = vld [vmem:[#allocation7 + $0x48] sm:$0xff]
    %v617 = vld [vmem:[#allocation7 + $0x50] sm:$0xff]
    %v618 = vld [vmem:[#allocation7 + $0x58] sm:$0xff]
    %v619 = vld [vmem:[#allocation7 + $0x60] sm:$0xff]
    %v620 = vld [vmem:[#allocation7 + $0x68] sm:$0xff]
    %v621 = vld [vmem:[#allocation7 + $0x70] sm:$0xff]
    %v622 = vld [vmem:[#allocation7 + $0x78] sm:$0xff]
    %v623 = vld [vmem:[#allocation8] sm:$0xff]
    %v624 = vld [vmem:[#allocation8 + $0x8] sm:$0xff]
    %v625 = vld [vmem:[#allocation8 + $0x10] sm:$0xff]
    %v626 = vld [vmem:[#allocation8 + $0x18] sm:$0xff]
    %v627 = vld [vmem:[#allocation8 + $0x20] sm:$0xff]
    %v628 = vld [vmem:[#allocation8 + $0x28] sm:$0xff]
    %v629 = vld [vmem:[#allocation8 + $0x30] sm:$0xff]
    %v630 = vld [vmem:[#allocation8 + $0x38] sm:$0xff]
    %v631 = vld [vmem:[#allocation8 + $0x40] sm:$0xff]
    %v632 = vld [vmem:[#allocation8 + $0x48] sm:$0xff]
    %v633 = vld [vmem:[#allocation8 + $0x50] sm:$0xff]
    %v634 = vld [vmem:[#allocation8 + $0x58] sm:$0xff]
    %v635 = vld [vmem:[#allocation8 + $0x60] sm:$0xff]
    %v636 = vld [vmem:[#allocation8 + $0x68] sm:$0xff]
    %v637 = vld [vmem:[#allocation8 + $0x70] sm:$0xff]
    %v638 = vld [vmem:[#allocation8 + $0x78] sm:$0xff]
    %639 = vmatprep.subr.mxu0 0.0
    %640 = vmatpush1.msra.mxu0 %v623
    %641 = vmatprep.subr.mxu0 0.0
    %642 = vmatpush1.msra.mxu0 %v624
    %643 = vmatprep.subr.mxu0 0.0
    %644 = vmatpush1.msra.mxu0 %v625
    %645 = vmatprep.subr.mxu0 0.0
    %646 = vmatpush1.msra.mxu0 %v626
    %647 = vmatprep.subr.mxu0 0.0
    %648 = vmatpush1.msra.mxu0 %v627
    %649 = vmatprep.subr.mxu0 0.0
    %650 = vmatpush1.msra.mxu0 %v628
    %651 = vmatprep.subr.mxu0 0.0
    %652 = vmatpush1.msra.mxu0 %v629
    %653 = vmatprep.subr.mxu0 0.0
    %654 = vmatpush1.msra.mxu0 %v630
    %655 = vmatprep.subr.mxu0 0.0
    %656 = vmatpush1.msra.mxu0 %v631
    %657 = vmatprep.subr.mxu0 0.0
    %658 = vmatpush1.msra.mxu0 %v632
    %659 = vmatprep.subr.mxu0 0.0
    %660 = vmatpush1.msra.mxu0 %v633
    %661 = vmatprep.subr.mxu0 0.0
    %662 = vmatpush1.msra.mxu0 %v634
    %663 = vmatprep.subr.mxu0 0.0
    %664 = vmatpush1.msra.mxu0 %v635
    %665 = vmatprep.subr.mxu0 0.0
    %666 = vmatpush1.msra.mxu0 %v636
    %667 = vmatprep.subr.mxu0 0.0
    %668 = vmatpush1.msra.mxu0 %v637
    %669 = vmatprep.subr.mxu0 0.0
    %670 = vmatpush1.msra.mxu0 %v638
    %671 = vmatprep.subr.mxu0 0.0
    %672 = vmatpush1.msra.mxu0 0.0
    %673 = vmatprep.subr.mxu0 0.0
    %674 = vmatpush1.msra.mxu0 0.0
    %675 = vmatprep.subr.mxu0 0.0
    %676 = vmatpush1.msra.mxu0 0.0
    %677 = vmatprep.subr.mxu0 0.0
    %678 = vmatpush1.msra.mxu0 0.0
    %679 = vmatprep.subr.mxu0 0.0
    %680 = vmatpush1.msra.mxu0 0.0
    %681 = vmatprep.subr.mxu0 0.0
    %682 = vmatpush1.msra.mxu0 0.0
    %683 = vmatprep.subr.mxu0 0.0
    %684 = vmatpush1.msra.mxu0 0.0
    %685 = vmatprep.subr.mxu0 0.0
    %686 = vmatpush1.msra.mxu0 0.0
    %687 = vmatprep.subr.mxu0 0.0
    %688 = vmatpush1.msra.mxu0 0.0
    %689 = vmatprep.subr.mxu0 0.0
    %690 = vmatpush1.msra.mxu0 0.0
    %691 = vmatprep.subr.mxu0 0.0
    %692 = vmatpush1.msra.mxu0 0.0
    %693 = vmatprep.subr.mxu0 0.0
    %694 = vmatpush1.msra.mxu0 0.0
    %695 = vmatprep.subr.mxu0 0.0
    %696 = vmatpush1.msra.mxu0 0.0
    %697 = vmatprep.subr.mxu0 0.0
    %698 = vmatpush1.msra.mxu0 0.0
    %699 = vmatprep.subr.mxu0 0.0
    %700 = vmatpush1.msra.mxu0 0.0
    %701 = vmatprep.subr.mxu0 0.0
    %702 = vmatpush1.msra.mxu0 0.0
    %703 = vmatprep.mubr.f32.mxu0 0.0
    %704 = vmatmul.mubr.f32.gmra.mrb[0].mxu0 %v498
    %v705 = vpop.f32.mrb[0].mxu0
    %v706 = vadd.f32 0.0, %v705
    %v707 = vpop.f32.mrb[0].mxu0
    %708 = vdwg.mxu0
    %709 = vmatprep.subr.mxu0 0.0
    %710 = vmatpush1.msra.mxu0 %v607
    %711 = vmatprep.subr.mxu0 0.0
    %712 = vmatpush1.msra.mxu0 %v608
    %713 = vmatprep.subr.mxu0 0.0
    %714 = vmatpush1.msra.mxu0 %v609
    %715 = vmatprep.subr.mxu0 0.0
    %716 = vmatpush1.msra.mxu0 %v610
    %717 = vmatprep.subr.mxu0 0.0
    %718 = vmatpush1.msra.mxu0 %v611
    %719 = vmatprep.subr.mxu0 0.0
    %720 = vmatpush1.msra.mxu0 %v612
    %721 = vmatprep.subr.mxu0 0.0
    %722 = vmatpush1.msra.mxu0 %v613
    %723 = vmatprep.subr.mxu0 0.0
    %724 = vmatpush1.msra.mxu0 %v614
    %725 = vmatprep.subr.mxu0 0.0
    %726 = vmatpush1.msra.mxu0 %v615
    %727 = vmatprep.subr.mxu0 0.0
    %728 = vmatpush1.msra.mxu0 %v616
    %729 = vmatprep.subr.mxu0 0.0
    %730 = vmatpush1.msra.mxu0 %v617
    %731 = vmatprep.subr.mxu0 0.0
    %732 = vmatpush1.msra.mxu0 %v618
    %733 = vmatprep.subr.mxu0 0.0
    %734 = vmatpush1.msra.mxu0 %v619
    %735 = vmatprep.subr.mxu0 0.0
    %736 = vmatpush1.msra.mxu0 %v620
    %737 = vmatprep.subr.mxu0 0.0
    %738 = vmatpush1.msra.mxu0 %v621
    %739 = vmatprep.subr.mxu0 0.0
    %740 = vmatpush1.msra.mxu0 %v622
    %741 = vmatprep.subr.mxu0 0.0
    %742 = vmatpush1.msra.mxu0 0.0
    %743 = vmatprep.subr.mxu0 0.0
    %744 = vmatpush1.msra.mxu0 0.0
    %745 = vmatprep.subr.mxu0 0.0
    %746 = vmatpush1.msra.mxu0 0.0
    %747 = vmatprep.subr.mxu0 0.0
    %748 = vmatpush1.msra.mxu0 0.0
    %749 = vmatprep.subr.mxu0 0.0
    %750 = vmatpush1.msra.mxu0 0.0
    %751 = vmatprep.subr.mxu0 0.0
    %752 = vmatpush1.msra.mxu0 0.0
    %753 = vmatprep.subr.mxu0 0.0
    %754 = vmatpush1.msra.mxu0 0.0
    %755 = vmatprep.subr.mxu0 0.0
    %756 = vmatpush1.msra.mxu0 0.0
    %757 = vmatprep.subr.mxu0 0.0
    %758 = vmatpush1.msra.mxu0 0.0
    %759 = vmatprep.subr.mxu0 0.0
    %760 = vmatpush1.msra.mxu0 0.0
    %761 = vmatprep.subr.mxu0 0.0
    %762 = vmatpush1.msra.mxu0 0.0
    %763 = vmatprep.subr.mxu0 0.0
    %764 = vmatpush1.msra.mxu0 0.0
    %765 = vmatprep.subr.mxu0 0.0
    %766 = vmatpush1.msra.mxu0 0.0
    %767 = vmatprep.subr.mxu0 0.0
    %768 = vmatpush1.msra.mxu0 0.0
    %769 = vmatprep.subr.mxu0 0.0
    %770 = vmatpush1.msra.mxu0 0.0
    %771 = vmatprep.subr.mxu0 0.0
    %772 = vmatpush1.msra.mxu0 0.0
    %773 = vmatprep.mubr.f32.mxu0 0.0
    %774 = vmatmul.mubr.f32.gmra.mrb[0].mxu0 %v606
    %v775 = vpop.f32.mrb[0].mxu0
    %v776 = vadd.f32 %v706, %v775
    %v777 = vpop.f32.mrb[0].mxu0
    %778 = vdwg.mxu0
    %v779 = vadd.f32 %v776, %v494
    %v780 = vxor.u32 %v779, 2147483648
    %v781 = vmul.f32 %v780, 1.442695
    %v782 = vpow.pop %v781
    %v783 = vadd.f32 %v782, 1.0
    %v784 = vrcp.pop %v783
    %v785 = vmul.f32 1.0, %v784
    %v786 = vtanh.pop %v779
    %787 = vrot.lane.b32.xlu0 %v785, 96
    %v788 = vpop.permute.xlu0 %787
    %789 = vrot.lane.b32.xlu0 %v786, 64
    %v790 = vpop.permute.xlu0 %789
    %791 = vrot.lane.b32.xlu0 %v785, 32
    %v792 = vpop.permute.xlu0 %791
    %v793 = vmul.f32 %v788, %v501
    %v794 = vmul.f32 %v785, %v790
    %v795 = vadd.f32 %v793, %v794
    %v796 = vtanh.pop %v795
    %v797 = vmul.f32 %v792, %v796
    %798 = vmatprep.subr.mxu0 0.0
    %799 = vmatpush1.msra.mxu0 %v502
    %800 = vmatprep.subr.mxu0 0.0
    %801 = vmatpush1.msra.mxu0 %v503
    %802 = vmatprep.subr.mxu0 0.0
    %803 = vmatpush1.msra.mxu0 %v504
    %804 = vmatprep.subr.mxu0 0.0
    %805 = vmatpush1.msra.mxu0 %v505
    %806 = vmatprep.subr.mxu0 0.0
    %807 = vmatpush1.msra.mxu0 %v506
    %808 = vmatprep.subr.mxu0 0.0
    %809 = vmatpush1.msra.mxu0 %v507
    %810 = vmatprep.subr.mxu0 0.0
    %811 = vmatpush1.msra.mxu0 %v508
    %812 = vmatprep.subr.mxu0 0.0
    %813 = vmatpush1.msra.mxu0 %v509
    %814 = vmatprep.subr.mxu0 0.0
    %815 = vmatpush1.msra.mxu0 %v510
    %816 = vmatprep.subr.mxu0 0.0
    %817 = vmatpush1.msra.mxu0 %v511
    %818 = vmatprep.subr.mxu0 0.0
    %819 = vmatpush1.msra.mxu0 %v512
    %820 = vmatprep.subr.mxu0 0.0
    %821 = vmatpush1.msra.mxu0 %v513
    %822 = vmatprep.subr.mxu0 0.0
    %823 = vmatpush1.msra.mxu0 %v514
    %824 = vmatprep.subr.mxu0 0.0
    %825 = vmatpush1.msra.mxu0 %v515
    %826 = vmatprep.subr.mxu0 0.0
    %827 = vmatpush1.msra.mxu0 %v516
    %828 = vmatprep.subr.mxu0 0.0
    %829 = vmatpush1.msra.mxu0 %v517
    %830 = vmatprep.subr.mxu0 0.0
    %831 = vmatpush1.msra.mxu0 0.0
    %832 = vmatprep.subr.mxu0 0.0
    %833 = vmatpush1.msra.mxu0 0.0
    %834 = vmatprep.subr.mxu0 0.0
    %835 = vmatpush1.msra.mxu0 0.0
    %836 = vmatprep.subr.mxu0 0.0
    %837 = vmatpush1.msra.mxu0 0.0
    %838 = vmatprep.subr.mxu0 0.0
    %839 = vmatpush1.msra.mxu0 0.0
    %840 = vmatprep.subr.mxu0 0.0
    %841 = vmatpush1.msra.mxu0 0.0
    %842 = vmatprep.subr.mxu0 0.0
    %843 = vmatpush1.msra.mxu0 0.0
    %844 = vmatprep.subr.mxu0 0.0
    %845 = vmatpush1.msra.mxu0 0.0
    %846 = vmatprep.subr.mxu0 0.0
    %847 = vmatpush1.msra.mxu0 0.0
    %848 = vmatprep.subr.mxu0 0.0
    %849 = vmatpush1.msra.mxu0 0.0
    %850 = vmatprep.subr.mxu0 0.0
    %851 = vmatpush1.msra.mxu0 0.0
    %852 = vmatprep.subr.mxu0 0.0
    %853 = vmatpush1.msra.mxu0 0.0
    %854 = vmatprep.subr.mxu0 0.0
    %855 = vmatpush1.msra.mxu0 0.0
    %856 = vmatprep.subr.mxu0 0.0
    %857 = vmatpush1.msra.mxu0 0.0
    %858 = vmatprep.subr.mxu0 0.0
    %859 = vmatpush1.msra.mxu0 0.0
    %860 = vmatprep.subr.mxu0 0.0
    %861 = vmatpush1.msra.mxu0 0.0
    %862 = vmatprep.mubr.f32.mxu0 0.0
    %863 = vmatmul.mubr.f32.gmra.mrb[0].mxu0 %v606
    %v864 = vpop.f32.mrb[0].mxu0
    %v865 = vadd.f32 0.0, %v864
    %v866 = vpop.f32.mrb[0].mxu0
    %867 = vdwg.mxu0
    %v868 = vadd.f32 %v456, %v865
    %v869 = vxor.u32 %v868, 2147483648
    %v870 = vmul.f32 %v869, 1.442695
    %v871 = vpow.pop %v870
    %v872 = vadd.f32 %v871, 1.0
    %v873 = vrcp.pop %v872
    %v874 = vmul.f32 1.0, %v873
    %v875 = vtanh.pop %v868
    %876 = vrot.lane.b32.xlu0 %v874, 96
    %v877 = vpop.permute.xlu0 %876
    %878 = vrot.lane.b32.xlu0 %v875, 64
    %v879 = vpop.permute.xlu0 %878
    %880 = vrot.lane.b32.xlu0 %v874, 32
    %v881 = vpop.permute.xlu0 %880
    %v882 = vmul.f32 %v877, %v604
    %v883 = vmul.f32 %v874, %v879
    %v884 = vadd.f32 %v882, %v883
    %v885 = vtanh.pop %v884
    %v886 = vmul.f32 %v881, %v885
    %887 = vmatprep.subr.mxu0 0.0
    %888 = vmatpush1.msra.mxu0 %v623
    %889 = vmatprep.subr.mxu0 0.0
    %890 = vmatpush1.msra.mxu0 %v624
    %891 = vmatprep.subr.mxu0 0.0
    %892 = vmatpush1.msra.mxu0 %v625
    %893 = vmatprep.subr.mxu0 0.0
    %894 = vmatpush1.msra.mxu0 %v626
    %895 = vmatprep.subr.mxu0 0.0
    %896 = vmatpush1.msra.mxu0 %v627
    %897 = vmatprep.subr.mxu0 0.0
    %898 = vmatpush1.msra.mxu0 %v628
    %899 = vmatprep.subr.mxu0 0.0
    %900 = vmatpush1.msra.mxu0 %v629
    %901 = vmatprep.subr.mxu0 0.0
    %902 = vmatpush1.msra.mxu0 %v630
    %903 = vmatprep.subr.mxu0 0.0
    %904 = vmatpush1.msra.mxu0 %v631
    %905 = vmatprep.subr.mxu0 0.0
    %906 = vmatpush1.msra.mxu0 %v632
    %907 = vmatprep.subr.mxu0 0.0
    %908 = vmatpush1.msra.mxu0 %v633
    %909 = vmatprep.subr.mxu0 0.0
    %910 = vmatpush1.msra.mxu0 %v634
    %911 = vmatprep.subr.mxu0 0.0
    %912 = vmatpush1.msra.mxu0 %v635
    %913 = vmatprep.subr.mxu0 0.0
    %914 = vmatpush1.msra.mxu0 %v636
    %915 = vmatprep.subr.mxu0 0.0
    %916 = vmatpush1.msra.mxu0 %v637
    %917 = vmatprep.subr.mxu0 0.0
    %918 = vmatpush1.msra.mxu0 %v638
    %919 = vmatprep.subr.mxu0 0.0
    %920 = vmatpush1.msra.mxu0 0.0
    %921 = vmatprep.subr.mxu0 0.0
    %922 = vmatpush1.msra.mxu0 0.0
    %923 = vmatprep.subr.mxu0 0.0
    %924 = vmatpush1.msra.mxu0 0.0
    %925 = vmatprep.subr.mxu0 0.0
    %926 = vmatpush1.msra.mxu0 0.0
    %927 = vmatprep.subr.mxu0 0.0
    %928 = vmatpush1.msra.mxu0 0.0
    %929 = vmatprep.subr.mxu0 0.0
    %930 = vmatpush1.msra.mxu0 0.0
    %931 = vmatprep.subr.mxu0 0.0
    %932 = vmatpush1.msra.mxu0 0.0
    %933 = vmatprep.subr.mxu0 0.0
    %934 = vmatpush1.msra.mxu0 0.0
    %935 = vmatprep.subr.mxu0 0.0
    %936 = vmatpush1.msra.mxu0 0.0
    %937 = vmatprep.subr.mxu0 0.0
    %938 = vmatpush1.msra.mxu0 0.0
    %939 = vmatprep.subr.mxu0 0.0
    %940 = vmatpush1.msra.mxu0 0.0
    %941 = vmatprep.subr.mxu0 0.0
    %942 = vmatpush1.msra.mxu0 0.0
    %943 = vmatprep.subr.mxu0 0.0
    %944 = vmatpush1.msra.mxu0 0.0
    %945 = vmatprep.subr.mxu0 0.0
    %946 = vmatpush1.msra.mxu0 0.0
    %947 = vmatprep.subr.mxu0 0.0
    %948 = vmatpush1.msra.mxu0 0.0
    %949 = vmatprep.subr.mxu0 0.0
    %950 = vmatpush1.msra.mxu0 0.0
    %951 = vmatprep.mubr.f32.mxu0 0.0
    %952 = vmatmul.mubr.f32.gmra.mrb[0].mxu0 %v797
    %v953 = vpop.f32.mrb[0].mxu0
    %v954 = vadd.f32 0.0, %v953
    %v955 = vpop.f32.mrb[0].mxu0
    %956 = vdwg.mxu0
    %957 = vmatprep.subr.mxu0 0.0
    %958 = vmatpush1.msra.mxu0 %v607
    %959 = vmatprep.subr.mxu0 0.0
    %960 = vmatpush1.msra.mxu0 %v608
    %961 = vmatprep.subr.mxu0 0.0
    %962 = vmatpush1.msra.mxu0 %v609
    %963 = vmatprep.subr.mxu0 0.0
    %964 = vmatpush1.msra.mxu0 %v610
    %965 = vmatprep.subr.mxu0 0.0
    %966 = vmatpush1.msra.mxu0 %v611
    %967 = vmatprep.subr.mxu0 0.0
    %968 = vmatpush1.msra.mxu0 %v612
    %969 = vmatprep.subr.mxu0 0.0
    %970 = vmatpush1.msra.mxu0 %v613
    %971 = vmatprep.subr.mxu0 0.0
    %972 = vmatpush1.msra.mxu0 %v614
    %973 = vmatprep.subr.mxu0 0.0
    %974 = vmatpush1.msra.mxu0 %v615
    %975 = vmatprep.subr.mxu0 0.0
    %976 = vmatpush1.msra.mxu0 %v616
    %977 = vmatprep.subr.mxu0 0.0
    %978 = vmatpush1.msra.mxu0 %v617
    %979 = vmatprep.subr.mxu0 0.0
    %980 = vmatpush1.msra.mxu0 %v618
    %981 = vmatprep.subr.mxu0 0.0
    %982 = vmatpush1.msra.mxu0 %v619
    %983 = vmatprep.subr.mxu0 0.0
    %984 = vmatpush1.msra.mxu0 %v620
    %985 = vmatprep.subr.mxu0 0.0
    %986 = vmatpush1.msra.mxu0 %v621
    %987 = vmatprep.subr.mxu0 0.0
    %988 = vmatpush1.msra.mxu0 %v622
    %989 = vmatprep.subr.mxu0 0.0
    %990 = vmatpush1.msra.mxu0 0.0
    %991 = vmatprep.subr.mxu0 0.0
    %992 = vmatpush1.msra.mxu0 0.0
    %993 = vmatprep.subr.mxu0 0.0
    %994 = vmatpush1.msra.mxu0 0.0
    %995 = vmatprep.subr.mxu0 0.0
    %996 = vmatpush1.msra.mxu0 0.0
    %997 = vmatprep.subr.mxu0 0.0
    %998 = vmatpush1.msra.mxu0 0.0
    %999 = vmatprep.subr.mxu0 0.0
    %1000 = vmatpush1.msra.mxu0 0.0
    %1001 = vmatprep.subr.mxu0 0.0
    %1002 = vmatpush1.msra.mxu0 0.0
    %1003 = vmatprep.subr.mxu0 0.0
    %1004 = vmatpush1.msra.mxu0 0.0
    %1005 = vmatprep.subr.mxu0 0.0
    %1006 = vmatpush1.msra.mxu0 0.0
    %1007 = vmatprep.subr.mxu0 0.0
    %1008 = vmatpush1.msra.mxu0 0.0
    %1009 = vmatprep.subr.mxu0 0.0
    %1010 = vmatpush1.msra.mxu0 0.0
    %1011 = vmatprep.subr.mxu0 0.0
    %1012 = vmatpush1.msra.mxu0 0.0
    %1013 = vmatprep.subr.mxu0 0.0
    %1014 = vmatpush1.msra.mxu0 0.0
    %1015 = vmatprep.subr.mxu0 0.0
    %1016 = vmatpush1.msra.mxu0 0.0
    %1017 = vmatprep.subr.mxu0 0.0
    %1018 = vmatpush1.msra.mxu0 0.0
    %1019 = vmatprep.subr.mxu0 0.0
    %1020 = vmatpush1.msra.mxu0 0.0
    %1021 = vmatprep.mubr.f32.mxu0 0.0
    %1022 = vmatmul.mubr.f32.gmra.mrb[0].mxu0 %v886
    %v1023 = vpop.f32.mrb[0].mxu0
    %v1024 = vadd.f32 %v954, %v1023
    %v1025 = vpop.f32.mrb[0].mxu0
    %1026 = vdwg.mxu0
    %v1027 = vadd.f32 %v1024, %v494
    %v1028 = vxor.u32 %v1027, 2147483648
    %v1029 = vmul.f32 %v1028, 1.442695
    %v1030 = vpow.pop %v1029
    %v1031 = vadd.f32 %v1030, 1.0
    %v1032 = vrcp.pop %v1031
    %v1033 = vmul.f32 1.0, %v1032
    %v1034 = vtanh.pop %v1027
    %1035 = vrot.lane.b32.xlu0 %v1033, 96
    %v1036 = vpop.permute.xlu0 %1035
    %1037 = vrot.lane.b32.xlu0 %v1034, 64
    %v1038 = vpop.permute.xlu0 %1037
    %1039 = vrot.lane.b32.xlu0 %v1033, 32
    %v1040 = vpop.permute.xlu0 %1039
    %v1041 = vmul.f32 %v1036, %v795
    %v1042 = vmul.f32 %v1033, %v1038
    %v1043 = vadd.f32 %v1041, %v1042
    %v1044 = vtanh.pop %v1043
    %v1045 = vmul.f32 %v1040, %v1044
    %1046 = vmatprep.subr.mxu0 0.0
    %1047 = vmatpush1.msra.mxu0 %v502
    %1048 = vmatprep.subr.mxu0 0.0
    %1049 = vmatpush1.msra.mxu0 %v503
    %1050 = vmatprep.subr.mxu0 0.0
    %1051 = vmatpush1.msra.mxu0 %v504
    %1052 = vmatprep.subr.mxu0 0.0
    %1053 = vmatpush1.msra.mxu0 %v505
    %1054 = vmatprep.subr.mxu0 0.0
    %1055 = vmatpush1.msra.mxu0 %v506
    %1056 = vmatprep.subr.mxu0 0.0
    %1057 = vmatpush1.msra.mxu0 %v507
    %1058 = vmatprep.subr.mxu0 0.0
    %1059 = vmatpush1.msra.mxu0 %v508
    %1060 = vmatprep.subr.mxu0 0.0
    %1061 = vmatpush1.msra.mxu0 %v509
    %1062 = vmatprep.subr.mxu0 0.0
    %1063 = vmatpush1.msra.mxu0 %v510
    %1064 = vmatprep.subr.mxu0 0.0
    %1065 = vmatpush1.msra.mxu0 %v511
    %1066 = vmatprep.subr.mxu0 0.0
    %1067 = vmatpush1.msra.mxu0 %v512
    %1068 = vmatprep.subr.mxu0 0.0
    %1069 = vmatpush1.msra.mxu0 %v513
    %1070 = vmatprep.subr.mxu0 0.0
    %1071 = vmatpush1.msra.mxu0 %v514
    %1072 = vmatprep.subr.mxu0 0.0
    %1073 = vmatpush1.msra.mxu0 %v515
    %1074 = vmatprep.subr.mxu0 0.0
    %1075 = vmatpush1.msra.mxu0 %v516
    %1076 = vmatprep.subr.mxu0 0.0
    %1077 = vmatpush1.msra.mxu0 %v517
    %1078 = vmatprep.subr.mxu0 0.0
    %1079 = vmatpush1.msra.mxu0 0.0
    %1080 = vmatprep.subr.mxu0 0.0
    %1081 = vmatpush1.msra.mxu0 0.0
    %1082 = vmatprep.subr.mxu0 0.0
    %1083 = vmatpush1.msra.mxu0 0.0
    %1084 = vmatprep.subr.mxu0 0.0
    %1085 = vmatpush1.msra.mxu0 0.0
    %1086 = vmatprep.subr.mxu0 0.0
    %1087 = vmatpush1.msra.mxu0 0.0
    %1088 = vmatprep.subr.mxu0 0.0
    %1089 = vmatpush1.msra.mxu0 0.0
    %1090 = vmatprep.subr.mxu0 0.0
    %1091 = vmatpush1.msra.mxu0 0.0
    %1092 = vmatprep.subr.mxu0 0.0
    %1093 = vmatpush1.msra.mxu0 0.0
    %1094 = vmatprep.subr.mxu0 0.0
    %1095 = vmatpush1.msra.mxu0 0.0
    %1096 = vmatprep.subr.mxu0 0.0
    %1097 = vmatpush1.msra.mxu0 0.0
    %1098 = vmatprep.subr.mxu0 0.0
    %1099 = vmatpush1.msra.mxu0 0.0
    %1100 = vmatprep.subr.mxu0 0.0
    %1101 = vmatpush1.msra.mxu0 0.0
    %1102 = vmatprep.subr.mxu0 0.0
    %1103 = vmatpush1.msra.mxu0 0.0
    %1104 = vmatprep.subr.mxu0 0.0
    %1105 = vmatpush1.msra.mxu0 0.0
    %1106 = vmatprep.subr.mxu0 0.0
    %1107 = vmatpush1.msra.mxu0 0.0
    %1108 = vmatprep.subr.mxu0 0.0
    %1109 = vmatpush1.msra.mxu0 0.0
    %1110 = vmatprep.mubr.f32.mxu0 0.0
    %1111 = vmatmul.mubr.f32.gmra.mrb[0].mxu0 %v886
    %v1112 = vpop.f32.mrb[0].mxu0
    %v1113 = vadd.f32 0.0, %v1112
    %v1114 = vpop.f32.mrb[0].mxu0
    %1115 = vdwg.mxu0
    %v1116 = vadd.f32 %v461, %v1113
    %v1117 = vxor.u32 %v1116, 2147483648
    %v1118 = vmul.f32 %v1117, 1.442695
    %v1119 = vpow.pop %v1118
    %v1120 = vadd.f32 %v1119, 1.0
    %v1121 = vrcp.pop %v1120
    %v1122 = vmul.f32 1.0, %v1121
    %v1123 = vtanh.pop %v1116
    %1124 = vrot.lane.b32.xlu0 %v1122, 96
    %v1125 = vpop.permute.xlu0 %1124
    %1126 = vrot.lane.b32.xlu0 %v1123, 64
    %v1127 = vpop.permute.xlu0 %1126
    %1128 = vrot.lane.b32.xlu0 %v1122, 32
    %v1129 = vpop.permute.xlu0 %1128
    %v1130 = vmul.f32 %v1125, %v884
    %v1131 = vmul.f32 %v1122, %v1127
    %v1132 = vadd.f32 %v1130, %v1131
    %v1133 = vtanh.pop %v1132
    %v1134 = vmul.f32 %v1129, %v1133
    %1135 = vmatprep.subr.mxu0 0.0
    %1136 = vmatpush1.msra.mxu0 %v623
    %1137 = vmatprep.subr.mxu0 0.0
    %1138 = vmatpush1.msra.mxu0 %v624
    %1139 = vmatprep.subr.mxu0 0.0
    %1140 = vmatpush1.msra.mxu0 %v625
    %1141 = vmatprep.subr.mxu0 0.0
    %1142 = vmatpush1.msra.mxu0 %v626
    %1143 = vmatprep.subr.mxu0 0.0
    %1144 = vmatpush1.msra.mxu0 %v627
    %1145 = vmatprep.subr.mxu0 0.0
    %1146 = vmatpush1.msra.mxu0 %v628
    %1147 = vmatprep.subr.mxu0 0.0
    %1148 = vmatpush1.msra.mxu0 %v629
    %1149 = vmatprep.subr.mxu0 0.0
    %1150 = vmatpush1.msra.mxu0 %v630
    %1151 = vmatprep.subr.mxu0 0.0
    %1152 = vmatpush1.msra.mxu0 %v631
    %1153 = vmatprep.subr.mxu0 0.0
    %1154 = vmatpush1.msra.mxu0 %v632
    %1155 = vmatprep.subr.mxu0 0.0
    %1156 = vmatpush1.msra.mxu0 %v633
    %1157 = vmatprep.subr.mxu0 0.0
    %1158 = vmatpush1.msra.mxu0 %v634
    %1159 = vmatprep.subr.mxu0 0.0
    %1160 = vmatpush1.msra.mxu0 %v635
    %1161 = vmatprep.subr.mxu0 0.0
    %1162 = vmatpush1.msra.mxu0 %v636
    %1163 = vmatprep.subr.mxu0 0.0
    %1164 = vmatpush1.msra.mxu0 %v637
    %1165 = vmatprep.subr.mxu0 0.0
    %1166 = vmatpush1.msra.mxu0 %v638
    %1167 = vmatprep.subr.mxu0 0.0
    %1168 = vmatpush1.msra.mxu0 0.0
    %1169 = vmatprep.subr.mxu0 0.0
    %1170 = vmatpush1.msra.mxu0 0.0
    %1171 = vmatprep.subr.mxu0 0.0
    %1172 = vmatpush1.msra.mxu0 0.0
    %1173 = vmatprep.subr.mxu0 0.0
    %1174 = vmatpush1.msra.mxu0 0.0
    %1175 = vmatprep.subr.mxu0 0.0
    %1176 = vmatpush1.msra.mxu0 0.0
    %1177 = vmatprep.subr.mxu0 0.0
    %1178 = vmatpush1.msra.mxu0 0.0
    %1179 = vmatprep.subr.mxu0 0.0
    %1180 = vmatpush1.msra.mxu0 0.0
    %1181 = vmatprep.subr.mxu0 0.0
    %1182 = vmatpush1.msra.mxu0 0.0
    %1183 = vmatprep.subr.mxu0 0.0
    %1184 = vmatpush1.msra.mxu0 0.0
    %1185 = vmatprep.subr.mxu0 0.0
    %1186 = vmatpush1.msra.mxu0 0.0
    %1187 = vmatprep.subr.mxu0 0.0
    %1188 = vmatpush1.msra.mxu0 0.0
    %1189 = vmatprep.subr.mxu0 0.0
    %1190 = vmatpush1.msra.mxu0 0.0
    %1191 = vmatprep.subr.mxu0 0.0
    %1192 = vmatpush1.msra.mxu0 0.0
    %1193 = vmatprep.subr.mxu0 0.0
    %1194 = vmatpush1.msra.mxu0 0.0
    %1195 = vmatprep.subr.mxu0 0.0
    %1196 = vmatpush1.msra.mxu0 0.0
    %1197 = vmatprep.subr.mxu0 0.0
    %1198 = vmatpush1.msra.mxu0 0.0
    %1199 = vmatprep.mubr.f32.mxu0 0.0
    %1200 = vmatmul.mubr.f32.gmra.mrb[0].mxu0 %v1045
    %v1201 = vpop.f32.mrb[0].mxu0
    %v1202 = vadd.f32 0.0, %v1201
    %v1203 = vpop.f32.mrb[0].mxu0
    %1204 = vdwg.mxu0
    %1205 = vmatprep.subr.mxu0 0.0
    %1206 = vmatpush1.msra.mxu0 %v607
    %1207 = vmatprep.subr.mxu0 0.0
    %1208 = vmatpush1.msra.mxu0 %v608
    %1209 = vmatprep.subr.mxu0 0.0
    %1210 = vmatpush1.msra.mxu0 %v609
    %1211 = vmatprep.subr.mxu0 0.0
    %1212 = vmatpush1.msra.mxu0 %v610
    %1213 = vmatprep.subr.mxu0 0.0
    %1214 = vmatpush1.msra.mxu0 %v611
    %1215 = vmatprep.subr.mxu0 0.0
    %1216 = vmatpush1.msra.mxu0 %v612
    %1217 = vmatprep.subr.mxu0 0.0
    %1218 = vmatpush1.msra.mxu0 %v613
    %1219 = vmatprep.subr.mxu0 0.0
    %1220 = vmatpush1.msra.mxu0 %v614
    %1221 = vmatprep.subr.mxu0 0.0
    %1222 = vmatpush1.msra.mxu0 %v615
    %1223 = vmatprep.subr.mxu0 0.0
    %1224 = vmatpush1.msra.mxu0 %v616
    %1225 = vmatprep.subr.mxu0 0.0
    %1226 = vmatpush1.msra.mxu0 %v617
    %1227 = vmatprep.subr.mxu0 0.0
    %1228 = vmatpush1.msra.mxu0 %v618
    %1229 = vmatprep.subr.mxu0 0.0
    %1230 = vmatpush1.msra.mxu0 %v619
    %1231 = vmatprep.subr.mxu0 0.0
    %1232 = vmatpush1.msra.mxu0 %v620
    %1233 = vmatprep.subr.mxu0 0.0
    %1234 = vmatpush1.msra.mxu0 %v621
    %1235 = vmatprep.subr.mxu0 0.0
    %1236 = vmatpush1.msra.mxu0 %v622
    %1237 = vmatprep.subr.mxu0 0.0
    %1238 = vmatpush1.msra.mxu0 0.0
    %1239 = vmatprep.subr.mxu0 0.0
    %1240 = vmatpush1.msra.mxu0 0.0
    %1241 = vmatprep.subr.mxu0 0.0
    %1242 = vmatpush1.msra.mxu0 0.0
    %1243 = vmatprep.subr.mxu0 0.0
    %1244 = vmatpush1.msra.mxu0 0.0
    %1245 = vmatprep.subr.mxu0 0.0
    %1246 = vmatpush1.msra.mxu0 0.0
    %1247 = vmatprep.subr.mxu0 0.0
    %1248 = vmatpush1.msra.mxu0 0.0
    %1249 = vmatprep.subr.mxu0 0.0
    %1250 = vmatpush1.msra.mxu0 0.0
    %1251 = vmatprep.subr.mxu0 0.0
    %1252 = vmatpush1.msra.mxu0 0.0
    %1253 = vmatprep.subr.mxu0 0.0
    %1254 = vmatpush1.msra.mxu0 0.0
    %1255 = vmatprep.subr.mxu0 0.0
    %1256 = vmatpush1.msra.mxu0 0.0
    %1257 = vmatprep.subr.mxu0 0.0
    %1258 = vmatpush1.msra.mxu0 0.0
    %1259 = vmatprep.subr.mxu0 0.0
    %1260 = vmatpush1.msra.mxu0 0.0
    %1261 = vmatprep.subr.mxu0 0.0
    %1262 = vmatpush1.msra.mxu0 0.0
    %1263 = vmatprep.subr.mxu0 0.0
    %1264 = vmatpush1.msra.mxu0 0.0
    %1265 = vmatprep.subr.mxu0 0.0
    %1266 = vmatpush1.msra.mxu0 0.0
    %1267 = vmatprep.subr.mxu0 0.0
    %1268 = vmatpush1.msra.mxu0 0.0
    %1269 = vmatprep.mubr.f32.mxu0 0.0
    %1270 = vmatmul.mubr.f32.gmra.mrb[0].mxu0 %v1134
    %v1271 = vpop.f32.mrb[0].mxu0
    %v1272 = vadd.f32 %v1202, %v1271
    %v1273 = vpop.f32.mrb[0].mxu0
    %1274 = vdwg.mxu0
    %v1275 = vadd.f32 %v1272, %v494
    %v1276 = vxor.u32 %v1275, 2147483648
    %v1277 = vmul.f32 %v1276, 1.442695
    %v1278 = vpow.pop %v1277
    %v1279 = vadd.f32 %v1278, 1.0
    %v1280 = vrcp.pop %v1279
    %v1281 = vmul.f32 1.0, %v1280
    %v1282 = vtanh.pop %v1275
    %1283 = vrot.lane.b32.xlu0 %v1281, 96
    %v1284 = vpop.permute.xlu0 %1283
    %1285 = vrot.lane.b32.xlu0 %v1282, 64
    %v1286 = vpop.permute.xlu0 %1285
    %1287 = vrot.lane.b32.xlu0 %v1281, 32
    %v1288 = vpop.permute.xlu0 %1287
    %v1289 = vmul.f32 %v1284, %v1043
    %v1290 = vmul.f32 %v1281, %v1286
    %v1291 = vadd.f32 %v1289, %v1290
    %v1292 = vtanh.pop %v1291
    %v1293 = vmul.f32 %v1288, %v1292
    %1294 = vmatprep.subr.mxu0 0.0
    %1295 = vmatpush1.msra.mxu0 %v502
    %1296 = vmatprep.subr.mxu0 0.0
    %1297 = vmatpush1.msra.mxu0 %v503
    %1298 = vmatprep.subr.mxu0 0.0
    %1299 = vmatpush1.msra.mxu0 %v504
    %1300 = vmatprep.subr.mxu0 0.0
    %1301 = vmatpush1.msra.mxu0 %v505
    %1302 = vmatprep.subr.mxu0 0.0
    %1303 = vmatpush1.msra.mxu0 %v506
    %1304 = vmatprep.subr.mxu0 0.0
    %1305 = vmatpush1.msra.mxu0 %v507
    %1306 = vmatprep.subr.mxu0 0.0
    %1307 = vmatpush1.msra.mxu0 %v508
    %1308 = vmatprep.subr.mxu0 0.0
    %1309 = vmatpush1.msra.mxu0 %v509
    %1310 = vmatprep.subr.mxu0 0.0
    %1311 = vmatpush1.msra.mxu0 %v510
    %1312 = vmatprep.subr.mxu0 0.0
    %1313 = vmatpush1.msra.mxu0 %v511
    %1314 = vmatprep.subr.mxu0 0.0
    %1315 = vmatpush1.msra.mxu0 %v512
    %1316 = vmatprep.subr.mxu0 0.0
    %1317 = vmatpush1.msra.mxu0 %v513
    %1318 = vmatprep.subr.mxu0 0.0
    %1319 = vmatpush1.msra.mxu0 %v514
    %1320 = vmatprep.subr.mxu0 0.0
    %1321 = vmatpush1.msra.mxu0 %v515
    %1322 = vmatprep.subr.mxu0 0.0
    %1323 = vmatpush1.msra.mxu0 %v516
    %1324 = vmatprep.subr.mxu0 0.0
    %1325 = vmatpush1.msra.mxu0 %v517
    %1326 = vmatprep.subr.mxu0 0.0
    %1327 = vmatpush1.msra.mxu0 0.0
    %1328 = vmatprep.subr.mxu0 0.0
    %1329 = vmatpush1.msra.mxu0 0.0
    %1330 = vmatprep.subr.mxu0 0.0
    %1331 = vmatpush1.msra.mxu0 0.0
    %1332 = vmatprep.subr.mxu0 0.0
    %1333 = vmatpush1.msra.mxu0 0.0
    %1334 = vmatprep.subr.mxu0 0.0
    %1335 = vmatpush1.msra.mxu0 0.0
    %1336 = vmatprep.subr.mxu0 0.0
    %1337 = vmatpush1.msra.mxu0 0.0
    %1338 = vmatprep.subr.mxu0 0.0
    %1339 = vmatpush1.msra.mxu0 0.0
    %1340 = vmatprep.subr.mxu0 0.0
    %1341 = vmatpush1.msra.mxu0 0.0
    %1342 = vmatprep.subr.mxu0 0.0
    %1343 = vmatpush1.msra.mxu0 0.0
    %1344 = vmatprep.subr.mxu0 0.0
    %1345 = vmatpush1.msra.mxu0 0.0
    %1346 = vmatprep.subr.mxu0 0.0
    %1347 = vmatpush1.msra.mxu0 0.0
    %1348 = vmatprep.subr.mxu0 0.0
    %1349 = vmatpush1.msra.mxu0 0.0
    %1350 = vmatprep.subr.mxu0 0.0
    %1351 = vmatpush1.msra.mxu0 0.0
    %1352 = vmatprep.subr.mxu0 0.0
    %1353 = vmatpush1.msra.mxu0 0.0
    %1354 = vmatprep.subr.mxu0 0.0
    %1355 = vmatpush1.msra.mxu0 0.0
    %1356 = vmatprep.subr.mxu0 0.0
    %1357 = vmatpush1.msra.mxu0 0.0
    %1358 = vmatprep.mubr.f32.mxu0 0.0
    %1359 = vmatmul.mubr.f32.gmra.mrb[0].mxu0 %v1134
    %v1360 = vpop.f32.mrb[0].mxu0
    %v1361 = vadd.f32 0.0, %v1360
    %v1362 = vpop.f32.mrb[0].mxu0
    %1363 = vdwg.mxu0
    %v1364 = vadd.f32 %v466, %v1361
    %v1365 = vxor.u32 %v1364, 2147483648
    %v1366 = vmul.f32 %v1365, 1.442695
    %v1367 = vpow.pop %v1366
    %v1368 = vadd.f32 %v1367, 1.0
    %v1369 = vrcp.pop %v1368
    %v1370 = vmul.f32 1.0, %v1369
    %v1371 = vtanh.pop %v1364
    %1372 = vrot.lane.b32.xlu0 %v1370, 96
    %v1373 = vpop.permute.xlu0 %1372
    %1374 = vrot.lane.b32.xlu0 %v1371, 64
    %v1375 = vpop.permute.xlu0 %1374
    %1376 = vrot.lane.b32.xlu0 %v1370, 32
    %v1377 = vpop.permute.xlu0 %1376
    %v1378 = vmul.f32 %v1373, %v1132
    %v1379 = vmul.f32 %v1370, %v1375
    %v1380 = vadd.f32 %v1378, %v1379
    %v1381 = vtanh.pop %v1380
    %v1382 = vmul.f32 %v1377, %v1381
    %1383 = vmatprep.subr.mxu0 0.0
    %1384 = vmatpush1.msra.mxu0 %v623
    %1385 = vmatprep.subr.mxu0 0.0
    %1386 = vmatpush1.msra.mxu0 %v624
    %1387 = vmatprep.subr.mxu0 0.0
    %1388 = vmatpush1.msra.mxu0 %v625
    %1389 = vmatprep.subr.mxu0 0.0
    %1390 = vmatpush1.msra.mxu0 %v626
    %1391 = vmatprep.subr.mxu0 0.0
    %1392 = vmatpush1.msra.mxu0 %v627
    %1393 = vmatprep.subr.mxu0 0.0
    %1394 = vmatpush1.msra.mxu0 %v628
    %1395 = vmatprep.subr.mxu0 0.0
    %1396 = vmatpush1.msra.mxu0 %v629
    %1397 = vmatprep.subr.mxu0 0.0
    %1398 = vmatpush1.msra.mxu0 %v630
    %1399 = vmatprep.subr.mxu0 0.0
    %1400 = vmatpush1.msra.mxu0 %v631
    %1401 = vmatprep.subr.mxu0 0.0
    %1402 = vmatpush1.msra.mxu0 %v632
    %1403 = vmatprep.subr.mxu0 0.0
    %1404 = vmatpush1.msra.mxu0 %v633
    %1405 = vmatprep.subr.mxu0 0.0
    %1406 = vmatpush1.msra.mxu0 %v634
    %1407 = vmatprep.subr.mxu0 0.0
    %1408 = vmatpush1.msra.mxu0 %v635
    %1409 = vmatprep.subr.mxu0 0.0
    %1410 = vmatpush1.msra.mxu0 %v636
    %1411 = vmatprep.subr.mxu0 0.0
    %1412 = vmatpush1.msra.mxu0 %v637
    %1413 = vmatprep.subr.mxu0 0.0
    %1414 = vmatpush1.msra.mxu0 %v638
    %1415 = vmatprep.subr.mxu0 0.0
    %1416 = vmatpush1.msra.mxu0 0.0
    %1417 = vmatprep.subr.mxu0 0.0
    %1418 = vmatpush1.msra.mxu0 0.0
    %1419 = vmatprep.subr.mxu0 0.0
    %1420 = vmatpush1.msra.mxu0 0.0
    %1421 = vmatprep.subr.mxu0 0.0
    %1422 = vmatpush1.msra.mxu0 0.0
    %1423 = vmatprep.subr.mxu0 0.0
    %1424 = vmatpush1.msra.mxu0 0.0
    %1425 = vmatprep.subr.mxu0 0.0
    %1426 = vmatpush1.msra.mxu0 0.0
    %1427 = vmatprep.subr.mxu0 0.0
    %1428 = vmatpush1.msra.mxu0 0.0
    %1429 = vmatprep.subr.mxu0 0.0
    %1430 = vmatpush1.msra.mxu0 0.0
    %1431 = vmatprep.subr.mxu0 0.0
    %1432 = vmatpush1.msra.mxu0 0.0
    %1433 = vmatprep.subr.mxu0 0.0
    %1434 = vmatpush1.msra.mxu0 0.0
    %1435 = vmatprep.subr.mxu0 0.0
    %1436 = vmatpush1.msra.mxu0 0.0
    %1437 = vmatprep.subr.mxu0 0.0
    %1438 = vmatpush1.msra.mxu0 0.0
    %1439 = vmatprep.subr.mxu0 0.0
    %1440 = vmatpush1.msra.mxu0 0.0
    %1441 = vmatprep.subr.mxu0 0.0
    %1442 = vmatpush1.msra.mxu0 0.0
    %1443 = vmatprep.subr.mxu0 0.0
    %1444 = vmatpush1.msra.mxu0 0.0
    %1445 = vmatprep.subr.mxu0 0.0
    %1446 = vmatpush1.msra.mxu0 0.0
    %1447 = vmatprep.mubr.f32.mxu0 0.0
    %1448 = vmatmul.mubr.f32.gmra.mrb[0].mxu0 %v1293
    %v1449 = vpop.f32.mrb[0].mxu0
    %v1450 = vadd.f32 0.0, %v1449
    %v1451 = vpop.f32.mrb[0].mxu0
    %1452 = vdwg.mxu0
    %1453 = vmatprep.subr.mxu0 0.0
    %1454 = vmatpush1.msra.mxu0 %v607
    %1455 = vmatprep.subr.mxu0 0.0
    %1456 = vmatpush1.msra.mxu0 %v608
    %1457 = vmatprep.subr.mxu0 0.0
    %1458 = vmatpush1.msra.mxu0 %v609
    %1459 = vmatprep.subr.mxu0 0.0
    %1460 = vmatpush1.msra.mxu0 %v610
    %1461 = vmatprep.subr.mxu0 0.0
    %1462 = vmatpush1.msra.mxu0 %v611
    %1463 = vmatprep.subr.mxu0 0.0
    %1464 = vmatpush1.msra.mxu0 %v612
    %1465 = vmatprep.subr.mxu0 0.0
    %1466 = vmatpush1.msra.mxu0 %v613
    %1467 = vmatprep.subr.mxu0 0.0
    %1468 = vmatpush1.msra.mxu0 %v614
    %1469 = vmatprep.subr.mxu0 0.0
    %1470 = vmatpush1.msra.mxu0 %v615
    %1471 = vmatprep.subr.mxu0 0.0
    %1472 = vmatpush1.msra.mxu0 %v616
    %1473 = vmatprep.subr.mxu0 0.0
    %1474 = vmatpush1.msra.mxu0 %v617
    %1475 = vmatprep.subr.mxu0 0.0
    %1476 = vmatpush1.msra.mxu0 %v618
    %1477 = vmatprep.subr.mxu0 0.0
    %1478 = vmatpush1.msra.mxu0 %v619
    %1479 = vmatprep.subr.mxu0 0.0
    %1480 = vmatpush1.msra.mxu0 %v620
    %1481 = vmatprep.subr.mxu0 0.0
    %1482 = vmatpush1.msra.mxu0 %v621
    %1483 = vmatprep.subr.mxu0 0.0
    %1484 = vmatpush1.msra.mxu0 %v622
    %1485 = vmatprep.subr.mxu0 0.0
    %1486 = vmatpush1.msra.mxu0 0.0
    %1487 = vmatprep.subr.mxu0 0.0
    %1488 = vmatpush1.msra.mxu0 0.0
    %1489 = vmatprep.subr.mxu0 0.0
    %1490 = vmatpush1.msra.mxu0 0.0
    %1491 = vmatprep.subr.mxu0 0.0
    %1492 = vmatpush1.msra.mxu0 0.0
    %1493 = vmatprep.subr.mxu0 0.0
    %1494 = vmatpush1.msra.mxu0 0.0
    %1495 = vmatprep.subr.mxu0 0.0
    %1496 = vmatpush1.msra.mxu0 0.0
    %1497 = vmatprep.subr.mxu0 0.0
    %1498 = vmatpush1.msra.mxu0 0.0
    %1499 = vmatprep.subr.mxu0 0.0
    %1500 = vmatpush1.msra.mxu0 0.0
    %1501 = vmatprep.subr.mxu0 0.0
    %1502 = vmatpush1.msra.mxu0 0.0
    %1503 = vmatprep.subr.mxu0 0.0
    %1504 = vmatpush1.msra.mxu0 0.0
    %1505 = vmatprep.subr.mxu0 0.0
    %1506 = vmatpush1.msra.mxu0 0.0
    %1507 = vmatprep.subr.mxu0 0.0
    %1508 = vmatpush1.msra.mxu0 0.0
    %1509 = vmatprep.subr.mxu0 0.0
    %1510 = vmatpush1.msra.mxu0 0.0
    %1511 = vmatprep.subr.mxu0 0.0
    %1512 = vmatpush1.msra.mxu0 0.0
    %1513 = vmatprep.subr.mxu0 0.0
    %1514 = vmatpush1.msra.mxu0 0.0
    %1515 = vmatprep.subr.mxu0 0.0
    %1516 = vmatpush1.msra.mxu0 0.0
    %1517 = vmatprep.mubr.f32.mxu0 0.0
    %1518 = vmatmul.mubr.f32.gmra.mrb[0].mxu0 %v1382
    %v1519 = vpop.f32.mrb[0].mxu0
    %v1520 = vadd.f32 %v1450, %v1519
    %v1521 = vpop.f32.mrb[0].mxu0
    %1522 = vdwg.mxu0
    %v1523 = vadd.f32 %v1520, %v494
    %v1524 = vxor.u32 %v1523, 2147483648
    %v1525 = vmul.f32 %v1524, 1.442695
    %v1526 = vpow.pop %v1525
    %v1527 = vadd.f32 %v1526, 1.0
    %v1528 = vrcp.pop %v1527
    %v1529 = vmul.f32 1.0, %v1528
    %v1530 = vtanh.pop %v1523
    %1531 = vrot.lane.b32.xlu0 %v1529, 96
    %v1532 = vpop.permute.xlu0 %1531
    %1533 = vrot.lane.b32.xlu0 %v1530, 64
    %v1534 = vpop.permute.xlu0 %1533
    %1535 = vrot.lane.b32.xlu0 %v1529, 32
    %v1536 = vpop.permute.xlu0 %1535
    %v1537 = vmul.f32 %v1532, %v1291
    %v1538 = vmul.f32 %v1529, %v1534
    %v1539 = vadd.f32 %v1537, %v1538
    %v1540 = vtanh.pop %v1539
    %v1541 = vmul.f32 %v1536, %v1540
    %1542 = vmatprep.subr.mxu0 0.0
    %1543 = vmatpush1.msra.mxu0 %v502
    %1544 = vmatprep.subr.mxu0 0.0
    %1545 = vmatpush1.msra.mxu0 %v503
    %1546 = vmatprep.subr.mxu0 0.0
    %1547 = vmatpush1.msra.mxu0 %v504
    %1548 = vmatprep.subr.mxu0 0.0
    %1549 = vmatpush1.msra.mxu0 %v505
    %1550 = vmatprep.subr.mxu0 0.0
    %1551 = vmatpush1.msra.mxu0 %v506
    %1552 = vmatprep.subr.mxu0 0.0
    %1553 = vmatpush1.msra.mxu0 %v507
    %1554 = vmatprep.subr.mxu0 0.0
    %1555 = vmatpush1.msra.mxu0 %v508
    %1556 = vmatprep.subr.mxu0 0.0
    %1557 = vmatpush1.msra.mxu0 %v509
    %1558 = vmatprep.subr.mxu0 0.0
    %1559 = vmatpush1.msra.mxu0 %v510
    %1560 = vmatprep.subr.mxu0 0.0
    %1561 = vmatpush1.msra.mxu0 %v511
    %1562 = vmatprep.subr.mxu0 0.0
    %1563 = vmatpush1.msra.mxu0 %v512
    %1564 = vmatprep.subr.mxu0 0.0
    %1565 = vmatpush1.msra.mxu0 %v513
    %1566 = vmatprep.subr.mxu0 0.0
    %1567 = vmatpush1.msra.mxu0 %v514
    %1568 = vmatprep.subr.mxu0 0.0
    %1569 = vmatpush1.msra.mxu0 %v515
    %1570 = vmatprep.subr.mxu0 0.0
    %1571 = vmatpush1.msra.mxu0 %v516
    %1572 = vmatprep.subr.mxu0 0.0
    %1573 = vmatpush1.msra.mxu0 %v517
    %1574 = vmatprep.subr.mxu0 0.0
    %1575 = vmatpush1.msra.mxu0 0.0
    %1576 = vmatprep.subr.mxu0 0.0
    %1577 = vmatpush1.msra.mxu0 0.0
    %1578 = vmatprep.subr.mxu0 0.0
    %1579 = vmatpush1.msra.mxu0 0.0
    %1580 = vmatprep.subr.mxu0 0.0
    %1581 = vmatpush1.msra.mxu0 0.0
    %1582 = vmatprep.subr.mxu0 0.0
    %1583 = vmatpush1.msra.mxu0 0.0
    %1584 = vmatprep.subr.mxu0 0.0
    %1585 = vmatpush1.msra.mxu0 0.0
    %1586 = vmatprep.subr.mxu0 0.0
    %1587 = vmatpush1.msra.mxu0 0.0
    %1588 = vmatprep.subr.mxu0 0.0
    %1589 = vmatpush1.msra.mxu0 0.0
    %1590 = vmatprep.subr.mxu0 0.0
    %1591 = vmatpush1.msra.mxu0 0.0
    %1592 = vmatprep.subr.mxu0 0.0
    %1593 = vmatpush1.msra.mxu0 0.0
    %1594 = vmatprep.subr.mxu0 0.0
    %1595 = vmatpush1.msra.mxu0 0.0
    %1596 = vmatprep.subr.mxu0 0.0
    %1597 = vmatpush1.msra.mxu0 0.0
    %1598 = vmatprep.subr.mxu0 0.0
    %1599 = vmatpush1.msra.mxu0 0.0
    %1600 = vmatprep.subr.mxu0 0.0
    %1601 = vmatpush1.msra.mxu0 0.0
    %1602 = vmatprep.subr.mxu0 0.0
    %1603 = vmatpush1.msra.mxu0 0.0
    %1604 = vmatprep.subr.mxu0 0.0
    %1605 = vmatpush1.msra.mxu0 0.0
    %1606 = vmatprep.mubr.f32.mxu0 0.0
    %1607 = vmatmul.mubr.f32.gmra.mrb[0].mxu0 %v1382
    %v1608 = vpop.f32.mrb[0].mxu0
    %v1609 = vadd.f32 0.0, %v1608
    %v1610 = vpop.f32.mrb[0].mxu0
    %1611 = vdwg.mxu0
    %v1612 = vadd.f32 %v471, %v1609
    %v1613 = vxor.u32 %v1612, 2147483648
    %v1614 = vmul.f32 %v1613, 1.442695
    %v1615 = vpow.pop %v1614
    %v1616 = vadd.f32 %v1615, 1.0
    %v1617 = vrcp.pop %v1616
    %v1618 = vmul.f32 1.0, %v1617
    %v1619 = vtanh.pop %v1612
    %1620 = vrot.lane.b32.xlu0 %v1618, 96
    %v1621 = vpop.permute.xlu0 %1620
    %1622 = vrot.lane.b32.xlu0 %v1619, 64
    %v1623 = vpop.permute.xlu0 %1622
    %1624 = vrot.lane.b32.xlu0 %v1618, 32
    %v1625 = vpop.permute.xlu0 %1624
    %v1626 = vmul.f32 %v1621, %v1380
    %v1627 = vmul.f32 %v1618, %v1623
    %v1628 = vadd.f32 %v1626, %v1627
    %v1629 = vtanh.pop %v1628
    %v1630 = vmul.f32 %v1625, %v1629
    %1631 = vmatprep.subr.mxu0 0.0
    %1632 = vmatpush1.msra.mxu0 %v623
    %1633 = vmatprep.subr.mxu0 0.0
    %1634 = vmatpush1.msra.mxu0 %v624
    %1635 = vmatprep.subr.mxu0 0.0
    %1636 = vmatpush1.msra.mxu0 %v625
    %1637 = vmatprep.subr.mxu0 0.0
    %1638 = vmatpush1.msra.mxu0 %v626
    %1639 = vmatprep.subr.mxu0 0.0
    %1640 = vmatpush1.msra.mxu0 %v627
    %1641 = vmatprep.subr.mxu0 0.0
    %1642 = vmatpush1.msra.mxu0 %v628
    %1643 = vmatprep.subr.mxu0 0.0
    %1644 = vmatpush1.msra.mxu0 %v629
    %1645 = vmatprep.subr.mxu0 0.0
    %1646 = vmatpush1.msra.mxu0 %v630
    %1647 = vmatprep.subr.mxu0 0.0
    %1648 = vmatpush1.msra.mxu0 %v631
    %1649 = vmatprep.subr.mxu0 0.0
    %1650 = vmatpush1.msra.mxu0 %v632
    %1651 = vmatprep.subr.mxu0 0.0
    %1652 = vmatpush1.msra.mxu0 %v633
    %1653 = vmatprep.subr.mxu0 0.0
    %1654 = vmatpush1.msra.mxu0 %v634
    %1655 = vmatprep.subr.mxu0 0.0
    %1656 = vmatpush1.msra.mxu0 %v635
    %1657 = vmatprep.subr.mxu0 0.0
    %1658 = vmatpush1.msra.mxu0 %v636
    %1659 = vmatprep.subr.mxu0 0.0
    %1660 = vmatpush1.msra.mxu0 %v637
    %1661 = vmatprep.subr.mxu0 0.0
    %1662 = vmatpush1.msra.mxu0 %v638
    %1663 = vmatprep.subr.mxu0 0.0
    %1664 = vmatpush1.msra.mxu0 0.0
    %1665 = vmatprep.subr.mxu0 0.0
    %1666 = vmatpush1.msra.mxu0 0.0
    %1667 = vmatprep.subr.mxu0 0.0
    %1668 = vmatpush1.msra.mxu0 0.0
    %1669 = vmatprep.subr.mxu0 0.0
    %1670 = vmatpush1.msra.mxu0 0.0
    %1671 = vmatprep.subr.mxu0 0.0
    %1672 = vmatpush1.msra.mxu0 0.0
    %1673 = vmatprep.subr.mxu0 0.0
    %1674 = vmatpush1.msra.mxu0 0.0
    %1675 = vmatprep.subr.mxu0 0.0
    %1676 = vmatpush1.msra.mxu0 0.0
    %1677 = vmatprep.subr.mxu0 0.0
    %1678 = vmatpush1.msra.mxu0 0.0
    %1679 = vmatprep.subr.mxu0 0.0
    %1680 = vmatpush1.msra.mxu0 0.0
    %1681 = vmatprep.subr.mxu0 0.0
    %1682 = vmatpush1.msra.mxu0 0.0
    %1683 = vmatprep.subr.mxu0 0.0
    %1684 = vmatpush1.msra.mxu0 0.0
    %1685 = vmatprep.subr.mxu0 0.0
    %1686 = vmatpush1.msra.mxu0 0.0
    %1687 = vmatprep.subr.mxu0 0.0
    %1688 = vmatpush1.msra.mxu0 0.0
    %1689 = vmatprep.subr.mxu0 0.0
    %1690 = vmatpush1.msra.mxu0 0.0
    %1691 = vmatprep.subr.mxu0 0.0
    %1692 = vmatpush1.msra.mxu0 0.0
    %1693 = vmatprep.subr.mxu0 0.0
    %1694 = vmatpush1.msra.mxu0 0.0
    %1695 = vmatprep.mubr.f32.mxu0 0.0
    %1696 = vmatmul.mubr.f32.gmra.mrb[0].mxu0 %v1541
    %v1697 = vpop.f32.mrb[0].mxu0
    %v1698 = vadd.f32 0.0, %v1697
    %v1699 = vpop.f32.mrb[0].mxu0
    %1700 = vdwg.mxu0
    %1701 = vmatprep.subr.mxu0 0.0
    %1702 = vmatpush1.msra.mxu0 %v607
    %1703 = vmatprep.subr.mxu0 0.0
    %1704 = vmatpush1.msra.mxu0 %v608
    %1705 = vmatprep.subr.mxu0 0.0
    %1706 = vmatpush1.msra.mxu0 %v609
    %1707 = vmatprep.subr.mxu0 0.0
    %1708 = vmatpush1.msra.mxu0 %v610
    %1709 = vmatprep.subr.mxu0 0.0
    %1710 = vmatpush1.msra.mxu0 %v611
    %1711 = vmatprep.subr.mxu0 0.0
    %1712 = vmatpush1.msra.mxu0 %v612
    %1713 = vmatprep.subr.mxu0 0.0
    %1714 = vmatpush1.msra.mxu0 %v613
    %1715 = vmatprep.subr.mxu0 0.0
    %1716 = vmatpush1.msra.mxu0 %v614
    %1717 = vmatprep.subr.mxu0 0.0
    %1718 = vmatpush1.msra.mxu0 %v615
    %1719 = vmatprep.subr.mxu0 0.0
    %1720 = vmatpush1.msra.mxu0 %v616
    %1721 = vmatprep.subr.mxu0 0.0
    %1722 = vmatpush1.msra.mxu0 %v617
    %1723 = vmatprep.subr.mxu0 0.0
    %1724 = vmatpush1.msra.mxu0 %v618
    %1725 = vmatprep.subr.mxu0 0.0
    %1726 = vmatpush1.msra.mxu0 %v619
    %1727 = vmatprep.subr.mxu0 0.0
    %1728 = vmatpush1.msra.mxu0 %v620
    %1729 = vmatprep.subr.mxu0 0.0
    %1730 = vmatpush1.msra.mxu0 %v621
    %1731 = vmatprep.subr.mxu0 0.0
    %1732 = vmatpush1.msra.mxu0 %v622
    %1733 = vmatprep.subr.mxu0 0.0
    %1734 = vmatpush1.msra.mxu0 0.0
    %1735 = vmatprep.subr.mxu0 0.0
    %1736 = vmatpush1.msra.mxu0 0.0
    %1737 = vmatprep.subr.mxu0 0.0
    %1738 = vmatpush1.msra.mxu0 0.0
    %1739 = vmatprep.subr.mxu0 0.0
    %1740 = vmatpush1.msra.mxu0 0.0
    %1741 = vmatprep.subr.mxu0 0.0
    %1742 = vmatpush1.msra.mxu0 0.0
    %1743 = vmatprep.subr.mxu0 0.0
    %1744 = vmatpush1.msra.mxu0 0.0
    %1745 = vmatprep.subr.mxu0 0.0
    %1746 = vmatpush1.msra.mxu0 0.0
    %1747 = vmatprep.subr.mxu0 0.0
    %1748 = vmatpush1.msra.mxu0 0.0
    %1749 = vmatprep.subr.mxu0 0.0
    %1750 = vmatpush1.msra.mxu0 0.0
    %1751 = vmatprep.subr.mxu0 0.0
    %1752 = vmatpush1.msra.mxu0 0.0
    %1753 = vmatprep.subr.mxu0 0.0
    %1754 = vmatpush1.msra.mxu0 0.0
    %1755 = vmatprep.subr.mxu0 0.0
    %1756 = vmatpush1.msra.mxu0 0.0
    %1757 = vmatprep.subr.mxu0 0.0
    %1758 = vmatpush1.msra.mxu0 0.0
    %1759 = vmatprep.subr.mxu0 0.0
    %1760 = vmatpush1.msra.mxu0 0.0
    %1761 = vmatprep.subr.mxu0 0.0
    %1762 = vmatpush1.msra.mxu0 0.0
    %1763 = vmatprep.subr.mxu0 0.0
    %1764 = vmatpush1.msra.mxu0 0.0
    %1765 = vmatprep.mubr.f32.mxu0 0.0
    %1766 = vmatmul.mubr.f32.gmra.mrb[0].mxu0 %v1630
    %v1767 = vpop.f32.mrb[0].mxu0
    %v1768 = vadd.f32 %v1698, %v1767
    %v1769 = vpop.f32.mrb[0].mxu0
    %1770 = vdwg.mxu0
    %v1771 = vadd.f32 %v1768, %v494
    %v1772 = vxor.u32 %v1771, 2147483648
    %v1773 = vmul.f32 %v1772, 1.442695
    %v1774 = vpow.pop %v1773
    %v1775 = vadd.f32 %v1774, 1.0
    %v1776 = vrcp.pop %v1775
    %v1777 = vmul.f32 1.0, %v1776
    %v1778 = vtanh.pop %v1771
    %1779 = vrot.lane.b32.xlu0 %v1777, 96
    %v1780 = vpop.permute.xlu0 %1779
    %1781 = vrot.lane.b32.xlu0 %v1778, 64
    %v1782 = vpop.permute.xlu0 %1781
    %1783 = vrot.lane.b32.xlu0 %v1777, 32
    %v1784 = vpop.permute.xlu0 %1783
    %v1785 = vmul.f32 %v1780, %v1539
    %v1786 = vmul.f32 %v1777, %v1782
    %v1787 = vadd.f32 %v1785, %v1786
    %v1788 = vtanh.pop %v1787
    %v1789 = vmul.f32 %v1784, %v1788
    %1790 = vmatprep.subr.mxu0 0.0
    %1791 = vmatpush1.msra.mxu0 %v502
    %1792 = vmatprep.subr.mxu0 0.0
    %1793 = vmatpush1.msra.mxu0 %v503
    %1794 = vmatprep.subr.mxu0 0.0
    %1795 = vmatpush1.msra.mxu0 %v504
    %1796 = vmatprep.subr.mxu0 0.0
    %1797 = vmatpush1.msra.mxu0 %v505
    %1798 = vmatprep.subr.mxu0 0.0
    %1799 = vmatpush1.msra.mxu0 %v506
    %1800 = vmatprep.subr.mxu0 0.0
    %1801 = vmatpush1.msra.mxu0 %v507
    %1802 = vmatprep.subr.mxu0 0.0
    %1803 = vmatpush1.msra.mxu0 %v508
    %1804 = vmatprep.subr.mxu0 0.0
    %1805 = vmatpush1.msra.mxu0 %v509
    %1806 = vmatprep.subr.mxu0 0.0
    %1807 = vmatpush1.msra.mxu0 %v510
    %1808 = vmatprep.subr.mxu0 0.0
    %1809 = vmatpush1.msra.mxu0 %v511
    %1810 = vmatprep.subr.mxu0 0.0
    %1811 = vmatpush1.msra.mxu0 %v512
    %1812 = vmatprep.subr.mxu0 0.0
    %1813 = vmatpush1.msra.mxu0 %v513
    %1814 = vmatprep.subr.mxu0 0.0
    %1815 = vmatpush1.msra.mxu0 %v514
    %1816 = vmatprep.subr.mxu0 0.0
    %1817 = vmatpush1.msra.mxu0 %v515
    %1818 = vmatprep.subr.mxu0 0.0
    %1819 = vmatpush1.msra.mxu0 %v516
    %1820 = vmatprep.subr.mxu0 0.0
    %1821 = vmatpush1.msra.mxu0 %v517
    %1822 = vmatprep.subr.mxu0 0.0
    %1823 = vmatpush1.msra.mxu0 0.0
    %1824 = vmatprep.subr.mxu0 0.0
    %1825 = vmatpush1.msra.mxu0 0.0
    %1826 = vmatprep.subr.mxu0 0.0
    %1827 = vmatpush1.msra.mxu0 0.0
    %1828 = vmatprep.subr.mxu0 0.0
    %1829 = vmatpush1.msra.mxu0 0.0
    %1830 = vmatprep.subr.mxu0 0.0
    %1831 = vmatpush1.msra.mxu0 0.0
    %1832 = vmatprep.subr.mxu0 0.0
    %1833 = vmatpush1.msra.mxu0 0.0
    %1834 = vmatprep.subr.mxu0 0.0
    %1835 = vmatpush1.msra.mxu0 0.0
    %1836 = vmatprep.subr.mxu0 0.0
    %1837 = vmatpush1.msra.mxu0 0.0
    %1838 = vmatprep.subr.mxu0 0.0
    %1839 = vmatpush1.msra.mxu0 0.0
    %1840 = vmatprep.subr.mxu0 0.0
    %1841 = vmatpush1.msra.mxu0 0.0
    %1842 = vmatprep.subr.mxu0 0.0
    %1843 = vmatpush1.msra.mxu0 0.0
    %1844 = vmatprep.subr.mxu0 0.0
    %1845 = vmatpush1.msra.mxu0 0.0
    %1846 = vmatprep.subr.mxu0 0.0
    %1847 = vmatpush1.msra.mxu0 0.0
    %1848 = vmatprep.subr.mxu0 0.0
    %1849 = vmatpush1.msra.mxu0 0.0
    %1850 = vmatprep.subr.mxu0 0.0
    %1851 = vmatpush1.msra.mxu0 0.0
    %1852 = vmatprep.subr.mxu0 0.0
    %1853 = vmatpush1.msra.mxu0 0.0
    %1854 = vmatprep.mubr.f32.mxu0 0.0
    %1855 = vmatmul.mubr.f32.gmra.mrb[0].mxu0 %v1630
    %v1856 = vpop.f32.mrb[0].mxu0
    %v1857 = vadd.f32 0.0, %v1856
    %v1858 = vpop.f32.mrb[0].mxu0
    %1859 = vdwg.mxu0
    %v1860 = vadd.f32 %v476, %v1857
    %v1861 = vxor.u32 %v1860, 2147483648
    %v1862 = vmul.f32 %v1861, 1.442695
    %v1863 = vpow.pop %v1862
    %v1864 = vadd.f32 %v1863, 1.0
    %v1865 = vrcp.pop %v1864
    %v1866 = vmul.f32 1.0, %v1865
    %v1867 = vtanh.pop %v1860
    %1868 = vrot.lane.b32.xlu0 %v1866, 96
    %v1869 = vpop.permute.xlu0 %1868
    %1870 = vrot.lane.b32.xlu0 %v1867, 64
    %v1871 = vpop.permute.xlu0 %1870
    %1872 = vrot.lane.b32.xlu0 %v1866, 32
    %v1873 = vpop.permute.xlu0 %1872
    %v1874 = vmul.f32 %v1869, %v1628
    %v1875 = vmul.f32 %v1866, %v1871
    %v1876 = vadd.f32 %v1874, %v1875
    %v1877 = vtanh.pop %v1876
    %v1878 = vmul.f32 %v1873, %v1877
    %1879 = vmatprep.subr.mxu0 0.0
    %1880 = vmatpush1.msra.mxu0 %v623
    %1881 = vmatprep.subr.mxu0 0.0
    %1882 = vmatpush1.msra.mxu0 %v624
    %1883 = vmatprep.subr.mxu0 0.0
    %1884 = vmatpush1.msra.mxu0 %v625
    %1885 = vmatprep.subr.mxu0 0.0
    %1886 = vmatpush1.msra.mxu0 %v626
    %1887 = vmatprep.subr.mxu0 0.0
    %1888 = vmatpush1.msra.mxu0 %v627
    %1889 = vmatprep.subr.mxu0 0.0
    %1890 = vmatpush1.msra.mxu0 %v628
    %1891 = vmatprep.subr.mxu0 0.0
    %1892 = vmatpush1.msra.mxu0 %v629
    %1893 = vmatprep.subr.mxu0 0.0
    %1894 = vmatpush1.msra.mxu0 %v630
    %1895 = vmatprep.subr.mxu0 0.0
    %1896 = vmatpush1.msra.mxu0 %v631
    %1897 = vmatprep.subr.mxu0 0.0
    %1898 = vmatpush1.msra.mxu0 %v632
    %1899 = vmatprep.subr.mxu0 0.0
    %1900 = vmatpush1.msra.mxu0 %v633
    %1901 = vmatprep.subr.mxu0 0.0
    %1902 = vmatpush1.msra.mxu0 %v634
    %1903 = vmatprep.subr.mxu0 0.0
    %1904 = vmatpush1.msra.mxu0 %v635
    %1905 = vmatprep.subr.mxu0 0.0
    %1906 = vmatpush1.msra.mxu0 %v636
    %1907 = vmatprep.subr.mxu0 0.0
    %1908 = vmatpush1.msra.mxu0 %v637
    %1909 = vmatprep.subr.mxu0 0.0
    %1910 = vmatpush1.msra.mxu0 %v638
    %1911 = vmatprep.subr.mxu0 0.0
    %1912 = vmatpush1.msra.mxu0 0.0
    %1913 = vmatprep.subr.mxu0 0.0
    %1914 = vmatpush1.msra.mxu0 0.0
    %1915 = vmatprep.subr.mxu0 0.0
    %1916 = vmatpush1.msra.mxu0 0.0
    %1917 = vmatprep.subr.mxu0 0.0
    %1918 = vmatpush1.msra.mxu0 0.0
    %1919 = vmatprep.subr.mxu0 0.0
    %1920 = vmatpush1.msra.mxu0 0.0
    %1921 = vmatprep.subr.mxu0 0.0
    %1922 = vmatpush1.msra.mxu0 0.0
    %1923 = vmatprep.subr.mxu0 0.0
    %1924 = vmatpush1.msra.mxu0 0.0
    %1925 = vmatprep.subr.mxu0 0.0
    %1926 = vmatpush1.msra.mxu0 0.0
    %1927 = vmatprep.subr.mxu0 0.0
    %1928 = vmatpush1.msra.mxu0 0.0
    %1929 = vmatprep.subr.mxu0 0.0
    %1930 = vmatpush1.msra.mxu0 0.0
    %1931 = vmatprep.subr.mxu0 0.0
    %1932 = vmatpush1.msra.mxu0 0.0
    %1933 = vmatprep.subr.mxu0 0.0
    %1934 = vmatpush1.msra.mxu0 0.0
    %1935 = vmatprep.subr.mxu0 0.0
    %1936 = vmatpush1.msra.mxu0 0.0
    %1937 = vmatprep.subr.mxu0 0.0
    %1938 = vmatpush1.msra.mxu0 0.0
    %1939 = vmatprep.subr.mxu0 0.0
    %1940 = vmatpush1.msra.mxu0 0.0
    %1941 = vmatprep.subr.mxu0 0.0
    %1942 = vmatpush1.msra.mxu0 0.0
    %1943 = vmatprep.mubr.f32.mxu0 0.0
    %1944 = vmatmul.mubr.f32.gmra.mrb[0].mxu0 %v1789
    %v1945 = vpop.f32.mrb[0].mxu0
    %v1946 = vadd.f32 0.0, %v1945
    %v1947 = vpop.f32.mrb[0].mxu0
    %1948 = vdwg.mxu0
    %1949 = vmatprep.subr.mxu0 0.0
    %1950 = vmatpush1.msra.mxu0 %v607
    %1951 = vmatprep.subr.mxu0 0.0
    %1952 = vmatpush1.msra.mxu0 %v608
    %1953 = vmatprep.subr.mxu0 0.0
    %1954 = vmatpush1.msra.mxu0 %v609
    %1955 = vmatprep.subr.mxu0 0.0
    %1956 = vmatpush1.msra.mxu0 %v610
    %1957 = vmatprep.subr.mxu0 0.0
    %1958 = vmatpush1.msra.mxu0 %v611
    %1959 = vmatprep.subr.mxu0 0.0
    %1960 = vmatpush1.msra.mxu0 %v612
    %1961 = vmatprep.subr.mxu0 0.0
    %1962 = vmatpush1.msra.mxu0 %v613
    %1963 = vmatprep.subr.mxu0 0.0
    %1964 = vmatpush1.msra.mxu0 %v614
    %1965 = vmatprep.subr.mxu0 0.0
    %1966 = vmatpush1.msra.mxu0 %v615
    %1967 = vmatprep.subr.mxu0 0.0
    %1968 = vmatpush1.msra.mxu0 %v616
    %1969 = vmatprep.subr.mxu0 0.0
    %1970 = vmatpush1.msra.mxu0 %v617
    %1971 = vmatprep.subr.mxu0 0.0
    %1972 = vmatpush1.msra.mxu0 %v618
    %1973 = vmatprep.subr.mxu0 0.0
    %1974 = vmatpush1.msra.mxu0 %v619
    %1975 = vmatprep.subr.mxu0 0.0
    %1976 = vmatpush1.msra.mxu0 %v620
    %1977 = vmatprep.subr.mxu0 0.0
    %1978 = vmatpush1.msra.mxu0 %v621
    %1979 = vmatprep.subr.mxu0 0.0
    %1980 = vmatpush1.msra.mxu0 %v622
    %1981 = vmatprep.subr.mxu0 0.0
    %1982 = vmatpush1.msra.mxu0 0.0
    %1983 = vmatprep.subr.mxu0 0.0
    %1984 = vmatpush1.msra.mxu0 0.0
    %1985 = vmatprep.subr.mxu0 0.0
    %1986 = vmatpush1.msra.mxu0 0.0
    %1987 = vmatprep.subr.mxu0 0.0
    %1988 = vmatpush1.msra.mxu0 0.0
    %1989 = vmatprep.subr.mxu0 0.0
    %1990 = vmatpush1.msra.mxu0 0.0
    %1991 = vmatprep.subr.mxu0 0.0
    %1992 = vmatpush1.msra.mxu0 0.0
    %1993 = vmatprep.subr.mxu0 0.0
    %1994 = vmatpush1.msra.mxu0 0.0
    %1995 = vmatprep.subr.mxu0 0.0
    %1996 = vmatpush1.msra.mxu0 0.0
    %1997 = vmatprep.subr.mxu0 0.0
    %1998 = vmatpush1.msra.mxu0 0.0
    %1999 = vmatprep.subr.mxu0 0.0
    %2000 = vmatpush1.msra.mxu0 0.0
    %2001 = vmatprep.subr.mxu0 0.0
    %2002 = vmatpush1.msra.mxu0 0.0
    %2003 = vmatprep.subr.mxu0 0.0
    %2004 = vmatpush1.msra.mxu0 0.0
    %2005 = vmatprep.subr.mxu0 0.0
    %2006 = vmatpush1.msra.mxu0 0.0
    %2007 = vmatprep.subr.mxu0 0.0
    %2008 = vmatpush1.msra.mxu0 0.0
    %2009 = vmatprep.subr.mxu0 0.0
    %2010 = vmatpush1.msra.mxu0 0.0
    %2011 = vmatprep.subr.mxu0 0.0
    %2012 = vmatpush1.msra.mxu0 0.0
    %2013 = vmatprep.mubr.f32.mxu0 0.0
    %2014 = vmatmul.mubr.f32.gmra.mrb[0].mxu0 %v1878
    %v2015 = vpop.f32.mrb[0].mxu0
    %v2016 = vadd.f32 %v1946, %v2015
    %v2017 = vpop.f32.mrb[0].mxu0
    %2018 = vdwg.mxu0
    %v2019 = vadd.f32 %v2016, %v494
    %v2020 = vxor.u32 %v2019, 2147483648
    %v2021 = vmul.f32 %v2020, 1.442695
    %v2022 = vpow.pop %v2021
    %v2023 = vadd.f32 %v2022, 1.0
    %v2024 = vrcp.pop %v2023
    %v2025 = vmul.f32 1.0, %v2024
    %v2026 = vtanh.pop %v2019
    %2027 = vrot.lane.b32.xlu0 %v2025, 96
    %v2028 = vpop.permute.xlu0 %2027
    %2029 = vrot.lane.b32.xlu0 %v2026, 64
    %v2030 = vpop.permute.xlu0 %2029
    %2031 = vrot.lane.b32.xlu0 %v2025, 32
    %v2032 = vpop.permute.xlu0 %2031
    %v2033 = vmul.f32 %v2028, %v1787
    %v2034 = vmul.f32 %v2025, %v2030
    %v2035 = vadd.f32 %v2033, %v2034
    %v2036 = vtanh.pop %v2035
    %v2037 = vmul.f32 %v2032, %v2036
    %2038 = vmatprep.subr.mxu0 0.0
    %2039 = vmatpush1.msra.mxu0 %v502
    %2040 = vmatprep.subr.mxu0 0.0
    %2041 = vmatpush1.msra.mxu0 %v503
    %2042 = vmatprep.subr.mxu0 0.0
    %2043 = vmatpush1.msra.mxu0 %v504
    %2044 = vmatprep.subr.mxu0 0.0
    %2045 = vmatpush1.msra.mxu0 %v505
    %2046 = vmatprep.subr.mxu0 0.0
    %2047 = vmatpush1.msra.mxu0 %v506
    %2048 = vmatprep.subr.mxu0 0.0
    %2049 = vmatpush1.msra.mxu0 %v507
    %2050 = vmatprep.subr.mxu0 0.0
    %2051 = vmatpush1.msra.mxu0 %v508
    %2052 = vmatprep.subr.mxu0 0.0
    %2053 = vmatpush1.msra.mxu0 %v509
    %2054 = vmatprep.subr.mxu0 0.0
    %2055 = vmatpush1.msra.mxu0 %v510
    %2056 = vmatprep.subr.mxu0 0.0
    %2057 = vmatpush1.msra.mxu0 %v511
    %2058 = vmatprep.subr.mxu0 0.0
    %2059 = vmatpush1.msra.mxu0 %v512
    %2060 = vmatprep.subr.mxu0 0.0
    %2061 = vmatpush1.msra.mxu0 %v513
    %2062 = vmatprep.subr.mxu0 0.0
    %2063 = vmatpush1.msra.mxu0 %v514
    %2064 = vmatprep.subr.mxu0 0.0
    %2065 = vmatpush1.msra.mxu0 %v515
    %2066 = vmatprep.subr.mxu0 0.0
    %2067 = vmatpush1.msra.mxu0 %v516
    %2068 = vmatprep.subr.mxu0 0.0
    %2069 = vmatpush1.msra.mxu0 %v517
    %2070 = vmatprep.subr.mxu0 0.0
    %2071 = vmatpush1.msra.mxu0 0.0
    %2072 = vmatprep.subr.mxu0 0.0
    %2073 = vmatpush1.msra.mxu0 0.0
    %2074 = vmatprep.subr.mxu0 0.0
    %2075 = vmatpush1.msra.mxu0 0.0
    %2076 = vmatprep.subr.mxu0 0.0
    %2077 = vmatpush1.msra.mxu0 0.0
    %2078 = vmatprep.subr.mxu0 0.0
    %2079 = vmatpush1.msra.mxu0 0.0
    %2080 = vmatprep.subr.mxu0 0.0
    %2081 = vmatpush1.msra.mxu0 0.0
    %2082 = vmatprep.subr.mxu0 0.0
    %2083 = vmatpush1.msra.mxu0 0.0
    %2084 = vmatprep.subr.mxu0 0.0
    %2085 = vmatpush1.msra.mxu0 0.0
    %2086 = vmatprep.subr.mxu0 0.0
    %2087 = vmatpush1.msra.mxu0 0.0
    %2088 = vmatprep.subr.mxu0 0.0
    %2089 = vmatpush1.msra.mxu0 0.0
    %2090 = vmatprep.subr.mxu0 0.0
    %2091 = vmatpush1.msra.mxu0 0.0
    %2092 = vmatprep.subr.mxu0 0.0
    %2093 = vmatpush1.msra.mxu0 0.0
    %2094 = vmatprep.subr.mxu0 0.0
    %2095 = vmatpush1.msra.mxu0 0.0
    %2096 = vmatprep.subr.mxu0 0.0
    %2097 = vmatpush1.msra.mxu0 0.0
    %2098 = vmatprep.subr.mxu0 0.0
    %2099 = vmatpush1.msra.mxu0 0.0
    %2100 = vmatprep.subr.mxu0 0.0
    %2101 = vmatpush1.msra.mxu0 0.0
    %2102 = vmatprep.mubr.f32.mxu0 0.0
    %2103 = vmatmul.mubr.f32.gmra.mrb[0].mxu0 %v1878
    %v2104 = vpop.f32.mrb[0].mxu0
    %v2105 = vadd.f32 0.0, %v2104
    %v2106 = vpop.f32.mrb[0].mxu0
    %2107 = vdwg.mxu0
    %v2108 = vadd.f32 %v481, %v2105
    %v2109 = vxor.u32 %v2108, 2147483648
    %v2110 = vmul.f32 %v2109, 1.442695
    %v2111 = vpow.pop %v2110
    %v2112 = vadd.f32 %v2111, 1.0
    %v2113 = vrcp.pop %v2112
    %v2114 = vmul.f32 1.0, %v2113
    %v2115 = vtanh.pop %v2108
    %2116 = vrot.lane.b32.xlu0 %v2114, 96
    %v2117 = vpop.permute.xlu0 %2116
    %2118 = vrot.lane.b32.xlu0 %v2115, 64
    %v2119 = vpop.permute.xlu0 %2118
    %2120 = vrot.lane.b32.xlu0 %v2114, 32
    %v2121 = vpop.permute.xlu0 %2120
    %v2122 = vmul.f32 %v2117, %v1876
    %v2123 = vmul.f32 %v2114, %v2119
    %v2124 = vadd.f32 %v2122, %v2123
    %v2125 = vtanh.pop %v2124
    %v2126 = vmul.f32 %v2121, %v2125
    %2127 = vmatprep.subr.mxu0 0.0
    %2128 = vmatpush1.msra.mxu0 %v623
    %2129 = vmatprep.subr.mxu0 0.0
    %2130 = vmatpush1.msra.mxu0 %v624
    %2131 = vmatprep.subr.mxu0 0.0
    %2132 = vmatpush1.msra.mxu0 %v625
    %2133 = vmatprep.subr.mxu0 0.0
    %2134 = vmatpush1.msra.mxu0 %v626
    %2135 = vmatprep.subr.mxu0 0.0
    %2136 = vmatpush1.msra.mxu0 %v627
    %2137 = vmatprep.subr.mxu0 0.0
    %2138 = vmatpush1.msra.mxu0 %v628
    %2139 = vmatprep.subr.mxu0 0.0
    %2140 = vmatpush1.msra.mxu0 %v629
    %2141 = vmatprep.subr.mxu0 0.0
    %2142 = vmatpush1.msra.mxu0 %v630
    %2143 = vmatprep.subr.mxu0 0.0
    %2144 = vmatpush1.msra.mxu0 %v631
    %2145 = vmatprep.subr.mxu0 0.0
    %2146 = vmatpush1.msra.mxu0 %v632
    %2147 = vmatprep.subr.mxu0 0.0
    %2148 = vmatpush1.msra.mxu0 %v633
    %2149 = vmatprep.subr.mxu0 0.0
    %2150 = vmatpush1.msra.mxu0 %v634
    %2151 = vmatprep.subr.mxu0 0.0
    %2152 = vmatpush1.msra.mxu0 %v635
    %2153 = vmatprep.subr.mxu0 0.0
    %2154 = vmatpush1.msra.mxu0 %v636
    %2155 = vmatprep.subr.mxu0 0.0
    %2156 = vmatpush1.msra.mxu0 %v637
    %2157 = vmatprep.subr.mxu0 0.0
    %2158 = vmatpush1.msra.mxu0 %v638
    %2159 = vmatprep.subr.mxu0 0.0
    %2160 = vmatpush1.msra.mxu0 0.0
    %2161 = vmatprep.subr.mxu0 0.0
    %2162 = vmatpush1.msra.mxu0 0.0
    %2163 = vmatprep.subr.mxu0 0.0
    %2164 = vmatpush1.msra.mxu0 0.0
    %2165 = vmatprep.subr.mxu0 0.0
    %2166 = vmatpush1.msra.mxu0 0.0
    %2167 = vmatprep.subr.mxu0 0.0
    %2168 = vmatpush1.msra.mxu0 0.0
    %2169 = vmatprep.subr.mxu0 0.0
    %2170 = vmatpush1.msra.mxu0 0.0
    %2171 = vmatprep.subr.mxu0 0.0
    %2172 = vmatpush1.msra.mxu0 0.0
    %2173 = vmatprep.subr.mxu0 0.0
    %2174 = vmatpush1.msra.mxu0 0.0
    %2175 = vmatprep.subr.mxu0 0.0
    %2176 = vmatpush1.msra.mxu0 0.0
    %2177 = vmatprep.subr.mxu0 0.0
    %2178 = vmatpush1.msra.mxu0 0.0
    %2179 = vmatprep.subr.mxu0 0.0
    %2180 = vmatpush1.msra.mxu0 0.0
    %2181 = vmatprep.subr.mxu0 0.0
    %2182 = vmatpush1.msra.mxu0 0.0
    %2183 = vmatprep.subr.mxu0 0.0
    %2184 = vmatpush1.msra.mxu0 0.0
    %2185 = vmatprep.subr.mxu0 0.0
    %2186 = vmatpush1.msra.mxu0 0.0
    %2187 = vmatprep.subr.mxu0 0.0
    %2188 = vmatpush1.msra.mxu0 0.0
    %2189 = vmatprep.subr.mxu0 0.0
    %2190 = vmatpush1.msra.mxu0 0.0
    %2191 = vmatprep.mubr.f32.mxu0 0.0
    %2192 = vmatmul.mubr.f32.gmra.mrb[0].mxu0 %v2037
    %v2193 = vpop.f32.mrb[0].mxu0
    %v2194 = vadd.f32 0.0, %v2193
    %v2195 = vpop.f32.mrb[0].mxu0
    %2196 = vdwg.mxu0
    %2197 = vmatprep.subr.mxu0 0.0
    %2198 = vmatpush1.msra.mxu0 %v607
    %2199 = vmatprep.subr.mxu0 0.0
    %2200 = vmatpush1.msra.mxu0 %v608
    %2201 = vmatprep.subr.mxu0 0.0
    %2202 = vmatpush1.msra.mxu0 %v609
    %2203 = vmatprep.subr.mxu0 0.0
    %2204 = vmatpush1.msra.mxu0 %v610
    %2205 = vmatprep.subr.mxu0 0.0
    %2206 = vmatpush1.msra.mxu0 %v611
    %2207 = vmatprep.subr.mxu0 0.0
    %2208 = vmatpush1.msra.mxu0 %v612
    %2209 = vmatprep.subr.mxu0 0.0
    %2210 = vmatpush1.msra.mxu0 %v613
    %2211 = vmatprep.subr.mxu0 0.0
    %2212 = vmatpush1.msra.mxu0 %v614
    %2213 = vmatprep.subr.mxu0 0.0
    %2214 = vmatpush1.msra.mxu0 %v615
    %2215 = vmatprep.subr.mxu0 0.0
    %2216 = vmatpush1.msra.mxu0 %v616
    %2217 = vmatprep.subr.mxu0 0.0
    %2218 = vmatpush1.msra.mxu0 %v617
    %2219 = vmatprep.subr.mxu0 0.0
    %2220 = vmatpush1.msra.mxu0 %v618
    %2221 = vmatprep.subr.mxu0 0.0
    %2222 = vmatpush1.msra.mxu0 %v619
    %2223 = vmatprep.subr.mxu0 0.0
    %2224 = vmatpush1.msra.mxu0 %v620
    %2225 = vmatprep.subr.mxu0 0.0
    %2226 = vmatpush1.msra.mxu0 %v621
    %2227 = vmatprep.subr.mxu0 0.0
    %2228 = vmatpush1.msra.mxu0 %v622
    %2229 = vmatprep.subr.mxu0 0.0
    %2230 = vmatpush1.msra.mxu0 0.0
    %2231 = vmatprep.subr.mxu0 0.0
    %2232 = vmatpush1.msra.mxu0 0.0
    %2233 = vmatprep.subr.mxu0 0.0
    %2234 = vmatpush1.msra.mxu0 0.0
    %2235 = vmatprep.subr.mxu0 0.0
    %2236 = vmatpush1.msra.mxu0 0.0
    %2237 = vmatprep.subr.mxu0 0.0
    %2238 = vmatpush1.msra.mxu0 0.0
    %2239 = vmatprep.subr.mxu0 0.0
    %2240 = vmatpush1.msra.mxu0 0.0
    %2241 = vmatprep.subr.mxu0 0.0
    %2242 = vmatpush1.msra.mxu0 0.0
    %2243 = vmatprep.subr.mxu0 0.0
    %2244 = vmatpush1.msra.mxu0 0.0
    %2245 = vmatprep.subr.mxu0 0.0
    %2246 = vmatpush1.msra.mxu0 0.0
    %2247 = vmatprep.subr.mxu0 0.0
    %2248 = vmatpush1.msra.mxu0 0.0
    %2249 = vmatprep.subr.mxu0 0.0
    %2250 = vmatpush1.msra.mxu0 0.0
    %2251 = vmatprep.subr.mxu0 0.0
    %2252 = vmatpush1.msra.mxu0 0.0
    %2253 = vmatprep.subr.mxu0 0.0
    %2254 = vmatpush1.msra.mxu0 0.0
    %2255 = vmatprep.subr.mxu0 0.0
    %2256 = vmatpush1.msra.mxu0 0.0
    %2257 = vmatprep.subr.mxu0 0.0
    %2258 = vmatpush1.msra.mxu0 0.0
    %2259 = vmatprep.subr.mxu0 0.0
    %2260 = vmatpush1.msra.mxu0 0.0
    %2261 = vmatprep.mubr.f32.mxu0 0.0
    %2262 = vmatmul.mubr.f32.gmra.mrb[0].mxu0 %v2126
    %v2263 = vpop.f32.mrb[0].mxu0
    %v2264 = vadd.f32 %v2194, %v2263
    %v2265 = vpop.f32.mrb[0].mxu0
    %2266 = vdwg.mxu0
    %v2267 = vadd.f32 %v2264, %v494
    %v2268 = vxor.u32 %v2267, 2147483648
    %v2269 = vmul.f32 %v2268, 1.442695
    %v2270 = vpow.pop %v2269
    %v2271 = vadd.f32 %v2270, 1.0
    %v2272 = vrcp.pop %v2271
    %v2273 = vmul.f32 1.0, %v2272
    %v2274 = vtanh.pop %v2267
    %2275 = vrot.lane.b32.xlu0 %v2273, 96
    %v2276 = vpop.permute.xlu0 %2275
    %2277 = vrot.lane.b32.xlu0 %v2274, 64
    %v2278 = vpop.permute.xlu0 %2277
    %2279 = vrot.lane.b32.xlu0 %v2273, 32
    %v2280 = vpop.permute.xlu0 %2279
    %v2281 = vmul.f32 %v2276, %v2035
    %v2282 = vmul.f32 %v2273, %v2278
    %v2283 = vadd.f32 %v2281, %v2282
    %v2284 = vtanh.pop %v2283
    %v2285 = vmul.f32 %v2280, %v2284
    %2286 = vmatprep.subr.mxu0 0.0
    %2287 = vmatpush1.msra.mxu0 %v502
    %2288 = vmatprep.subr.mxu0 0.0
    %2289 = vmatpush1.msra.mxu0 %v503
    %2290 = vmatprep.subr.mxu0 0.0
    %2291 = vmatpush1.msra.mxu0 %v504
    %2292 = vmatprep.subr.mxu0 0.0
    %2293 = vmatpush1.msra.mxu0 %v505
    %2294 = vmatprep.subr.mxu0 0.0
    %2295 = vmatpush1.msra.mxu0 %v506
    %2296 = vmatprep.subr.mxu0 0.0
    %2297 = vmatpush1.msra.mxu0 %v507
    %2298 = vmatprep.subr.mxu0 0.0
    %2299 = vmatpush1.msra.mxu0 %v508
    %2300 = vmatprep.subr.mxu0 0.0
    %2301 = vmatpush1.msra.mxu0 %v509
    %2302 = vmatprep.subr.mxu0 0.0
    %2303 = vmatpush1.msra.mxu0 %v510
    %2304 = vmatprep.subr.mxu0 0.0
    %2305 = vmatpush1.msra.mxu0 %v511
    %2306 = vmatprep.subr.mxu0 0.0
    %2307 = vmatpush1.msra.mxu0 %v512
    %2308 = vmatprep.subr.mxu0 0.0
    %2309 = vmatpush1.msra.mxu0 %v513
    %2310 = vmatprep.subr.mxu0 0.0
    %2311 = vmatpush1.msra.mxu0 %v514
    %2312 = vmatprep.subr.mxu0 0.0
    %2313 = vmatpush1.msra.mxu0 %v515
    %2314 = vmatprep.subr.mxu0 0.0
    %2315 = vmatpush1.msra.mxu0 %v516
    %2316 = vmatprep.subr.mxu0 0.0
    %2317 = vmatpush1.msra.mxu0 %v517
    %2318 = vmatprep.subr.mxu0 0.0
    %2319 = vmatpush1.msra.mxu0 0.0
    %2320 = vmatprep.subr.mxu0 0.0
    %2321 = vmatpush1.msra.mxu0 0.0
    %2322 = vmatprep.subr.mxu0 0.0
    %2323 = vmatpush1.msra.mxu0 0.0
    %2324 = vmatprep.subr.mxu0 0.0
    %2325 = vmatpush1.msra.mxu0 0.0
    %2326 = vmatprep.subr.mxu0 0.0
    %2327 = vmatpush1.msra.mxu0 0.0
    %2328 = vmatprep.subr.mxu0 0.0
    %2329 = vmatpush1.msra.mxu0 0.0
    %2330 = vmatprep.subr.mxu0 0.0
    %2331 = vmatpush1.msra.mxu0 0.0
    %2332 = vmatprep.subr.mxu0 0.0
    %2333 = vmatpush1.msra.mxu0 0.0
    %2334 = vmatprep.subr.mxu0 0.0
    %2335 = vmatpush1.msra.mxu0 0.0
    %2336 = vmatprep.subr.mxu0 0.0
    %2337 = vmatpush1.msra.mxu0 0.0
    %2338 = vmatprep.subr.mxu0 0.0
    %2339 = vmatpush1.msra.mxu0 0.0
    %2340 = vmatprep.subr.mxu0 0.0
    %2341 = vmatpush1.msra.mxu0 0.0
    %2342 = vmatprep.subr.mxu0 0.0
    %2343 = vmatpush1.msra.mxu0 0.0
    %2344 = vmatprep.subr.mxu0 0.0
    %2345 = vmatpush1.msra.mxu0 0.0
    %2346 = vmatprep.subr.mxu0 0.0
    %2347 = vmatpush1.msra.mxu0 0.0
    %2348 = vmatprep.subr.mxu0 0.0
    %2349 = vmatpush1.msra.mxu0 0.0
    %2350 = vmatprep.mubr.f32.mxu0 0.0
    %2351 = vmatmul.mubr.f32.gmra.mrb[0].mxu0 %v2126
    %v2352 = vpop.f32.mrb[0].mxu0
    %v2353 = vadd.f32 0.0, %v2352
    %v2354 = vpop.f32.mrb[0].mxu0
    %2355 = vdwg.mxu0
    %v2356 = vadd.f32 %v486, %v2353
    %v2357 = vxor.u32 %v2356, 2147483648
    %v2358 = vmul.f32 %v2357, 1.442695
    %v2359 = vpow.pop %v2358
    %v2360 = vadd.f32 %v2359, 1.0
    %v2361 = vrcp.pop %v2360
    %v2362 = vmul.f32 1.0, %v2361
    %v2363 = vtanh.pop %v2356
    %2364 = vrot.lane.b32.xlu0 %v2362, 96
    %v2365 = vpop.permute.xlu0 %2364
    %2366 = vrot.lane.b32.xlu0 %v2363, 64
    %v2367 = vpop.permute.xlu0 %2366
    %2368 = vrot.lane.b32.xlu0 %v2362, 32
    %v2369 = vpop.permute.xlu0 %2368
    %v2370 = vmul.f32 %v2365, %v2124
    %v2371 = vmul.f32 %v2362, %v2367
    %v2372 = vadd.f32 %v2370, %v2371
    %v2373 = vtanh.pop %v2372
    %v2374 = vmul.f32 %v2369, %v2373
    %2375 = vmatprep.subr.mxu0 0.0
    %2376 = vmatpush1.msra.mxu0 %v623
    %2377 = vmatprep.subr.mxu0 0.0
    %2378 = vmatpush1.msra.mxu0 %v624
    %2379 = vmatprep.subr.mxu0 0.0
    %2380 = vmatpush1.msra.mxu0 %v625
    %2381 = vmatprep.subr.mxu0 0.0
    %2382 = vmatpush1.msra.mxu0 %v626
    %2383 = vmatprep.subr.mxu0 0.0
    %2384 = vmatpush1.msra.mxu0 %v627
    %2385 = vmatprep.subr.mxu0 0.0
    %2386 = vmatpush1.msra.mxu0 %v628
    %2387 = vmatprep.subr.mxu0 0.0
    %2388 = vmatpush1.msra.mxu0 %v629
    %2389 = vmatprep.subr.mxu0 0.0
    %2390 = vmatpush1.msra.mxu0 %v630
    %2391 = vmatprep.subr.mxu0 0.0
    %2392 = vmatpush1.msra.mxu0 %v631
    %2393 = vmatprep.subr.mxu0 0.0
    %2394 = vmatpush1.msra.mxu0 %v632
    %2395 = vmatprep.subr.mxu0 0.0
    %2396 = vmatpush1.msra.mxu0 %v633
    %2397 = vmatprep.subr.mxu0 0.0
    %2398 = vmatpush1.msra.mxu0 %v634
    %2399 = vmatprep.subr.mxu0 0.0
    %2400 = vmatpush1.msra.mxu0 %v635
    %2401 = vmatprep.subr.mxu0 0.0
    %2402 = vmatpush1.msra.mxu0 %v636
    %2403 = vmatprep.subr.mxu0 0.0
    %2404 = vmatpush1.msra.mxu0 %v637
    %2405 = vmatprep.subr.mxu0 0.0
    %2406 = vmatpush1.msra.mxu0 %v638
    %2407 = vmatprep.subr.mxu0 0.0
    %2408 = vmatpush1.msra.mxu0 0.0
    %2409 = vmatprep.subr.mxu0 0.0
    %2410 = vmatpush1.msra.mxu0 0.0
    %2411 = vmatprep.subr.mxu0 0.0
    %2412 = vmatpush1.msra.mxu0 0.0
    %2413 = vmatprep.subr.mxu0 0.0
    %2414 = vmatpush1.msra.mxu0 0.0
    %2415 = vmatprep.subr.mxu0 0.0
    %2416 = vmatpush1.msra.mxu0 0.0
    %2417 = vmatprep.subr.mxu0 0.0
    %2418 = vmatpush1.msra.mxu0 0.0
    %2419 = vmatprep.subr.mxu0 0.0
    %2420 = vmatpush1.msra.mxu0 0.0
    %2421 = vmatprep.subr.mxu0 0.0
    %2422 = vmatpush1.msra.mxu0 0.0
    %2423 = vmatprep.subr.mxu0 0.0
    %2424 = vmatpush1.msra.mxu0 0.0
    %2425 = vmatprep.subr.mxu0 0.0
    %2426 = vmatpush1.msra.mxu0 0.0
    %2427 = vmatprep.subr.mxu0 0.0
    %2428 = vmatpush1.msra.mxu0 0.0
    %2429 = vmatprep.subr.mxu0 0.0
    %2430 = vmatpush1.msra.mxu0 0.0
    %2431 = vmatprep.subr.mxu0 0.0
    %2432 = vmatpush1.msra.mxu0 0.0
    %2433 = vmatprep.subr.mxu0 0.0
    %2434 = vmatpush1.msra.mxu0 0.0
    %2435 = vmatprep.subr.mxu0 0.0
    %2436 = vmatpush1.msra.mxu0 0.0
    %2437 = vmatprep.subr.mxu0 0.0
    %2438 = vmatpush1.msra.mxu0 0.0
    %2439 = vmatprep.mubr.f32.mxu0 0.0
    %2440 = vmatmul.mubr.f32.gmra.mrb[0].mxu0 %v2285
    %v2441 = vpop.f32.mrb[0].mxu0
    %v2442 = vadd.f32 0.0, %v2441
    %v2443 = vpop.f32.mrb[0].mxu0
    %2444 = vdwg.mxu0
    %2445 = vmatprep.subr.mxu0 0.0
    %2446 = vmatpush1.msra.mxu0 %v607
    %2447 = vmatprep.subr.mxu0 0.0
    %2448 = vmatpush1.msra.mxu0 %v608
    %2449 = vmatprep.subr.mxu0 0.0
    %2450 = vmatpush1.msra.mxu0 %v609
    %2451 = vmatprep.subr.mxu0 0.0
    %2452 = vmatpush1.msra.mxu0 %v610
    %2453 = vmatprep.subr.mxu0 0.0
    %2454 = vmatpush1.msra.mxu0 %v611
    %2455 = vmatprep.subr.mxu0 0.0
    %2456 = vmatpush1.msra.mxu0 %v612
    %2457 = vmatprep.subr.mxu0 0.0
    %2458 = vmatpush1.msra.mxu0 %v613
    %2459 = vmatprep.subr.mxu0 0.0
    %2460 = vmatpush1.msra.mxu0 %v614
    %2461 = vmatprep.subr.mxu0 0.0
    %2462 = vmatpush1.msra.mxu0 %v615
    %2463 = vmatprep.subr.mxu0 0.0
    %2464 = vmatpush1.msra.mxu0 %v616
    %2465 = vmatprep.subr.mxu0 0.0
    %2466 = vmatpush1.msra.mxu0 %v617
    %2467 = vmatprep.subr.mxu0 0.0
    %2468 = vmatpush1.msra.mxu0 %v618
    %2469 = vmatprep.subr.mxu0 0.0
    %2470 = vmatpush1.msra.mxu0 %v619
    %2471 = vmatprep.subr.mxu0 0.0
    %2472 = vmatpush1.msra.mxu0 %v620
    %2473 = vmatprep.subr.mxu0 0.0
    %2474 = vmatpush1.msra.mxu0 %v621
    %2475 = vmatprep.subr.mxu0 0.0
    %2476 = vmatpush1.msra.mxu0 %v622
    %2477 = vmatprep.subr.mxu0 0.0
    %2478 = vmatpush1.msra.mxu0 0.0
    %2479 = vmatprep.subr.mxu0 0.0
    %2480 = vmatpush1.msra.mxu0 0.0
    %2481 = vmatprep.subr.mxu0 0.0
    %2482 = vmatpush1.msra.mxu0 0.0
    %2483 = vmatprep.subr.mxu0 0.0
    %2484 = vmatpush1.msra.mxu0 0.0
    %2485 = vmatprep.subr.mxu0 0.0
    %2486 = vmatpush1.msra.mxu0 0.0
    %2487 = vmatprep.subr.mxu0 0.0
    %2488 = vmatpush1.msra.mxu0 0.0
    %2489 = vmatprep.subr.mxu0 0.0
    %2490 = vmatpush1.msra.mxu0 0.0
    %2491 = vmatprep.subr.mxu0 0.0
    %2492 = vmatpush1.msra.mxu0 0.0
    %2493 = vmatprep.subr.mxu0 0.0
    %2494 = vmatpush1.msra.mxu0 0.0
    %2495 = vmatprep.subr.mxu0 0.0
    %2496 = vmatpush1.msra.mxu0 0.0
    %2497 = vmatprep.subr.mxu0 0.0
    %2498 = vmatpush1.msra.mxu0 0.0
    %2499 = vmatprep.subr.mxu0 0.0
    %2500 = vmatpush1.msra.mxu0 0.0
    %2501 = vmatprep.subr.mxu0 0.0
    %2502 = vmatpush1.msra.mxu0 0.0
    %2503 = vmatprep.subr.mxu0 0.0
    %2504 = vmatpush1.msra.mxu0 0.0
    %2505 = vmatprep.subr.mxu0 0.0
    %2506 = vmatpush1.msra.mxu0 0.0
    %2507 = vmatprep.subr.mxu0 0.0
    %2508 = vmatpush1.msra.mxu0 0.0
    %2509 = vmatprep.mubr.f32.mxu0 0.0
    %2510 = vmatmul.mubr.f32.gmra.mrb[0].mxu0 %v2374
    %v2511 = vpop.f32.mrb[0].mxu0
    %v2512 = vadd.f32 %v2442, %v2511
    %v2513 = vpop.f32.mrb[0].mxu0
    %2514 = vdwg.mxu0
    %v2515 = vadd.f32 %v2512, %v494
    %v2516 = vxor.u32 %v2515, 2147483648
    %v2517 = vmul.f32 %v2516, 1.442695
    %v2518 = vpow.pop %v2517
    %v2519 = vadd.f32 %v2518, 1.0
    %v2520 = vrcp.pop %v2519
    %v2521 = vmul.f32 1.0, %v2520
    %v2522 = vtanh.pop %v2515
    %2523 = vrot.lane.b32.xlu0 %v2521, 96
    %v2524 = vpop.permute.xlu0 %2523
    %2525 = vrot.lane.b32.xlu0 %v2522, 64
    %v2526 = vpop.permute.xlu0 %2525
    %2527 = vrot.lane.b32.xlu0 %v2521, 32
    %v2528 = vpop.permute.xlu0 %2527
    %v2529 = vmul.f32 %v2524, %v2283
    %v2530 = vmul.f32 %v2521, %v2526
    %v2531 = vadd.f32 %v2529, %v2530
    %v2532 = vtanh.pop %v2531
    %v2533 = vmul.f32 %v2528, %v2532
    %v2534 = vsel %vm223, %v797, 0.0
    %v2535 = vsel %vm224, %v1045, 0.0
    %v2536 = vsel %vm225, %v1293, 0.0
    %v2537 = vsel %vm226, %v1541, 0.0
    %v2538 = vsel %vm227, %v1789, 0.0
    %v2539 = vsel %vm228, %v2037, 0.0
    %v2540 = vsel %vm229, %v2285, 0.0
    %v2541 = vsel %vm230, %v2533, 0.0
    %v2542 = vadd.f32 %v2534, %v2535
    %v2543 = vadd.f32 %v2542, %v2536
    %v2544 = vadd.f32 %v2543, %v2537
    %v2545 = vadd.f32 %v2544, %v2538
    %v2546 = vadd.f32 %v2545, %v2539
    %v2547 = vadd.f32 %v2546, %v2540
    %v2548 = vadd.f32 %v2547, %v2541
    %v2549 = vrot.slane %v2548, 4
    %v2550 = vadd.f32 %v2548, %v2549
    %v2551 = vrot.slane %v2550, 2
    %v2552 = vadd.f32 %v2550, %v2551
    %v2553 = vrot.slane %v2552, 1
    %v2554 = vadd.f32 %v2552, %v2553
    %v2555 = vmul.f32 %v2554, 0.0625
    %v2556 = vsub.f32 %v797, %v2555
    %v2557 = vsub.f32 %v1045, %v2555
    %v2558 = vsub.f32 %v1293, %v2555
    %v2559 = vsub.f32 %v1541, %v2555
    %v2560 = vsub.f32 %v1789, %v2555
    %v2561 = vsub.f32 %v2037, %v2555
    %v2562 = vsub.f32 %v2285, %v2555
    %v2563 = vsub.f32 %v2533, %v2555
    %v2564 = vsel %vm223, %v2556, 0.0
    %v2565 = vsel %vm224, %v2557, 0.0
    %v2566 = vsel %vm225, %v2558, 0.0
    %v2567 = vsel %vm226, %v2559, 0.0
    %v2568 = vsel %vm227, %v2560, 0.0
    %v2569 = vsel %vm228, %v2561, 0.0
    %v2570 = vsel %vm229, %v2562, 0.0
    %v2571 = vsel %vm230, %v2563, 0.0
    %v2572 = vmul.f32 %v2564, %v2564
    %v2573 = vmul.f32 %v2565, %v2565
    %v2574 = vmul.f32 %v2566, %v2566
    %v2575 = vmul.f32 %v2567, %v2567
    %v2576 = vmul.f32 %v2568, %v2568
    %v2577 = vmul.f32 %v2569, %v2569
    %v2578 = vmul.f32 %v2570, %v2570
    %v2579 = vmul.f32 %v2571, %v2571
    %v2580 = vadd.f32 %v2572, %v2573
    %v2581 = vadd.f32 %v2580, %v2574
    %v2582 = vadd.f32 %v2581, %v2575
    %v2583 = vadd.f32 %v2582, %v2576
    %v2584 = vadd.f32 %v2583, %v2577
    %v2585 = vadd.f32 %v2584, %v2578
    %v2586 = vadd.f32 %v2585, %v2579
    %v2587 = vrot.slane %v2586, 4
    %v2588 = vadd.f32 %v2586, %v2587
    %v2589 = vrot.slane %v2588, 2
    %v2590 = vadd.f32 %v2588, %v2589
    %v2591 = vrot.slane %v2590, 1
    %v2592 = vadd.f32 %v2590, %v2591
    %v2593 = vmul.f32 %v2592, 0.0625
    %v2594 = vadd.f32 %v2593, 1e-05
    %v2595 = vrsqrt.pop %v2594
    %v2596 = vmul.f32 %v2556, %v2595
    %v2597 = vmul.f32 %v2557, %v2595
    %v2598 = vmul.f32 %v2558, %v2595
    %v2599 = vmul.f32 %v2559, %v2595
    %v2600 = vmul.f32 %v2560, %v2595
    %v2601 = vmul.f32 %v2561, %v2595
    %v2602 = vmul.f32 %v2562, %v2595
    %v2603 = vmul.f32 %v2563, %v2595
    %v2604 = vld [vmem:[%s3] sm:$0x1]
    %v2606 = vlaneseq
    %v2607 = vshrl.u32 %v2606, 7
    %v2608 = vsub.s32 0, %v2607
    %v2609 = vrot.slane %v2604, %v2608
    %v2611 = vmul.f32 %v2596, %v2609
    %v2612 = vmul.f32 %v2597, %v2609
    %v2613 = vmul.f32 %v2598, %v2609
    %v2614 = vmul.f32 %v2599, %v2609
    %v2615 = vmul.f32 %v2600, %v2609
    %v2616 = vmul.f32 %v2601, %v2609
    %v2617 = vmul.f32 %v2602, %v2609
    %v2618 = vmul.f32 %v2603, %v2609
    %v2619 = vld [vmem:[%s4] sm:$0x1]
    %v2621 = vlaneseq
    %v2622 = vshrl.u32 %v2621, 7
    %v2623 = vsub.s32 0, %v2622
    %v2624 = vrot.slane %v2619, %v2623
    %v2626 = vadd.f32 %v2611, %v2624
    %v2627 = vadd.f32 %v2612, %v2624
    %v2628 = vadd.f32 %v2613, %v2624
    %v2629 = vadd.f32 %v2614, %v2624
    %v2630 = vadd.f32 %v2615, %v2624
    %v2631 = vadd.f32 %v2616, %v2624
    %v2632 = vadd.f32 %v2617, %v2624
    %v2633 = vadd.f32 %v2618, %v2624
    %v2634 = vld [vmem:[#allocation2] sm:$0xff]
    %v2635 = vld [vmem:[#allocation2 + $0x8] sm:$0xff]
    %v2636 = vld [vmem:[#allocation2 + $0x10] sm:$0xff]
    %v2637 = vld [vmem:[#allocation2 + $0x18] sm:$0xff]
    %v2638 = vld [vmem:[#allocation2 + $0x20] sm:$0xff]
    %v2639 = vld [vmem:[#allocation2 + $0x28] sm:$0xff]
    %v2640 = vld [vmem:[#allocation2 + $0x30] sm:$0xff]
    %v2641 = vld [vmem:[#allocation2 + $0x38] sm:$0xff]
    %v2642 = vld [vmem:[#allocation2 + $0x40] sm:$0xff]
    %v2643 = vld [vmem:[#allocation2 + $0x48] sm:$0xff]
    %v2644 = vld [vmem:[#allocation2 + $0x50] sm:$0xff]
    %v2645 = vld [vmem:[#allocation2 + $0x58] sm:$0xff]
    %v2646 = vld [vmem:[#allocation2 + $0x60] sm:$0xff]
    %v2647 = vld [vmem:[#allocation2 + $0x68] sm:$0xff]
    %v2648 = vld [vmem:[#allocation2 + $0x70] sm:$0xff]
    %v2649 = vld [vmem:[#allocation2 + $0x78] sm:$0xff]
    %v2650 = vld [vmem:[%s6] sm:$0x1]
    %v2652 = vlaneseq
    %v2653 = vshrl.u32 %v2652, 7
    %v2654 = vsub.s32 0, %v2653
    %v2655 = vrot.slane %v2650, %v2654
    %2657 = vmatprep.subr.mxu0 0.0
    %2658 = vmatpush1.msra.mxu0 %v2634
    %2659 = vmatprep.subr.mxu0 0.0
    %2660 = vmatpush1.msra.mxu0 %v2635
    %2661 = vmatprep.subr.mxu0 0.0
    %2662 = vmatpush1.msra.mxu0 %v2636
    %2663 = vmatprep.subr.mxu0 0.0
    %2664 = vmatpush1.msra.mxu0 %v2637
    %2665 = vmatprep.subr.mxu0 0.0
    %2666 = vmatpush1.msra.mxu0 %v2638
    %2667 = vmatprep.subr.mxu0 0.0
    %2668 = vmatpush1.msra.mxu0 %v2639
    %2669 = vmatprep.subr.mxu0 0.0
    %2670 = vmatpush1.msra.mxu0 %v2640
    %2671 = vmatprep.subr.mxu0 0.0
    %2672 = vmatpush1.msra.mxu0 %v2641
    %2673 = vmatprep.subr.mxu0 0.0
    %2674 = vmatpush1.msra.mxu0 %v2642
    %2675 = vmatprep.subr.mxu0 0.0
    %2676 = vmatpush1.msra.mxu0 %v2643
    %2677 = vmatprep.subr.mxu0 0.0
    %2678 = vmatpush1.msra.mxu0 %v2644
    %2679 = vmatprep.subr.mxu0 0.0
    %2680 = vmatpush1.msra.mxu0 %v2645
    %2681 = vmatprep.subr.mxu0 0.0
    %2682 = vmatpush1.msra.mxu0 %v2646
    %2683 = vmatprep.subr.mxu0 0.0
    %2684 = vmatpush1.msra.mxu0 %v2647
    %2685 = vmatprep.subr.mxu0 0.0
    %2686 = vmatpush1.msra.mxu0 %v2648
    %2687 = vmatprep.subr.mxu0 0.0
    %2688 = vmatpush1.msra.mxu0 %v2649
    %2689 = vmatprep.subr.mxu0 0.0
    %2690 = vmatpush1.msra.mxu0 0.0
    %2691 = vmatprep.subr.mxu0 0.0
    %2692 = vmatpush1.msra.mxu0 0.0
    %2693 = vmatprep.subr.mxu0 0.0
    %2694 = vmatpush1.msra.mxu0 0.0
    %2695 = vmatprep.subr.mxu0 0.0
    %2696 = vmatpush1.msra.mxu0 0.0
    %2697 = vmatprep.subr.mxu0 0.0
    %2698 = vmatpush1.msra.mxu0 0.0
    %2699 = vmatprep.subr.mxu0 0.0
    %2700 = vmatpush1.msra.mxu0 0.0
    %2701 = vmatprep.subr.mxu0 0.0
    %2702 = vmatpush1.msra.mxu0 0.0
    %2703 = vmatprep.subr.mxu0 0.0
    %2704 = vmatpush1.msra.mxu0 0.0
    %2705 = vmatprep.subr.mxu0 0.0
    %2706 = vmatpush1.msra.mxu0 0.0
    %2707 = vmatprep.subr.mxu0 0.0
    %2708 = vmatpush1.msra.mxu0 0.0
    %2709 = vmatprep.subr.mxu0 0.0
    %2710 = vmatpush1.msra.mxu0 0.0
    %2711 = vmatprep.subr.mxu0 0.0
    %2712 = vmatpush1.msra.mxu0 0.0
    %2713 = vmatprep.subr.mxu0 0.0
    %2714 = vmatpush1.msra.mxu0 0.0
    %2715 = vmatprep.subr.mxu0 0.0
    %2716 = vmatpush1.msra.mxu0 0.0
    %2717 = vmatprep.subr.mxu0 0.0
    %2718 = vmatpush1.msra.mxu0 0.0
    %2719 = vmatprep.subr.mxu0 0.0
    %2720 = vmatpush1.msra.mxu0 0.0
    %2721 = vmatprep.mubr.f32.mxu0 0.0
    %2722 = vmatmul.mubr.f32.gmra.mrb[0].mxu0 %v2626
    %v2723 = vpop.f32.mrb[0].mxu0
    %v2724 = vadd.f32 %v2655, %v2723
    %v2725 = vpop.f32.mrb[0].mxu0
    %2726 = vmatprep.mubr.f32.mxu0 0.0
    %2727 = vmatmul.mubr.f32.gmra.mrb[0].mxu0 %v2627
    %v2728 = vpop.f32.mrb[0].mxu0
    %v2729 = vadd.f32 %v2655, %v2728
    %v2730 = vpop.f32.mrb[0].mxu0
    %2731 = vmatprep.mubr.f32.mxu0 0.0
    %2732 = vmatmul.mubr.f32.gmra.mrb[0].mxu0 %v2628
    %v2733 = vpop.f32.mrb[0].mxu0
    %v2734 = vadd.f32 %v2655, %v2733
    %v2735 = vpop.f32.mrb[0].mxu0
    %2736 = vmatprep.mubr.f32.mxu0 0.0
    %2737 = vmatmul.mubr.f32.gmra.mrb[0].mxu0 %v2629
    %v2738 = vpop.f32.mrb[0].mxu0
    %v2739 = vadd.f32 %v2655, %v2738
    %v2740 = vpop.f32.mrb[0].mxu0
    %2741 = vmatprep.mubr.f32.mxu0 0.0
    %2742 = vmatmul.mubr.f32.gmra.mrb[0].mxu0 %v2630
    %v2743 = vpop.f32.mrb[0].mxu0
    %v2744 = vadd.f32 %v2655, %v2743
    %v2745 = vpop.f32.mrb[0].mxu0
    %2746 = vmatprep.mubr.f32.mxu0 0.0
    %2747 = vmatmul.mubr.f32.gmra.mrb[0].mxu0 %v2631
    %v2748 = vpop.f32.mrb[0].mxu0
    %v2749 = vadd.f32 %v2655, %v2748
    %v2750 = vpop.f32.mrb[0].mxu0
    %2751 = vmatprep.mubr.f32.mxu0 0.0
    %2752 = vmatmul.mubr.f32.gmra.mrb[0].mxu0 %v2632
    %v2753 = vpop.f32.mrb[0].mxu0
    %v2754 = vadd.f32 %v2655, %v2753
    %v2755 = vpop.f32.mrb[0].mxu0
    %2756 = vmatprep.mubr.f32.mxu0 0.0
    %2757 = vmatmul.mubr.f32.gmra.mrb[0].mxu0 %v2633
    %v2758 = vpop.f32.mrb[0].mxu0
    %v2759 = vadd.f32 %v2655, %v2758
    %v2760 = vpop.f32.mrb[0].mxu0
    %2761 = vdwg.mxu0
    %2762 = vst [vmem:[#allocation10] sm:$0xff] %v2724
    %2763 = vst [vmem:[#allocation10 + $0x8] sm:$0xff] %v2729
    %2764 = vst [vmem:[#allocation10 + $0x10] sm:$0xff] %v2734
    %2765 = vst [vmem:[#allocation10 + $0x18] sm:$0xff] %v2739
    %2766 = vst [vmem:[#allocation10 + $0x20] sm:$0xff] %v2744
    %2767 = vst [vmem:[#allocation10 + $0x28] sm:$0xff] %v2749
    %2768 = vst [vmem:[#allocation10 + $0x30] sm:$0xff] %v2754
    %2769 = vst [vmem:[#allocation10 + $0x38] sm:$0xff] %v2759
    %2770 = vst [vmem:[#allocation11] sm:$0xff] %v2374
    %2771 = vst [vmem:[#allocation13] sm:$0xff] %v2372
    %s2772 = scalar_lea.vmem [#allocation11], 8
    %2773 = vst [vmem:[%s2772] sm:$0xff] %v2533
    %s2774 = scalar_lea.vmem [#allocation13], 8
    %2775 = vst [vmem:[%s2774] sm:$0xff] %v2531
    // Predicated region
    $region78: #{tpu_custom_call.1} parent=1 // pred_check
      _
    $region79: #{tpu_custom_call.1} parent=1 // pred_check_branch
      %2777 = sbr.rel (0) target = $region81
    $region80: #{tpu_custom_call.1} parent=1 // pred_region
      %s2779 = ssub.s32 1024, 1024
      %2780 = vsyncadd [#allocation4], %s2779
      %s2781 = sshll.u32 [#allocation10], 4
      %s2782 = int_to_ptr.vmem [resolvable:$true] %s2781
      %2787 = dma.vmem_to_hbm [thread:$0]  %s2782, 1024, %s15, [#allocation4], 128, 128, 8
    $region81: #{tpu_custom_call.1} parent=1 // pred_fallthru
      _
    // Predicated region
    $region82: #{tpu_custom_call.1} parent=1 // pred_check
      _
    $region83: #{tpu_custom_call.1} parent=1 // pred_check_branch
      %2789 = sbr.rel (0) target = $region85
    $region84: #{tpu_custom_call.1} parent=1 // pred_region
      %s2791 = ssub.s32 256, 256
      %2792 = vsyncadd [#allocation12], %s2791
      %s2793 = sshll.u32 [#allocation11], 4
      %s2794 = int_to_ptr.vmem [resolvable:$true] %s2793
      %2799 = dma.vmem_to_hbm [thread:$0]  %s2794, 256, %s16, [#allocation12], 128, 128, 8
    $region85: #{tpu_custom_call.1} parent=1 // pred_fallthru
      _
    // Predicated region
    $region86: #{tpu_custom_call.1} parent=1 // pred_check
      _
    $region87: #{tpu_custom_call.1} parent=1 // pred_check_branch
      %2801 = sbr.rel (0) target = $region89
    $region88: #{tpu_custom_call.1} parent=1 // pred_region
      %s2803 = ssub.s32 256, 256
      %2804 = vsyncadd [#allocation12], %s2803
      %s2805 = sshll.u32 [#allocation13], 4
      %s2806 = int_to_ptr.vmem [resolvable:$true] %s2805
      %2811 = dma.vmem_to_hbm [thread:$0]  %s2806, 256, %s17, [#allocation12], 128, 128, 8
    $region89: #{tpu_custom_call.1} parent=1 // pred_fallthru
      _
    // Predicated region
    $region90: #{tpu_custom_call.1} parent=1 // pred_check
      _
    $region91: #{tpu_custom_call.1} parent=1 // pred_check_branch
      %2813 = sbr.rel (0) target = $region93
    $region92: #{tpu_custom_call.1} parent=1 // pred_region
      %2814 = dma.done [#allocation4], 1024
    $region93: #{tpu_custom_call.1} parent=1 // pred_fallthru
      _
    // Predicated region
    $region94: #{tpu_custom_call.1} parent=1 // pred_check
      _
    $region95: #{tpu_custom_call.1} parent=1 // pred_check_branch
      %2816 = sbr.rel (0) target = $region97
    $region96: #{tpu_custom_call.1} parent=1 // pred_region
      %2817 = dma.done [#allocation12], 256
    $region97: #{tpu_custom_call.1} parent=1 // pred_fallthru
      _
    // Predicated region
    $region98: #{tpu_custom_call.1} parent=1 // pred_check
      _
    $region99: #{tpu_custom_call.1} parent=1 // pred_check_branch
      %2819 = sbr.rel (0) target = $region101
    $region100: #{tpu_custom_call.1} parent=1 // pred_region
      %2820 = dma.done [#allocation12], 256
    $region101: #{tpu_custom_call.1} parent=1 // pred_fallthru
      _
    %2821 = vsyncpa [#allocation3], 1
    %2822 = vsyncpa [#allocation6], 1
    %2823 = vsyncpa [#allocation9], 1
    %2824 = vsyncpa [#allocation4], 1
    %2825 = vsyncpa [#allocation12], 1

</llo_original>
